<compile_context>
chip_gen: v6e
topology: v6e:2x2x1
jax: 0.10.0
libtpu: 0.0.40
codegen_flags: <defaults>
</compile_context>

<pallas_src>
import functools

import jax
import jax.numpy as jnp
from jax import lax
from jax.experimental import pallas as pl
from jax.experimental.pallas import tpu as pltpu

VMEM_LIMIT = 48 * 1024 * 1024        # fits v7x's 64 MiB physical VMEM with headroom
_INV_SQRT2 = 0.7071067811865476


def _tile(n, preferred, align):
    """Largest block <= preferred that divides n and is a multiple of align;
    falls back to the full extent n (always a legal block)."""
    if n <= preferred:
        return n
    t = (preferred // align) * align
    while t >= align:
        if n % t == 0:
            return t
        t -= align
    return n


# -----------------------------------------------------------------------------
# Kernels
# -----------------------------------------------------------------------------
def _ln_matmul_kernel(x_ref, g_ref, b_ref, w_ref, o_ref):
    # LayerNorm(x) @ W (bias-free), LN fused in the GEMM prologue.
    x = x_ref[...].astype(jnp.float32)
    mean = jnp.mean(x, axis=-1, keepdims=True)
    xc = x - mean
    var = jnp.mean(xc * xc, axis=-1, keepdims=True)
    h = xc * lax.rsqrt(var + 1e-5) * g_ref[...] + b_ref[...]
    acc = jnp.dot(h.astype(jnp.bfloat16), w_ref[...].astype(jnp.bfloat16),
                  preferred_element_type=jnp.float32)
    o_ref[...] = acc.astype(o_ref.dtype)


def _matmul_kernel(x_ref, w_ref, *rest, has_bias, has_res):
    # Tiled GEMM with K-axis accumulation, optional bias / residual epilogue.
    i = 0
    b_ref = r_ref = None
    if has_bias:
        b_ref = rest[i]; i += 1
    if has_res:
        r_ref = rest[i]; i += 1
    o_ref, acc_ref = rest[i], rest[i + 1]

    k = pl.program_id(2)

    @pl.when(k == 0)
    def _():
        acc_ref[...] = jnp.zeros(acc_ref.shape, acc_ref.dtype)

    acc_ref[...] += jnp.dot(x_ref[...].astype(jnp.bfloat16),
                            w_ref[...].astype(jnp.bfloat16),
                            preferred_element_type=jnp.float32)

    @pl.when(k == pl.num_programs(2) - 1)
    def _():
        out = acc_ref[...]
        if has_bias:
            out = out + b_ref[...]
        if has_res:
            out = out + r_ref[...].astype(jnp.float32)
        o_ref[...] = out.astype(o_ref.dtype)


def _ln_geglu_kernel(x_ref, g_ref, b_ref, wa_ref, ba_ref, wg_ref, bg_ref, o_ref):
    # LayerNorm(x) -> dual matmul -> a * gelu(gate), all in one kernel.
    x = x_ref[...].astype(jnp.float32)
    mean = jnp.mean(x, axis=-1, keepdims=True)
    xc = x - mean
    var = jnp.mean(xc * xc, axis=-1, keepdims=True)
    h = (xc * lax.rsqrt(var + 1e-5) * g_ref[...] + b_ref[...]).astype(jnp.bfloat16)
    a = jnp.dot(h, wa_ref[...].astype(jnp.bfloat16),
                preferred_element_type=jnp.float32) + ba_ref[...]
    gate = jnp.dot(h, wg_ref[...].astype(jnp.bfloat16),
                   preferred_element_type=jnp.float32) + bg_ref[...]
    gelu = 0.5 * gate * (1.0 + lax.erf(gate * _INV_SQRT2))    # exact erf GELU
    o_ref[...] = (a * gelu).astype(o_ref.dtype)


def _flash_attn_kernel(q_ref, k_ref, v_ref, o_ref, m_sc, l_sc, acc_sc, *, scale):
    kv = pl.program_id(2)

    @pl.when(kv == 0)
    def _():
        m_sc[...] = jnp.full(m_sc.shape, -jnp.inf, m_sc.dtype)
        l_sc[...] = jnp.zeros(l_sc.shape, l_sc.dtype)
        acc_sc[...] = jnp.zeros(acc_sc.shape, acc_sc.dtype)

    # Fold softmax scale into q (O(tq*dh) instead of O(tq*tk)).
    q = (q_ref[0].astype(jnp.float32) * scale).astype(jnp.bfloat16)
    k = k_ref[0].astype(jnp.bfloat16)
    v = v_ref[0].astype(jnp.bfloat16)

    # s[i, j] = sum_d q[i, d] * k[j, d]   (contract last dims, no transpose)
    s = lax.dot_general(q, k, (((1,), (1,)), ((), ())),
                        preferred_element_type=jnp.float32)

    m_prev = m_sc[...]
    m_new = jnp.maximum(m_prev, jnp.max(s, axis=-1, keepdims=True))
    alpha = jnp.exp(m_prev - m_new)
    p = jnp.exp(s - m_new)
    l_sc[...] = alpha * l_sc[...] + jnp.sum(p, axis=-1, keepdims=True)
    acc_sc[...] = alpha * acc_sc[...] + jnp.dot(
        p.astype(jnp.bfloat16), v, preferred_element_type=jnp.float32)
    m_sc[...] = m_new

    @pl.when(kv == pl.num_programs(2) - 1)
    def _():
        inv_l = pl.reciprocal(l_sc[...], approx=True)
        o_ref[0] = (acc_sc[...] * inv_l).astype(o_ref.dtype)


def _attn_out_proj_kernel(a_ref, w_ref, b_ref, r_ref, o_ref, acc_ref):
    # Head-merge GEMM: reduce over heads, fuse bias + residual in epilogue.
    h = pl.program_id(3)

    @pl.when(h == 0)
    def _():
        acc_ref[...] = jnp.zeros(acc_ref.shape, acc_ref.dtype)

    acc_ref[...] += jnp.dot(a_ref[0, 0].astype(jnp.bfloat16),
                            w_ref[0].astype(jnp.bfloat16),
                            preferred_element_type=jnp.float32)

    @pl.when(h == pl.num_programs(3) - 1)
    def _():
        out = acc_ref[...] + b_ref[...] + r_ref[0].astype(jnp.float32)
        o_ref[0] = out.astype(o_ref.dtype)


# -----------------------------------------------------------------------------
# pallas_call wrappers (tiling decisions)
# -----------------------------------------------------------------------------
def ln_matmul(x2d, gamma, beta, w, *, tm=256, tn=512):
    M, D = x2d.shape
    Dout = w.shape[1]
    bm = _tile(M, tm, 8)
    bn = _tile(Dout, tn, 128)
    return pl.pallas_call(
        _ln_matmul_kernel,
        out_shape=jax.ShapeDtypeStruct((M, Dout), x2d.dtype),
        grid=(M // bm, Dout // bn),
        in_specs=[
            pl.BlockSpec((bm, D), lambda i, j: (i, 0)),
            pl.BlockSpec((1, D), lambda i, j: (0, 0)),
            pl.BlockSpec((1, D), lambda i, j: (0, 0)),
            pl.BlockSpec((D, bn), lambda i, j: (0, j)),
        ],
        out_specs=pl.BlockSpec((bm, bn), lambda i, j: (i, j)),
        compiler_params=pltpu.CompilerParams(
            dimension_semantics=("parallel", "parallel"),
            vmem_limit_bytes=VMEM_LIMIT),
    )(x2d, gamma.reshape(1, D), beta.reshape(1, D), w)


def matmul(x2d, w, bias=None, residual=None, *, tm=256, tn=512, tk=512):
    M, K = x2d.shape
    Dout = w.shape[1]
    bm = _tile(M, tm, 8)
    bn = _tile(Dout, tn, 128)
    bk = _tile(K, tk, 128)

    in_specs = [
        pl.BlockSpec((bm, bk), lambda i, j, k: (i, k)),
        pl.BlockSpec((bk, bn), lambda i, j, k: (k, j)),
    ]
    args = [x2d, w]
    if bias is not None:
        in_specs.append(pl.BlockSpec((1, bn), lambda i, j, k: (0, j)))
        args.append(bias.reshape(1, Dout))
    if residual is not None:
        in_specs.append(pl.BlockSpec((bm, bn), lambda i, j, k: (i, j)))
        args.append(residual)

    kernel = functools.partial(_matmul_kernel,
                               has_bias=bias is not None,
                               has_res=residual is not None)
    return pl.pallas_call(
        kernel,
        out_shape=jax.ShapeDtypeStruct((M, Dout), x2d.dtype),
        grid=(M // bm, Dout // bn, K // bk),
        in_specs=in_specs,
        out_specs=pl.BlockSpec((bm, bn), lambda i, j, k: (i, j)),
        scratch_shapes=[pltpu.VMEM((bm, bn), jnp.float32)],
        compiler_params=pltpu.CompilerParams(
            dimension_semantics=("parallel", "parallel", "arbitrary"),
            vmem_limit_bytes=VMEM_LIMIT),
    )(*args)


def ln_geglu(x2d, gamma, beta, wa, ba, wg, bg, *, tm=256, tn=512):
    M, D = x2d.shape
    Dout = wa.shape[1]
    bm = _tile(M, tm, 8)
    bn = _tile(Dout, tn, 128)
    return pl.pallas_call(
        _ln_geglu_kernel,
        out_shape=jax.ShapeDtypeStruct((M, Dout), x2d.dtype),
        grid=(M // bm, Dout // bn),
        in_specs=[
            pl.BlockSpec((bm, D), lambda i, j: (i, 0)),
            pl.BlockSpec((1, D), lambda i, j: (0, 0)),
            pl.BlockSpec((1, D), lambda i, j: (0, 0)),
            pl.BlockSpec((D, bn), lambda i, j: (0, j)),
            pl.BlockSpec((1, bn), lambda i, j: (0, j)),
            pl.BlockSpec((D, bn), lambda i, j: (0, j)),
            pl.BlockSpec((1, bn), lambda i, j: (0, j)),
        ],
        out_specs=pl.BlockSpec((bm, bn), lambda i, j: (i, j)),
        compiler_params=pltpu.CompilerParams(
            dimension_semantics=("parallel", "parallel"),
            vmem_limit_bytes=VMEM_LIMIT),
    )(x2d, gamma.reshape(1, D), beta.reshape(1, D),
      wa, ba.reshape(1, Dout), wg, bg.reshape(1, Dout))


def flash_attention(q, k, v, scale, *, tq=256, tk=512):
    # q: (B*H, Nq, Dh); k, v: (B*H, Nk, Dh)
    BH, Nq, Dh = q.shape
    Nk = k.shape[1]
    bq = _tile(Nq, tq, 8)
    bk = _tile(Nk, tk, 128) if Nk % 128 == 0 else _tile(Nk, tk, 8)
    return pl.pallas_call(
        functools.partial(_flash_attn_kernel, scale=scale),
        out_shape=jax.ShapeDtypeStruct((BH, Nq, Dh), q.dtype),
        grid=(BH, Nq // bq, Nk // bk),
        in_specs=[
            pl.BlockSpec((1, bq, Dh), lambda b, qi, ki: (b, qi, 0)),
            pl.BlockSpec((1, bk, Dh), lambda b, qi, ki: (b, ki, 0)),
            pl.BlockSpec((1, bk, Dh), lambda b, qi, ki: (b, ki, 0)),
        ],
        out_specs=pl.BlockSpec((1, bq, Dh), lambda b, qi, ki: (b, qi, 0)),
        scratch_shapes=[
            pltpu.VMEM((bq, 1), jnp.float32),      # running max
            pltpu.VMEM((bq, 1), jnp.float32),      # running sum
            pltpu.VMEM((bq, Dh), jnp.float32),     # output accumulator
        ],
        compiler_params=pltpu.CompilerParams(
            dimension_semantics=("parallel", "parallel", "arbitrary"),
            vmem_limit_bytes=VMEM_LIMIT),
    )(q, k, v)


def attn_out_proj(attn_out, w, bias, residual, *, tm=256, tn=512):
    # attn_out: (B, H, N, Dh); w: (H*Dh, dim); residual/out: (B, N, dim)
    B, H, N, Dh = attn_out.shape
    dim = w.shape[1]
    w3 = w.reshape(H, Dh, dim)        # free, row-major
    bm = _tile(N, tm, 8)
    bn = _tile(dim, tn, 128)
    return pl.pallas_call(
        _attn_out_proj_kernel,
        out_shape=jax.ShapeDtypeStruct((B, N, dim), residual.dtype),
        grid=(B, N // bm, dim // bn, H),
        in_specs=[
            pl.BlockSpec((1, 1, bm, Dh), lambda b, m, n, h: (b, h, m, 0)),
            pl.BlockSpec((1, Dh, bn), lambda b, m, n, h: (h, 0, n)),
            pl.BlockSpec((1, bn), lambda b, m, n, h: (0, n)),
            pl.BlockSpec((1, bm, bn), lambda b, m, n, h: (b, m, n)),
        ],
        out_specs=pl.BlockSpec((1, bm, bn), lambda b, m, n, h: (b, m, n)),
        scratch_shapes=[pltpu.VMEM((bm, bn), jnp.float32)],
        compiler_params=pltpu.CompilerParams(
            dimension_semantics=("parallel", "parallel", "parallel", "arbitrary"),
            vmem_limit_bytes=VMEM_LIMIT),
    )(attn_out, w3, bias.reshape(1, dim), residual)


# -----------------------------------------------------------------------------
# Module glue
# -----------------------------------------------------------------------------
def _split_heads(y2d, B, Nt, H, Dh):
    # 'b n (h d) -> (b h) n d'
    # TODO(synk): this head-split remains a plain-XLA transpose; writing a
    # per-head output layout from the projection kernel would remove it at the
    # cost of narrow-N MXU tiles.
    return y2d.reshape(B, Nt, H, Dh).transpose(0, 2, 1, 3).reshape(B * H, Nt, Dh)


def cross_attention_self(x, p, norm_g, norm_b, n_heads, d_head):
    B, N, D = x.shape
    inner = n_heads * d_head
    scale = d_head ** -0.5

    x2d = x.reshape(B * N, D)
    qkv = ln_matmul(x2d, norm_g, norm_b, p["wqkv"])            # fused LN + QKV GEMM
    q = _split_heads(qkv[:, :inner], B, N, n_heads, d_head)
    k = _split_heads(qkv[:, inner:2 * inner], B, N, n_heads, d_head)
    v = _split_heads(qkv[:, 2 * inner:], B, N, n_heads, d_head)

    o = flash_attention(q, k, v, scale)                        # (B*H, N, Dh)
    o = o.reshape(B, n_heads, N, d_head)
    return attn_out_proj(o, p["wo"], p["bo"], x)               # +bias +residual fused


def cross_attention_ctx(x, context, p, norm_g, norm_b, n_heads, d_head):
    B, N, D = x.shape
    inner = n_heads * d_head
    scale = d_head ** -0.5

    x2d = x.reshape(B * N, D)
    q = ln_matmul(x2d, norm_g, norm_b, p["wq"])                # fused LN + Q GEMM

    if context is None:                                        # context := norm2(x)
        Nc = N
        kv = ln_matmul(x2d, norm_g, norm_b, p["wkv"])
    else:
        Nc = context.shape[1]
        kv = matmul(context.reshape(B * Nc, -1), p["wkv"])     # fused K|V GEMM

    q = _split_heads(q, B, N, n_heads, d_head)
    k = _split_heads(kv[:, :inner], B, Nc, n_heads, d_head)
    v = _split_heads(kv[:, inner:], B, Nc, n_heads, d_head)

    o = flash_attention(q, k, v, scale)
    o = o.reshape(B, n_heads, N, d_head)
    return attn_out_proj(o, p["wo"], p["bo"], x)


def feed_forward(x, p, norm_g, norm_b):
    B, N, D = x.shape
    x2d = x.reshape(B * N, D)
    h = ln_geglu(x2d, norm_g, norm_b, p["wa"], p["ba"], p["wg"], p["bg"])
    out = matmul(h, p["w_out"], bias=p["b_out"], residual=x2d)  # +bias +residual fused
    return out.reshape(B, N, D)
    # dropout=0.0 in the reference -> identity, nothing to do


def basic_transformer_block(x, context, params, n_heads, d_head):
    x = cross_attention_self(x, params["attn1"], params["norm1_g"],
                             params["norm1_b"], n_heads, d_head)
    x = cross_attention_ctx(x, context, params["attn2"], params["norm2_g"],
                            params["norm2_b"], n_heads, d_head)
    x = feed_forward(x, params["ff"], params["norm3_g"], params["norm3_b"])
    return x


def init_params(key, dim, n_heads, d_head, context_dim):
    inner = n_heads * d_head
    ff_inner = 4 * dim
    keys = jax.random.split(key, 11)

    def w(k, shape):
        return (0.02 * jax.random.normal(k, shape)).astype(jnp.float32)

    return {
        "norm1_g": jnp.ones((dim,), jnp.float32),
        "norm1_b": jnp.zeros((dim,), jnp.float32),
        "norm2_g": jnp.ones((dim,), jnp.float32),
        "norm2_b": jnp.zeros((dim,), jnp.float32),
        "norm3_g": jnp.ones((dim,), jnp.float32),
        "norm3_b": jnp.zeros((dim,), jnp.float32),
        "attn1": {                       # fused [wq | wk | wv], all bias-free
            "wqkv": w(keys[0], (dim, 3 * inner)),
            "wo": w(keys[1], (inner, dim)),
            "bo": jnp.zeros((dim,), jnp.float32),
        },
        "attn2": {
            "wq": w(keys[2], (dim, inner)),
            "wkv": w(keys[3], (context_dim, 2 * inner)),   # fused [wk | wv]
            "wo": w(keys[4], (inner, dim)),
            "bo": jnp.zeros((dim,), jnp.float32),
        },
        "ff": {                          # GEGLU proj split: value half / gate half
            "wa": w(keys[5], (dim, ff_inner)),
            "ba": (0.01 * jax.random.normal(keys[6], (ff_inner,))).astype(jnp.float32),
            "wg": w(keys[7], (dim, ff_inner)),
            "bg": (0.01 * jax.random.normal(keys[8], (ff_inner,))).astype(jnp.float32),
            "w_out": w(keys[9], (ff_inner, dim)),
            "b_out": (0.01 * jax.random.normal(keys[10], (dim,))).astype(jnp.float32),
        },
    }


if __name__ == "__main__":
    # Small shapes consistent with the module: dim = n_heads * d_head
    B, N, Nc = 2, 16, 8
    dim, n_heads, d_head, context_dim = 32, 4, 8, 24

    key = jax.random.PRNGKey(0)
    kx, kc, kp = jax.random.split(key, 3)
    x = jax.random.normal(kx, (B, N, dim), dtype=jnp.float32)
    context = jax.random.normal(kc, (B, Nc, context_dim), dtype=jnp.float32)
    params = init_params(kp, dim, n_heads, d_head, context_dim)

    fwd = jax.jit(functools.partial(basic_transformer_block,
                                    n_heads=n_heads, d_head=d_head))
    out = fwd(x, context, params)
    out = jax.block_until_ready(out)
    assert out.shape == (B, N, dim) and out.dtype == jnp.float32
    print("KERNEL_OK")
</pallas_src>

<mosaic_0001>
module attributes {stable_mosaic.version = 11 : i64} {
  func.func @_ln_matmul_kernel(%arg0: i32, %arg1: i32, %arg2: memref<32x32xf32, #tpu.memory_space<vmem>>, %arg3: memref<1x32xf32, #tpu.memory_space<vmem>>, %arg4: memref<1x32xf32, #tpu.memory_space<vmem>>, %arg5: memref<32x96xf32, #tpu.memory_space<vmem>>, %arg6: memref<32x96xf32, #tpu.memory_space<vmem>>) attributes {dimension_semantics = [#tpu.dimension_semantics<parallel>, #tpu.dimension_semantics<parallel>], iteration_bounds = array<i64: 1, 1>, scalar_prefetch = 0 : i64, scratch_operands = 0 : i64, tpu.core_type = #tpu.core_type<tc>, window_params = [{transform_indices = @transform_0, window_bounds = array<i64: 32, 32>}, {pipeline_mode = #tpu.pipeline_mode<synchronous>, transform_indices = @transform_1, window_bounds = array<i64: 1, 32>}, {pipeline_mode = #tpu.pipeline_mode<synchronous>, transform_indices = @transform_2, window_bounds = array<i64: 1, 32>}, {transform_indices = @transform_3, window_bounds = array<i64: 32, 96>}, {transform_indices = @transform_4, window_bounds = array<i64: 32, 96>}]} {
    %c0 = arith.constant 0 : index
    %c0_0 = arith.constant 0 : index
    %0 = vector.load %arg2[%c0, %c0_0] : memref<32x32xf32, #tpu.memory_space<vmem>>, vector<32x32xf32>
    %cst = arith.constant dense<0.000000e+00> : vector<32xf32>
    %1 = vector.multi_reduction <add>, %0, %cst [1] : vector<32x32xf32> to vector<32xf32>
    %2 = vector.shape_cast %1 : vector<32xf32> to vector<32x1xf32>
    %cst_1 = arith.constant 3.200000e+01 : f32
    %3 = vector.broadcast %cst_1 : f32 to vector<32x1xf32>
    %4 = arith.divf %2, %3 : vector<32x1xf32>
    %5 = vector.broadcast %4 : vector<32x1xf32> to vector<32x32xf32>
    %6 = arith.subf %0, %5 : vector<32x32xf32>
    %7 = arith.mulf %6, %6 : vector<32x32xf32>
    %cst_2 = arith.constant dense<0.000000e+00> : vector<32xf32>
    %8 = vector.multi_reduction <add>, %7, %cst_2 [1] : vector<32x32xf32> to vector<32xf32>
    %9 = vector.shape_cast %8 : vector<32xf32> to vector<32x1xf32>
    %cst_3 = arith.constant 3.200000e+01 : f32
    %10 = vector.broadcast %cst_3 : f32 to vector<32x1xf32>
    %11 = arith.divf %9, %10 : vector<32x1xf32>
    %cst_4 = arith.constant 9.99999974E-6 : f32
    %12 = vector.broadcast %cst_4 : f32 to vector<32x1xf32>
    %13 = arith.addf %11, %12 : vector<32x1xf32>
    %14 = math.rsqrt %13 : vector<32x1xf32>
    %15 = vector.broadcast %14 : vector<32x1xf32> to vector<32x32xf32>
    %16 = arith.mulf %6, %15 : vector<32x32xf32>
    %c0_5 = arith.constant 0 : index
    %c0_6 = arith.constant 0 : index
    %17 = vector.load %arg3[%c0_5, %c0_6] : memref<1x32xf32, #tpu.memory_space<vmem>>, vector<1x32xf32>
    %18 = vector.broadcast %17 : vector<1x32xf32> to vector<32x32xf32>
    %19 = arith.mulf %16, %18 : vector<32x32xf32>
    %c0_7 = arith.constant 0 : index
    %c0_8 = arith.constant 0 : index
    %20 = vector.load %arg4[%c0_7, %c0_8] : memref<1x32xf32, #tpu.memory_space<vmem>>, vector<1x32xf32>
    %21 = vector.broadcast %20 : vector<1x32xf32> to vector<32x32xf32>
    %22 = arith.addf %19, %21 : vector<32x32xf32>
    %23 = arith.truncf %22 : vector<32x32xf32> to vector<32x32xbf16>
    %c0_9 = arith.constant 0 : index
    %c0_10 = arith.constant 0 : index
    %24 = vector.load %arg5[%c0_9, %c0_10] : memref<32x96xf32, #tpu.memory_space<vmem>>, vector<32x96xf32>
    %25 = arith.truncf %24 : vector<32x96xf32> to vector<32x96xbf16>
    %cst_11 = arith.constant dense<0.000000e+00> : vector<32x96xf32>
    %26 = tpu.matmul %23, %25, %cst_11 {dimension_numbers = #tpu.dot_dimension_numbers<[1], [0], [0], [1], [0, 0, 1, 1], [], []>} : vector<32x32xbf16>, vector<32x96xbf16>, vector<32x96xf32> -> vector<32x96xf32>
    %c0_12 = arith.constant 0 : index
    %c0_13 = arith.constant 0 : index
    %27 = vector.load %arg6[%c0_12, %c0_13] : memref<32x96xf32, #tpu.memory_space<vmem>>, vector<32x96xf32>
    tpu.vector_store %arg6[%c0_12, %c0_13], %26 {strides = array<i32>} : memref<32x96xf32, #tpu.memory_space<vmem>>, vector<32x96xf32>,
    return
  }
  func.func @transform_0(%arg0: i32, %arg1: i32) -> (i32, i32) {
    %c0_i32 = arith.constant 0 : i32
    %c0_i32_0 = arith.constant 0 : i32
    return %arg0, %c0_i32 : i32, i32
  }
  func.func @transform_1(%arg0: i32, %arg1: i32) -> (i32, i32) {
    %c0_i32 = arith.constant 0 : i32
    %c0_i32_0 = arith.constant 0 : i32
    %c0_i32_1 = arith.constant 0 : i32
    return %c0_i32, %c0_i32_0 : i32, i32
  }
  func.func @transform_2(%arg0: i32, %arg1: i32) -> (i32, i32) {
    %c0_i32 = arith.constant 0 : i32
    %c0_i32_0 = arith.constant 0 : i32
    %c0_i32_1 = arith.constant 0 : i32
    return %c0_i32, %c0_i32_0 : i32, i32
  }
  func.func @transform_3(%arg0: i32, %arg1: i32) -> (i32, i32) {
    %c0_i32 = arith.constant 0 : i32
    %c0_i32_0 = arith.constant 0 : i32
    return %c0_i32, %arg1 : i32, i32
  }
  func.func @transform_4(%arg0: i32, %arg1: i32) -> (i32, i32) {
    %c0_i32 = arith.constant 0 : i32
    return %arg0, %arg1 : i32, i32
  }
}

module attributes {stable_mosaic.version = 11 : i64} {
  func.func @_flash_attn_kernel(%arg0: i32, %arg1: i32, %arg2: i32, %arg3: memref<1x16x8xf32, #tpu.memory_space<vmem>>, %arg4: memref<1x16x8xf32, #tpu.memory_space<vmem>>, %arg5: memref<1x16x8xf32, #tpu.memory_space<vmem>>, %arg6: memref<1x16x8xf32, #tpu.memory_space<vmem>>, %arg7: memref<16x1xf32, #tpu.memory_space<vmem>>, %arg8: memref<16x1xf32, #tpu.memory_space<vmem>>, %arg9: memref<16x8xf32, #tpu.memory_space<vmem>>) attributes {dimension_semantics = [#tpu.dimension_semantics<parallel>, #tpu.dimension_semantics<parallel>, #tpu.dimension_semantics<arbitrary>], iteration_bounds = array<i64: 8, 1, 1>, scalar_prefetch = 0 : i64, scratch_operands = 3 : i64, tpu.core_type = #tpu.core_type<tc>, window_params = [{transform_indices = @transform_0, window_bounds = array<i64: 1, 16, 8>}, {transform_indices = @transform_1, window_bounds = array<i64: 1, 16, 8>}, {transform_indices = @transform_2, window_bounds = array<i64: 1, 16, 8>}, {transform_indices = @transform_3, window_bounds = array<i64: 1, 16, 8>}]} {
    %c0_i32 = arith.constant 0 : i32
    %0 = arith.cmpi eq, %arg2, %c0_i32 : i32
    %1 = arith.extui %0 : i1 to i32
    %c0_i32_0 = arith.constant 0 : i32
    %2 = arith.cmpi ne, %1, %c0_i32_0 : i32
    scf.if %2 {
      %cst_27 = arith.constant 0xFF800000 : f32
      %41 = vector.broadcast %cst_27 : f32 to vector<16x1xf32>
      %c0_28 = arith.constant 0 : index
      %c0_29 = arith.constant 0 : index
      %42 = vector.load %arg7[%c0_28, %c0_29] : memref<16x1xf32, #tpu.memory_space<vmem>>, vector<16x1xf32>
      tpu.vector_store %arg7[%c0_28, %c0_29], %41 {strides = array<i32>} : memref<16x1xf32, #tpu.memory_space<vmem>>, vector<16x1xf32>,
      %cst_30 = arith.constant 0.000000e+00 : f32
      %43 = vector.broadcast %cst_30 : f32 to vector<16x1xf32>
      %c0_31 = arith.constant 0 : index
      %c0_32 = arith.constant 0 : index
      %44 = vector.load %arg8[%c0_31, %c0_32] : memref<16x1xf32, #tpu.memory_space<vmem>>, vector<16x1xf32>
      tpu.vector_store %arg8[%c0_31, %c0_32], %43 {strides = array<i32>} : memref<16x1xf32, #tpu.memory_space<vmem>>, vector<16x1xf32>,
      %cst_33 = arith.constant 0.000000e+00 : f32
      %45 = vector.broadcast %cst_33 : f32 to vector<16x8xf32>
      %c0_34 = arith.constant 0 : index
      %c0_35 = arith.constant 0 : index
      %46 = vector.load %arg9[%c0_34, %c0_35] : memref<16x8xf32, #tpu.memory_space<vmem>>, vector<16x8xf32>
      tpu.vector_store %arg9[%c0_34, %c0_35], %45 {strides = array<i32>} : memref<16x8xf32, #tpu.memory_space<vmem>>, vector<16x8xf32>,
    } else {
    }
    %c0 = arith.constant 0 : index
    %c0_1 = arith.constant 0 : index
    %c0_2 = arith.constant 0 : index
    %3 = vector.load %arg3[%c0, %c0_1, %c0_2] : memref<1x16x8xf32, #tpu.memory_space<vmem>>, vector<1x16x8xf32>
    %4 = vector.shape_cast %3 : vector<1x16x8xf32> to vector<16x8xf32>
    %cst = arith.constant 0.353553385 : f32
    %5 = vector.broadcast %cst : f32 to vector<16x8xf32>
    %6 = arith.mulf %4, %5 : vector<16x8xf32>
    %7 = arith.truncf %6 : vector<16x8xf32> to vector<16x8xbf16>
    %c0_3 = arith.constant 0 : index
    %c0_4 = arith.constant 0 : index
    %c0_5 = arith.constant 0 : index
    %8 = vector.load %arg4[%c0_3, %c0_4, %c0_5] : memref<1x16x8xf32, #tpu.memory_space<vmem>>, vector<1x16x8xf32>
    %9 = vector.shape_cast %8 : vector<1x16x8xf32> to vector<16x8xf32>
    %10 = arith.truncf %9 : vector<16x8xf32> to vector<16x8xbf16>
    %c0_6 = arith.constant 0 : index
    %c0_7 = arith.constant 0 : index
    %c0_8 = arith.constant 0 : index
    %11 = vector.load %arg5[%c0_6, %c0_7, %c0_8] : memref<1x16x8xf32, #tpu.memory_space<vmem>>, vector<1x16x8xf32>
    %12 = vector.shape_cast %11 : vector<1x16x8xf32> to vector<16x8xf32>
    %13 = arith.truncf %12 : vector<16x8xf32> to vector<16x8xbf16>
    %cst_9 = arith.constant dense<0.000000e+00> : vector<16x16xf32>
    %14 = tpu.matmul %7, %10, %cst_9 {dimension_numbers = #tpu.dot_dimension_numbers<[1], [1], [0], [0], [0, 0, 1, 0], [], []>} : vector<16x8xbf16>, vector<16x8xbf16>, vector<16x16xf32> -> vector<16x16xf32>
    %c0_10 = arith.constant 0 : index
    %c0_11 = arith.constant 0 : index
    %15 = vector.load %arg7[%c0_10, %c0_11] : memref<16x1xf32, #tpu.memory_space<vmem>>, vector<16x1xf32>
    %cst_12 = arith.constant dense<0xFF800000> : vector<16xf32>
    %16 = vector.multi_reduction <maximumf>, %14, %cst_12 [1] : vector<16x16xf32> to vector<16xf32>
    %17 = vector.shape_cast %16 : vector<16xf32> to vector<16x1xf32>
    %18 = arith.maximumf %15, %17 : vector<16x1xf32>
    %19 = arith.subf %15, %18 : vector<16x1xf32>
    %20 = math.exp %19 : vector<16x1xf32>
    %21 = vector.broadcast %18 : vector<16x1xf32> to vector<16x16xf32>
    %22 = arith.subf %14, %21 : vector<16x16xf32>
    %23 = math.exp %22 : vector<16x16xf32>
    %c0_13 = arith.constant 0 : index
    %c0_14 = arith.constant 0 : index
    %24 = vector.load %arg8[%c0_13, %c0_14] : memref<16x1xf32, #tpu.memory_space<vmem>>, vector<16x1xf32>
    %25 = arith.mulf %20, %24 : vector<16x1xf32>
    %cst_15 = arith.constant dense<0.000000e+00> : vector<16xf32>
    %26 = vector.multi_reduction <add>, %23, %cst_15 [1] : vector<16x16xf32> to vector<16xf32>
    %27 = vector.shape_cast %26 : vector<16xf32> to vector<16x1xf32>
    %28 = arith.addf %25, %27 : vector<16x1xf32>
    %c0_16 = arith.constant 0 : index
    %c0_17 = arith.constant 0 : index
    %29 = vector.load %arg8[%c0_16, %c0_17] : memref<16x1xf32, #tpu.memory_space<vmem>>, vector<16x1xf32>
    tpu.vector_store %arg8[%c0_16, %c0_17], %28 {strides = array<i32>} : memref<16x1xf32, #tpu.memory_space<vmem>>, vector<16x1xf32>,
    %c0_18 = arith.constant 0 : index
    %c0_19 = arith.constant 0 : index
    %30 = vector.load %arg9[%c0_18, %c0_19] : memref<16x8xf32, #tpu.memory_space<vmem>>, vector<16x8xf32>
    %31 = vector.broadcast %20 : vector<16x1xf32> to vector<16x8xf32>
    %32 = arith.mulf %31, %30 : vector<16x8xf32>
    %33 = arith.truncf %23 : vector<16x16xf32> to vector<16x16xbf16>
    %cst_20 = arith.constant dense<0.000000e+00> : vector<16x8xf32>
    %34 = tpu.matmul %33, %13, %cst_20 {dimension_numbers = #tpu.dot_dimension_numbers<[1], [0], [0], [1], [0, 0, 1, 1], [], []>} : vector<16x16xbf16>, vector<16x8xbf16>, vector<16x8xf32> -> vector<16x8xf32>
    %35 = arith.addf %32, %34 : vector<16x8xf32>
    %c0_21 = arith.constant 0 : index
    %c0_22 = arith.constant 0 : index
    %36 = vector.load %arg9[%c0_21, %c0_22] : memref<16x8xf32, #tpu.memory_space<vmem>>, vector<16x8xf32>
    tpu.vector_store %arg9[%c0_21, %c0_22], %35 {strides = array<i32>} : memref<16x8xf32, #tpu.memory_space<vmem>>, vector<16x8xf32>,
    %c0_23 = arith.constant 0 : index
    %c0_24 = arith.constant 0 : index
    %37 = vector.load %arg7[%c0_23, %c0_24] : memref<16x1xf32, #tpu.memory_space<vmem>>, vector<16x1xf32>
    tpu.vector_store %arg7[%c0_23, %c0_24], %18 {strides = array<i32>} : memref<16x1xf32, #tpu.memory_space<vmem>>, vector<16x1xf32>,
    %c0_i32_25 = arith.constant 0 : i32
    %38 = arith.cmpi eq, %arg2, %c0_i32_25 : i32
    %39 = arith.extui %38 : i1 to i32
    %c0_i32_26 = arith.constant 0 : i32
    %40 = arith.cmpi ne, %39, %c0_i32_26 : i32
    scf.if %40 {
      %c0_27 = arith.constant 0 : index
      %c0_28 = arith.constant 0 : index
      %41 = vector.load %arg8[%c0_27, %c0_28] : memref<16x1xf32, #tpu.memory_space<vmem>>, vector<16x1xf32>
      %42 = tpu.reciprocal %41 {approx = true} : vector<16x1xf32> -> vector<16x1xf32>
      %c0_29 = arith.constant 0 : index
      %c0_30 = arith.constant 0 : index
      %43 = vector.load %arg9[%c0_29, %c0_30] : memref<16x8xf32, #tpu.memory_space<vmem>>, vector<16x8xf32>
      %44 = vector.broadcast %42 : vector<16x1xf32> to vector<16x8xf32>
      %45 = arith.mulf %43, %44 : vector<16x8xf32>
      %c0_31 = arith.constant 0 : index
      %c0_32 = arith.constant 0 : index
      %c0_33 = arith.constant 0 : index
      %46 = vector.load %arg6[%c0_31, %c0_32, %c0_33] : memref<1x16x8xf32, #tpu.memory_space<vmem>>, vector<1x16x8xf32>
      %47 = vector.shape_cast %46 : vector<1x16x8xf32> to vector<16x8xf32>
      %48 = vector.shape_cast %45 : vector<16x8xf32> to vector<1x16x8xf32>
      tpu.vector_store %arg6[%c0_31, %c0_32, %c0_33], %48 {strides = array<i32>} : memref<1x16x8xf32, #tpu.memory_space<vmem>>, vector<1x16x8xf32>,
    } else {
    }
    return
  }
  func.func @transform_0(%arg0: i32, %arg1: i32, %arg2: i32) -> (i32, i32, i32) {
    %c0_i32 = arith.constant 0 : i32
    %c0_i32_0 = arith.constant 0 : i32
    return %arg0, %arg1, %c0_i32 : i32, i32, i32
  }
  func.func @transform_1(%arg0: i32, %arg1: i32, %arg2: i32) -> (i32, i32, i32) {
    %c0_i32 = arith.constant 0 : i32
    %c0_i32_0 = arith.constant 0 : i32
    return %arg0, %arg2, %c0_i32 : i32, i32, i32
  }
  func.func @transform_2(%arg0: i32, %arg1: i32, %arg2: i32) -> (i32, i32, i32) {
    %c0_i32 = arith.constant 0 : i32
    %c0_i32_0 = arith.constant 0 : i32
    return %arg0, %arg2, %c0_i32 : i32, i32, i32
  }
  func.func @transform_3(%arg0: i32, %arg1: i32, %arg2: i32) -> (i32, i32, i32) {
    %c0_i32 = arith.constant 0 : i32
    %c0_i32_0 = arith.constant 0 : i32
    return %arg0, %arg1, %c0_i32 : i32, i32, i32
  }
}

module attributes {stable_mosaic.version = 11 : i64} {
  func.func @_attn_out_proj_kernel(%arg0: i32, %arg1: i32, %arg2: i32, %arg3: i32, %arg4: memref<1x1x16x8xf32, #tpu.memory_space<vmem>>, %arg5: memref<1x8x32xf32, #tpu.memory_space<vmem>>, %arg6: memref<1x32xf32, #tpu.memory_space<vmem>>, %arg7: memref<1x16x32xf32, #tpu.memory_space<vmem>>, %arg8: memref<1x16x32xf32, #tpu.memory_space<vmem>>, %arg9: memref<16x32xf32, #tpu.memory_space<vmem>>) attributes {dimension_semantics = [#tpu.dimension_semantics<parallel>, #tpu.dimension_semantics<parallel>, #tpu.dimension_semantics<parallel>, #tpu.dimension_semantics<arbitrary>], iteration_bounds = array<i64: 2, 1, 1, 4>, scalar_prefetch = 0 : i64, scratch_operands = 1 : i64, tpu.core_type = #tpu.core_type<tc>, window_params = [{transform_indices = @transform_0, window_bounds = array<i64: 1, 1, 16, 8>}, {transform_indices = @transform_1, window_bounds = array<i64: 1, 8, 32>}, {transform_indices = @transform_2, window_bounds = array<i64: 1, 32>}, {transform_indices = @transform_3, window_bounds = array<i64: 1, 16, 32>}, {transform_indices = @transform_4, window_bounds = array<i64: 1, 16, 32>}]} {
    %c0_i32 = arith.constant 0 : i32
    %0 = arith.cmpi eq, %arg3, %c0_i32 : i32
    %1 = arith.extui %0 : i1 to i32
    %c0_i32_0 = arith.constant 0 : i32
    %2 = arith.cmpi ne, %1, %c0_i32_0 : i32
    scf.if %2 {
      %cst_12 = arith.constant 0.000000e+00 : f32
      %16 = vector.broadcast %cst_12 : f32 to vector<16x32xf32>
      %c0_13 = arith.constant 0 : index
      %c0_14 = arith.constant 0 : index
      %17 = vector.load %arg9[%c0_13, %c0_14] : memref<16x32xf32, #tpu.memory_space<vmem>>, vector<16x32xf32>
      tpu.vector_store %arg9[%c0_13, %c0_14], %16 {strides = array<i32>} : memref<16x32xf32, #tpu.memory_space<vmem>>, vector<16x32xf32>,
    } else {
    }
    %c0 = arith.constant 0 : index
    %c0_1 = arith.constant 0 : index
    %3 = vector.load %arg9[%c0, %c0_1] : memref<16x32xf32, #tpu.memory_space<vmem>>, vector<16x32xf32>
    %c0_2 = arith.constant 0 : index
    %c0_3 = arith.constant 0 : index
    %c0_4 = arith.constant 0 : index
    %c0_5 = arith.constant 0 : index
    %4 = vector.load %arg4[%c0_2, %c0_3, %c0_4, %c0_5] : memref<1x1x16x8xf32, #tpu.memory_space<vmem>>, vector<1x1x16x8xf32>
    %5 = vector.shape_cast %4 : vector<1x1x16x8xf32> to vector<16x8xf32>
    %6 = arith.truncf %5 : vector<16x8xf32> to vector<16x8xbf16>
    %c0_6 = arith.constant 0 : index
    %c0_7 = arith.constant 0 : index
    %c0_8 = arith.constant 0 : index
    %7 = vector.load %arg5[%c0_6, %c0_7, %c0_8] : memref<1x8x32xf32, #tpu.memory_space<vmem>>, vector<1x8x32xf32>
    %8 = vector.shape_cast %7 : vector<1x8x32xf32> to vector<8x32xf32>
    %9 = arith.truncf %8 : vector<8x32xf32> to vector<8x32xbf16>
    %cst = arith.constant dense<0.000000e+00> : vector<16x32xf32>
    %10 = tpu.matmul %6, %9, %cst {dimension_numbers = #tpu.dot_dimension_numbers<[1], [0], [0], [1], [0, 0, 1, 1], [], []>} : vector<16x8xbf16>, vector<8x32xbf16>, vector<16x32xf32> -> vector<16x32xf32>
    %11 = arith.addf %3, %10 : vector<16x32xf32>
    %c0_9 = arith.constant 0 : index
    %c0_10 = arith.constant 0 : index
    %12 = vector.load %arg9[%c0_9, %c0_10] : memref<16x32xf32, #tpu.memory_space<vmem>>, vector<16x32xf32>
    tpu.vector_store %arg9[%c0_9, %c0_10], %11 {strides = array<i32>} : memref<16x32xf32, #tpu.memory_space<vmem>>, vector<16x32xf32>,
    %c3_i32 = arith.constant 3 : i32
    %13 = arith.cmpi eq, %arg3, %c3_i32 : i32
    %14 = arith.extui %13 : i1 to i32
    %c0_i32_11 = arith.constant 0 : i32
    %15 = arith.cmpi ne, %14, %c0_i32_11 : i32
    scf.if %15 {
      %c0_12 = arith.constant 0 : index
      %c0_13 = arith.constant 0 : index
      %16 = vector.load %arg9[%c0_12, %c0_13] : memref<16x32xf32, #tpu.memory_space<vmem>>, vector<16x32xf32>
      %c0_14 = arith.constant 0 : index
      %c0_15 = arith.constant 0 : index
      %17 = vector.load %arg6[%c0_14, %c0_15] : memref<1x32xf32, #tpu.memory_space<vmem>>, vector<1x32xf32>
      %18 = vector.broadcast %17 : vector<1x32xf32> to vector<16x32xf32>
      %19 = arith.addf %16, %18 : vector<16x32xf32>
      %c0_16 = arith.constant 0 : index
      %c0_17 = arith.constant 0 : index
      %c0_18 = arith.constant 0 : index
      %20 = vector.load %arg7[%c0_16, %c0_17, %c0_18] : memref<1x16x32xf32, #tpu.memory_space<vmem>>, vector<1x16x32xf32>
      %21 = vector.shape_cast %20 : vector<1x16x32xf32> to vector<16x32xf32>
      %22 = arith.addf %19, %21 : vector<16x32xf32>
      %c0_19 = arith.constant 0 : index
      %c0_20 = arith.constant 0 : index
      %c0_21 = arith.constant 0 : index
      %23 = vector.load %arg8[%c0_19, %c0_20, %c0_21] : memref<1x16x32xf32, #tpu.memory_space<vmem>>, vector<1x16x32xf32>
      %24 = vector.shape_cast %23 : vector<1x16x32xf32> to vector<16x32xf32>
      %25 = vector.shape_cast %22 : vector<16x32xf32> to vector<1x16x32xf32>
      tpu.vector_store %arg8[%c0_19, %c0_20, %c0_21], %25 {strides = array<i32>} : memref<1x16x32xf32, #tpu.memory_space<vmem>>, vector<1x16x32xf32>,
    } else {
    }
    return
  }
  func.func @transform_0(%arg0: i32, %arg1: i32, %arg2: i32, %arg3: i32) -> (i32, i32, i32, i32) {
    %c0_i32 = arith.constant 0 : i32
    %c0_i32_0 = arith.constant 0 : i32
    return %arg0, %arg3, %arg1, %c0_i32 : i32, i32, i32, i32
  }
  func.func @transform_1(%arg0: i32, %arg1: i32, %arg2: i32, %arg3: i32) -> (i32, i32, i32) {
    %c0_i32 = arith.constant 0 : i32
    %c0_i32_0 = arith.constant 0 : i32
    return %arg3, %c0_i32, %arg2 : i32, i32, i32
  }
  func.func @transform_2(%arg0: i32, %arg1: i32, %arg2: i32, %arg3: i32) -> (i32, i32) {
    %c0_i32 = arith.constant 0 : i32
    %c0_i32_0 = arith.constant 0 : i32
    return %c0_i32, %arg2 : i32, i32
  }
  func.func @transform_3(%arg0: i32, %arg1: i32, %arg2: i32, %arg3: i32) -> (i32, i32, i32) {
    %c0_i32 = arith.constant 0 : i32
    return %arg0, %arg1, %arg2 : i32, i32, i32
  }
  func.func @transform_4(%arg0: i32, %arg1: i32, %arg2: i32, %arg3: i32) -> (i32, i32, i32) {
    %c0_i32 = arith.constant 0 : i32
    return %arg0, %arg1, %arg2 : i32, i32, i32
  }
}

module attributes {stable_mosaic.version = 11 : i64} {
  func.func @_ln_matmul_kernel(%arg0: i32, %arg1: i32, %arg2: memref<32x32xf32, #tpu.memory_space<vmem>>, %arg3: memref<1x32xf32, #tpu.memory_space<vmem>>, %arg4: memref<1x32xf32, #tpu.memory_space<vmem>>, %arg5: memref<32x32xf32, #tpu.memory_space<vmem>>, %arg6: memref<32x32xf32, #tpu.memory_space<vmem>>) attributes {dimension_semantics = [#tpu.dimension_semantics<parallel>, #tpu.dimension_semantics<parallel>], iteration_bounds = array<i64: 1, 1>, scalar_prefetch = 0 : i64, scratch_operands = 0 : i64, tpu.core_type = #tpu.core_type<tc>, window_params = [{transform_indices = @transform_0, window_bounds = array<i64: 32, 32>}, {pipeline_mode = #tpu.pipeline_mode<synchronous>, transform_indices = @transform_1, window_bounds = array<i64: 1, 32>}, {pipeline_mode = #tpu.pipeline_mode<synchronous>, transform_indices = @transform_2, window_bounds = array<i64: 1, 32>}, {transform_indices = @transform_3, window_bounds = array<i64: 32, 32>}, {transform_indices = @transform_4, window_bounds = array<i64: 32, 32>}]} {
    %c0 = arith.constant 0 : index
    %c0_0 = arith.constant 0 : index
    %0 = vector.load %arg2[%c0, %c0_0] : memref<32x32xf32, #tpu.memory_space<vmem>>, vector<32x32xf32>
    %cst = arith.constant dense<0.000000e+00> : vector<32xf32>
    %1 = vector.multi_reduction <add>, %0, %cst [1] : vector<32x32xf32> to vector<32xf32>
    %2 = vector.shape_cast %1 : vector<32xf32> to vector<32x1xf32>
    %cst_1 = arith.constant 3.200000e+01 : f32
    %3 = vector.broadcast %cst_1 : f32 to vector<32x1xf32>
    %4 = arith.divf %2, %3 : vector<32x1xf32>
    %5 = vector.broadcast %4 : vector<32x1xf32> to vector<32x32xf32>
    %6 = arith.subf %0, %5 : vector<32x32xf32>
    %7 = arith.mulf %6, %6 : vector<32x32xf32>
    %cst_2 = arith.constant dense<0.000000e+00> : vector<32xf32>
    %8 = vector.multi_reduction <add>, %7, %cst_2 [1] : vector<32x32xf32> to vector<32xf32>
    %9 = vector.shape_cast %8 : vector<32xf32> to vector<32x1xf32>
    %cst_3 = arith.constant 3.200000e+01 : f32
    %10 = vector.broadcast %cst_3 : f32 to vector<32x1xf32>
    %11 = arith.divf %9, %10 : vector<32x1xf32>
    %cst_4 = arith.constant 9.99999974E-6 : f32
    %12 = vector.broadcast %cst_4 : f32 to vector<32x1xf32>
    %13 = arith.addf %11, %12 : vector<32x1xf32>
    %14 = math.rsqrt %13 : vector<32x1xf32>
    %15 = vector.broadcast %14 : vector<32x1xf32> to vector<32x32xf32>
    %16 = arith.mulf %6, %15 : vector<32x32xf32>
    %c0_5 = arith.constant 0 : index
    %c0_6 = arith.constant 0 : index
    %17 = vector.load %arg3[%c0_5, %c0_6] : memref<1x32xf32, #tpu.memory_space<vmem>>, vector<1x32xf32>
    %18 = vector.broadcast %17 : vector<1x32xf32> to vector<32x32xf32>
    %19 = arith.mulf %16, %18 : vector<32x32xf32>
    %c0_7 = arith.constant 0 : index
    %c0_8 = arith.constant 0 : index
    %20 = vector.load %arg4[%c0_7, %c0_8] : memref<1x32xf32, #tpu.memory_space<vmem>>, vector<1x32xf32>
    %21 = vector.broadcast %20 : vector<1x32xf32> to vector<32x32xf32>
    %22 = arith.addf %19, %21 : vector<32x32xf32>
    %23 = arith.truncf %22 : vector<32x32xf32> to vector<32x32xbf16>
    %c0_9 = arith.constant 0 : index
    %c0_10 = arith.constant 0 : index
    %24 = vector.load %arg5[%c0_9, %c0_10] : memref<32x32xf32, #tpu.memory_space<vmem>>, vector<32x32xf32>
    %25 = arith.truncf %24 : vector<32x32xf32> to vector<32x32xbf16>
    %cst_11 = arith.constant dense<0.000000e+00> : vector<32x32xf32>
    %26 = tpu.matmul %23, %25, %cst_11 {dimension_numbers = #tpu.dot_dimension_numbers<[1], [0], [0], [1], [0, 0, 1, 1], [], []>} : vector<32x32xbf16>, vector<32x32xbf16>, vector<32x32xf32> -> vector<32x32xf32>
    %c0_12 = arith.constant 0 : index
    %c0_13 = arith.constant 0 : index
    %27 = vector.load %arg6[%c0_12, %c0_13] : memref<32x32xf32, #tpu.memory_space<vmem>>, vector<32x32xf32>
    tpu.vector_store %arg6[%c0_12, %c0_13], %26 {strides = array<i32>} : memref<32x32xf32, #tpu.memory_space<vmem>>, vector<32x32xf32>,
    return
  }
  func.func @transform_0(%arg0: i32, %arg1: i32) -> (i32, i32) {
    %c0_i32 = arith.constant 0 : i32
    %c0_i32_0 = arith.constant 0 : i32
    return %arg0, %c0_i32 : i32, i32
  }
  func.func @transform_1(%arg0: i32, %arg1: i32) -> (i32, i32) {
    %c0_i32 = arith.constant 0 : i32
    %c0_i32_0 = arith.constant 0 : i32
    %c0_i32_1 = arith.constant 0 : i32
    return %c0_i32, %c0_i32_0 : i32, i32
  }
  func.func @transform_2(%arg0: i32, %arg1: i32) -> (i32, i32) {
    %c0_i32 = arith.constant 0 : i32
    %c0_i32_0 = arith.constant 0 : i32
    %c0_i32_1 = arith.constant 0 : i32
    return %c0_i32, %c0_i32_0 : i32, i32
  }
  func.func @transform_3(%arg0: i32, %arg1: i32) -> (i32, i32) {
    %c0_i32 = arith.constant 0 : i32
    %c0_i32_0 = arith.constant 0 : i32
    return %c0_i32, %arg1 : i32, i32
  }
  func.func @transform_4(%arg0: i32, %arg1: i32) -> (i32, i32) {
    %c0_i32 = arith.constant 0 : i32
    return %arg0, %arg1 : i32, i32
  }
}

module attributes {stable_mosaic.version = 11 : i64} {
  func.func @_matmul_kernel(%arg0: i32, %arg1: i32, %arg2: i32, %arg3: memref<16x24xf32, #tpu.memory_space<vmem>>, %arg4: memref<24x64xf32, #tpu.memory_space<vmem>>, %arg5: memref<16x64xf32, #tpu.memory_space<vmem>>, %arg6: memref<16x64xf32, #tpu.memory_space<vmem>>) attributes {dimension_semantics = [#tpu.dimension_semantics<parallel>, #tpu.dimension_semantics<parallel>, #tpu.dimension_semantics<arbitrary>], iteration_bounds = array<i64: 1, 1, 1>, scalar_prefetch = 0 : i64, scratch_operands = 1 : i64, tpu.core_type = #tpu.core_type<tc>, window_params = [{transform_indices = @transform_0, window_bounds = array<i64: 16, 24>}, {transform_indices = @transform_1, window_bounds = array<i64: 24, 64>}, {transform_indices = @transform_2, window_bounds = array<i64: 16, 64>}]} {
    %c0_i32 = arith.constant 0 : i32
    %0 = arith.cmpi eq, %arg2, %c0_i32 : i32
    %1 = arith.extui %0 : i1 to i32
    %c0_i32_0 = arith.constant 0 : i32
    %2 = arith.cmpi ne, %1, %c0_i32_0 : i32
    scf.if %2 {
      %cst_10 = arith.constant 0.000000e+00 : f32
      %14 = vector.broadcast %cst_10 : f32 to vector<16x64xf32>
      %c0_11 = arith.constant 0 : index
      %c0_12 = arith.constant 0 : index
      %15 = vector.load %arg6[%c0_11, %c0_12] : memref<16x64xf32, #tpu.memory_space<vmem>>, vector<16x64xf32>
      tpu.vector_store %arg6[%c0_11, %c0_12], %14 {strides = array<i32>} : memref<16x64xf32, #tpu.memory_space<vmem>>, vector<16x64xf32>,
    } else {
    }
    %c0 = arith.constant 0 : index
    %c0_1 = arith.constant 0 : index
    %3 = vector.load %arg6[%c0, %c0_1] : memref<16x64xf32, #tpu.memory_space<vmem>>, vector<16x64xf32>
    %c0_2 = arith.constant 0 : index
    %c0_3 = arith.constant 0 : index
    %4 = vector.load %arg3[%c0_2, %c0_3] : memref<16x24xf32, #tpu.memory_space<vmem>>, vector<16x24xf32>
    %5 = arith.truncf %4 : vector<16x24xf32> to vector<16x24xbf16>
    %c0_4 = arith.constant 0 : index
    %c0_5 = arith.constant 0 : index
    %6 = vector.load %arg4[%c0_4, %c0_5] : memref<24x64xf32, #tpu.memory_space<vmem>>, vector<24x64xf32>
    %7 = arith.truncf %6 : vector<24x64xf32> to vector<24x64xbf16>
    %cst = arith.constant dense<0.000000e+00> : vector<16x64xf32>
    %8 = tpu.matmul %5, %7, %cst {dimension_numbers = #tpu.dot_dimension_numbers<[1], [0], [0], [1], [0, 0, 1, 1], [], []>} : vector<16x24xbf16>, vector<24x64xbf16>, vector<16x64xf32> -> vector<16x64xf32>
    %9 = arith.addf %3, %8 : vector<16x64xf32>
    %c0_6 = arith.constant 0 : index
    %c0_7 = arith.constant 0 : index
    %10 = vector.load %arg6[%c0_6, %c0_7] : memref<16x64xf32, #tpu.memory_space<vmem>>, vector<16x64xf32>
    tpu.vector_store %arg6[%c0_6, %c0_7], %9 {strides = array<i32>} : memref<16x64xf32, #tpu.memory_space<vmem>>, vector<16x64xf32>,
    %c0_i32_8 = arith.constant 0 : i32
    %11 = arith.cmpi eq, %arg2, %c0_i32_8 : i32
    %12 = arith.extui %11 : i1 to i32
    %c0_i32_9 = arith.constant 0 : i32
    %13 = arith.cmpi ne, %12, %c0_i32_9 : i32
    scf.if %13 {
      %c0_10 = arith.constant 0 : index
      %c0_11 = arith.constant 0 : index
      %14 = vector.load %arg6[%c0_10, %c0_11] : memref<16x64xf32, #tpu.memory_space<vmem>>, vector<16x64xf32>
      %c0_12 = arith.constant 0 : index
      %c0_13 = arith.constant 0 : index
      %15 = vector.load %arg5[%c0_12, %c0_13] : memref<16x64xf32, #tpu.memory_space<vmem>>, vector<16x64xf32>
      tpu.vector_store %arg5[%c0_12, %c0_13], %14 {strides = array<i32>} : memref<16x64xf32, #tpu.memory_space<vmem>>, vector<16x64xf32>,
    } else {
    }
    return
  }
  func.func @transform_0(%arg0: i32, %arg1: i32, %arg2: i32) -> (i32, i32) {
    %c0_i32 = arith.constant 0 : i32
    return %arg0, %arg2 : i32, i32
  }
  func.func @transform_1(%arg0: i32, %arg1: i32, %arg2: i32) -> (i32, i32) {
    %c0_i32 = arith.constant 0 : i32
    return %arg2, %arg1 : i32, i32
  }
  func.func @transform_2(%arg0: i32, %arg1: i32, %arg2: i32) -> (i32, i32) {
    %c0_i32 = arith.constant 0 : i32
    return %arg0, %arg1 : i32, i32
  }
}

module attributes {stable_mosaic.version = 11 : i64} {
  func.func @_flash_attn_kernel(%arg0: i32, %arg1: i32, %arg2: i32, %arg3: memref<1x16x8xf32, #tpu.memory_space<vmem>>, %arg4: memref<1x8x8xf32, #tpu.memory_space<vmem>>, %arg5: memref<1x8x8xf32, #tpu.memory_space<vmem>>, %arg6: memref<1x16x8xf32, #tpu.memory_space<vmem>>, %arg7: memref<16x1xf32, #tpu.memory_space<vmem>>, %arg8: memref<16x1xf32, #tpu.memory_space<vmem>>, %arg9: memref<16x8xf32, #tpu.memory_space<vmem>>) attributes {dimension_semantics = [#tpu.dimension_semantics<parallel>, #tpu.dimension_semantics<parallel>, #tpu.dimension_semantics<arbitrary>], iteration_bounds = array<i64: 8, 1, 1>, scalar_prefetch = 0 : i64, scratch_operands = 3 : i64, tpu.core_type = #tpu.core_type<tc>, window_params = [{transform_indices = @transform_0, window_bounds = array<i64: 1, 16, 8>}, {transform_indices = @transform_1, window_bounds = array<i64: 1, 8, 8>}, {transform_indices = @transform_2, window_bounds = array<i64: 1, 8, 8>}, {transform_indices = @transform_3, window_bounds = array<i64: 1, 16, 8>}]} {
    %c0_i32 = arith.constant 0 : i32
    %0 = arith.cmpi eq, %arg2, %c0_i32 : i32
    %1 = arith.extui %0 : i1 to i32
    %c0_i32_0 = arith.constant 0 : i32
    %2 = arith.cmpi ne, %1, %c0_i32_0 : i32
    scf.if %2 {
      %cst_27 = arith.constant 0xFF800000 : f32
      %41 = vector.broadcast %cst_27 : f32 to vector<16x1xf32>
      %c0_28 = arith.constant 0 : index
      %c0_29 = arith.constant 0 : index
      %42 = vector.load %arg7[%c0_28, %c0_29] : memref<16x1xf32, #tpu.memory_space<vmem>>, vector<16x1xf32>
      tpu.vector_store %arg7[%c0_28, %c0_29], %41 {strides = array<i32>} : memref<16x1xf32, #tpu.memory_space<vmem>>, vector<16x1xf32>,
      %cst_30 = arith.constant 0.000000e+00 : f32
      %43 = vector.broadcast %cst_30 : f32 to vector<16x1xf32>
      %c0_31 = arith.constant 0 : index
      %c0_32 = arith.constant 0 : index
      %44 = vector.load %arg8[%c0_31, %c0_32] : memref<16x1xf32, #tpu.memory_space<vmem>>, vector<16x1xf32>
      tpu.vector_store %arg8[%c0_31, %c0_32], %43 {strides = array<i32>} : memref<16x1xf32, #tpu.memory_space<vmem>>, vector<16x1xf32>,
      %cst_33 = arith.constant 0.000000e+00 : f32
      %45 = vector.broadcast %cst_33 : f32 to vector<16x8xf32>
      %c0_34 = arith.constant 0 : index
      %c0_35 = arith.constant 0 : index
      %46 = vector.load %arg9[%c0_34, %c0_35] : memref<16x8xf32, #tpu.memory_space<vmem>>, vector<16x8xf32>
      tpu.vector_store %arg9[%c0_34, %c0_35], %45 {strides = array<i32>} : memref<16x8xf32, #tpu.memory_space<vmem>>, vector<16x8xf32>,
    } else {
    }
    %c0 = arith.constant 0 : index
    %c0_1 = arith.constant 0 : index
    %c0_2 = arith.constant 0 : index
    %3 = vector.load %arg3[%c0, %c0_1, %c0_2] : memref<1x16x8xf32, #tpu.memory_space<vmem>>, vector<1x16x8xf32>
    %4 = vector.shape_cast %3 : vector<1x16x8xf32> to vector<16x8xf32>
    %cst = arith.constant 0.353553385 : f32
    %5 = vector.broadcast %cst : f32 to vector<16x8xf32>
    %6 = arith.mulf %4, %5 : vector<16x8xf32>
    %7 = arith.truncf %6 : vector<16x8xf32> to vector<16x8xbf16>
    %c0_3 = arith.constant 0 : index
    %c0_4 = arith.constant 0 : index
    %c0_5 = arith.constant 0 : index
    %8 = vector.load %arg4[%c0_3, %c0_4, %c0_5] : memref<1x8x8xf32, #tpu.memory_space<vmem>>, vector<1x8x8xf32>
    %9 = vector.shape_cast %8 : vector<1x8x8xf32> to vector<8x8xf32>
    %10 = arith.truncf %9 : vector<8x8xf32> to vector<8x8xbf16>
    %c0_6 = arith.constant 0 : index
    %c0_7 = arith.constant 0 : index
    %c0_8 = arith.constant 0 : index
    %11 = vector.load %arg5[%c0_6, %c0_7, %c0_8] : memref<1x8x8xf32, #tpu.memory_space<vmem>>, vector<1x8x8xf32>
    %12 = vector.shape_cast %11 : vector<1x8x8xf32> to vector<8x8xf32>
    %13 = arith.truncf %12 : vector<8x8xf32> to vector<8x8xbf16>
    %cst_9 = arith.constant dense<0.000000e+00> : vector<16x8xf32>
    %14 = tpu.matmul %7, %10, %cst_9 {dimension_numbers = #tpu.dot_dimension_numbers<[1], [1], [0], [0], [0, 0, 1, 0], [], []>} : vector<16x8xbf16>, vector<8x8xbf16>, vector<16x8xf32> -> vector<16x8xf32>
    %c0_10 = arith.constant 0 : index
    %c0_11 = arith.constant 0 : index
    %15 = vector.load %arg7[%c0_10, %c0_11] : memref<16x1xf32, #tpu.memory_space<vmem>>, vector<16x1xf32>
    %cst_12 = arith.constant dense<0xFF800000> : vector<16xf32>
    %16 = vector.multi_reduction <maximumf>, %14, %cst_12 [1] : vector<16x8xf32> to vector<16xf32>
    %17 = vector.shape_cast %16 : vector<16xf32> to vector<16x1xf32>
    %18 = arith.maximumf %15, %17 : vector<16x1xf32>
    %19 = arith.subf %15, %18 : vector<16x1xf32>
    %20 = math.exp %19 : vector<16x1xf32>
    %21 = vector.broadcast %18 : vector<16x1xf32> to vector<16x8xf32>
    %22 = arith.subf %14, %21 : vector<16x8xf32>
    %23 = math.exp %22 : vector<16x8xf32>
    %c0_13 = arith.constant 0 : index
    %c0_14 = arith.constant 0 : index
    %24 = vector.load %arg8[%c0_13, %c0_14] : memref<16x1xf32, #tpu.memory_space<vmem>>, vector<16x1xf32>
    %25 = arith.mulf %20, %24 : vector<16x1xf32>
    %cst_15 = arith.constant dense<0.000000e+00> : vector<16xf32>
    %26 = vector.multi_reduction <add>, %23, %cst_15 [1] : vector<16x8xf32> to vector<16xf32>
    %27 = vector.shape_cast %26 : vector<16xf32> to vector<16x1xf32>
    %28 = arith.addf %25, %27 : vector<16x1xf32>
    %c0_16 = arith.constant 0 : index
    %c0_17 = arith.constant 0 : index
    %29 = vector.load %arg8[%c0_16, %c0_17] : memref<16x1xf32, #tpu.memory_space<vmem>>, vector<16x1xf32>
    tpu.vector_store %arg8[%c0_16, %c0_17], %28 {strides = array<i32>} : memref<16x1xf32, #tpu.memory_space<vmem>>, vector<16x1xf32>,
    %c0_18 = arith.constant 0 : index
    %c0_19 = arith.constant 0 : index
    %30 = vector.load %arg9[%c0_18, %c0_19] : memref<16x8xf32, #tpu.memory_space<vmem>>, vector<16x8xf32>
    %31 = vector.broadcast %20 : vector<16x1xf32> to vector<16x8xf32>
    %32 = arith.mulf %31, %30 : vector<16x8xf32>
    %33 = arith.truncf %23 : vector<16x8xf32> to vector<16x8xbf16>
    %cst_20 = arith.constant dense<0.000000e+00> : vector<16x8xf32>
    %34 = tpu.matmul %33, %13, %cst_20 {dimension_numbers = #tpu.dot_dimension_numbers<[1], [0], [0], [1], [0, 0, 1, 1], [], []>} : vector<16x8xbf16>, vector<8x8xbf16>, vector<16x8xf32> -> vector<16x8xf32>
    %35 = arith.addf %32, %34 : vector<16x8xf32>
    %c0_21 = arith.constant 0 : index
    %c0_22 = arith.constant 0 : index
    %36 = vector.load %arg9[%c0_21, %c0_22] : memref<16x8xf32, #tpu.memory_space<vmem>>, vector<16x8xf32>
    tpu.vector_store %arg9[%c0_21, %c0_22], %35 {strides = array<i32>} : memref<16x8xf32, #tpu.memory_space<vmem>>, vector<16x8xf32>,
    %c0_23 = arith.constant 0 : index
    %c0_24 = arith.constant 0 : index
    %37 = vector.load %arg7[%c0_23, %c0_24] : memref<16x1xf32, #tpu.memory_space<vmem>>, vector<16x1xf32>
    tpu.vector_store %arg7[%c0_23, %c0_24], %18 {strides = array<i32>} : memref<16x1xf32, #tpu.memory_space<vmem>>, vector<16x1xf32>,
    %c0_i32_25 = arith.constant 0 : i32
    %38 = arith.cmpi eq, %arg2, %c0_i32_25 : i32
    %39 = arith.extui %38 : i1 to i32
    %c0_i32_26 = arith.constant 0 : i32
    %40 = arith.cmpi ne, %39, %c0_i32_26 : i32
    scf.if %40 {
      %c0_27 = arith.constant 0 : index
      %c0_28 = arith.constant 0 : index
      %41 = vector.load %arg8[%c0_27, %c0_28] : memref<16x1xf32, #tpu.memory_space<vmem>>, vector<16x1xf32>
      %42 = tpu.reciprocal %41 {approx = true} : vector<16x1xf32> -> vector<16x1xf32>
      %c0_29 = arith.constant 0 : index
      %c0_30 = arith.constant 0 : index
      %43 = vector.load %arg9[%c0_29, %c0_30] : memref<16x8xf32, #tpu.memory_space<vmem>>, vector<16x8xf32>
      %44 = vector.broadcast %42 : vector<16x1xf32> to vector<16x8xf32>
      %45 = arith.mulf %43, %44 : vector<16x8xf32>
      %c0_31 = arith.constant 0 : index
      %c0_32 = arith.constant 0 : index
      %c0_33 = arith.constant 0 : index
      %46 = vector.load %arg6[%c0_31, %c0_32, %c0_33] : memref<1x16x8xf32, #tpu.memory_space<vmem>>, vector<1x16x8xf32>
      %47 = vector.shape_cast %46 : vector<1x16x8xf32> to vector<16x8xf32>
      %48 = vector.shape_cast %45 : vector<16x8xf32> to vector<1x16x8xf32>
      tpu.vector_store %arg6[%c0_31, %c0_32, %c0_33], %48 {strides = array<i32>} : memref<1x16x8xf32, #tpu.memory_space<vmem>>, vector<1x16x8xf32>,
    } else {
    }
    return
  }
  func.func @transform_0(%arg0: i32, %arg1: i32, %arg2: i32) -> (i32, i32, i32) {
    %c0_i32 = arith.constant 0 : i32
    %c0_i32_0 = arith.constant 0 : i32
    return %arg0, %arg1, %c0_i32 : i32, i32, i32
  }
  func.func @transform_1(%arg0: i32, %arg1: i32, %arg2: i32) -> (i32, i32, i32) {
    %c0_i32 = arith.constant 0 : i32
    %c0_i32_0 = arith.constant 0 : i32
    return %arg0, %arg2, %c0_i32 : i32, i32, i32
  }
  func.func @transform_2(%arg0: i32, %arg1: i32, %arg2: i32) -> (i32, i32, i32) {
    %c0_i32 = arith.constant 0 : i32
    %c0_i32_0 = arith.constant 0 : i32
    return %arg0, %arg2, %c0_i32 : i32, i32, i32
  }
  func.func @transform_3(%arg0: i32, %arg1: i32, %arg2: i32) -> (i32, i32, i32) {
    %c0_i32 = arith.constant 0 : i32
    %c0_i32_0 = arith.constant 0 : i32
    return %arg0, %arg1, %c0_i32 : i32, i32, i32
  }
}

module attributes {stable_mosaic.version = 11 : i64} {
  func.func @_matmul_kernel(%arg0: i32, %arg1: i32, %arg2: i32, %arg3: memref<32x128xf32, #tpu.memory_space<vmem>>, %arg4: memref<128x32xf32, #tpu.memory_space<vmem>>, %arg5: memref<1x32xf32, #tpu.memory_space<vmem>>, %arg6: memref<32x32xf32, #tpu.memory_space<vmem>>, %arg7: memref<32x32xf32, #tpu.memory_space<vmem>>, %arg8: memref<32x32xf32, #tpu.memory_space<vmem>>) attributes {dimension_semantics = [#tpu.dimension_semantics<parallel>, #tpu.dimension_semantics<parallel>, #tpu.dimension_semantics<arbitrary>], iteration_bounds = array<i64: 1, 1, 1>, scalar_prefetch = 0 : i64, scratch_operands = 1 : i64, tpu.core_type = #tpu.core_type<tc>, window_params = [{transform_indices = @transform_0, window_bounds = array<i64: 32, 128>}, {transform_indices = @transform_1, window_bounds = array<i64: 128, 32>}, {transform_indices = @transform_2, window_bounds = array<i64: 1, 32>}, {transform_indices = @transform_3, window_bounds = array<i64: 32, 32>}, {transform_indices = @transform_4, window_bounds = array<i64: 32, 32>}]} {
    %c0_i32 = arith.constant 0 : i32
    %0 = arith.cmpi eq, %arg2, %c0_i32 : i32
    %1 = arith.extui %0 : i1 to i32
    %c0_i32_0 = arith.constant 0 : i32
    %2 = arith.cmpi ne, %1, %c0_i32_0 : i32
    scf.if %2 {
      %cst_10 = arith.constant 0.000000e+00 : f32
      %14 = vector.broadcast %cst_10 : f32 to vector<32x32xf32>
      %c0_11 = arith.constant 0 : index
      %c0_12 = arith.constant 0 : index
      %15 = vector.load %arg8[%c0_11, %c0_12] : memref<32x32xf32, #tpu.memory_space<vmem>>, vector<32x32xf32>
      tpu.vector_store %arg8[%c0_11, %c0_12], %14 {strides = array<i32>} : memref<32x32xf32, #tpu.memory_space<vmem>>, vector<32x32xf32>,
    } else {
    }
    %c0 = arith.constant 0 : index
    %c0_1 = arith.constant 0 : index
    %3 = vector.load %arg8[%c0, %c0_1] : memref<32x32xf32, #tpu.memory_space<vmem>>, vector<32x32xf32>
    %c0_2 = arith.constant 0 : index
    %c0_3 = arith.constant 0 : index
    %4 = vector.load %arg3[%c0_2, %c0_3] : memref<32x128xf32, #tpu.memory_space<vmem>>, vector<32x128xf32>
    %5 = arith.truncf %4 : vector<32x128xf32> to vector<32x128xbf16>
    %c0_4 = arith.constant 0 : index
    %c0_5 = arith.constant 0 : index
    %6 = vector.load %arg4[%c0_4, %c0_5] : memref<128x32xf32, #tpu.memory_space<vmem>>, vector<128x32xf32>
    %7 = arith.truncf %6 : vector<128x32xf32> to vector<128x32xbf16>
    %cst = arith.constant dense<0.000000e+00> : vector<32x32xf32>
    %8 = tpu.matmul %5, %7, %cst {dimension_numbers = #tpu.dot_dimension_numbers<[1], [0], [0], [1], [0, 0, 1, 1], [], []>} : vector<32x128xbf16>, vector<128x32xbf16>, vector<32x32xf32> -> vector<32x32xf32>
    %9 = arith.addf %3, %8 : vector<32x32xf32>
    %c0_6 = arith.constant 0 : index
    %c0_7 = arith.constant 0 : index
    %10 = vector.load %arg8[%c0_6, %c0_7] : memref<32x32xf32, #tpu.memory_space<vmem>>, vector<32x32xf32>
    tpu.vector_store %arg8[%c0_6, %c0_7], %9 {strides = array<i32>} : memref<32x32xf32, #tpu.memory_space<vmem>>, vector<32x32xf32>,
    %c0_i32_8 = arith.constant 0 : i32
    %11 = arith.cmpi eq, %arg2, %c0_i32_8 : i32
    %12 = arith.extui %11 : i1 to i32
    %c0_i32_9 = arith.constant 0 : i32
    %13 = arith.cmpi ne, %12, %c0_i32_9 : i32
    scf.if %13 {
      %c0_10 = arith.constant 0 : index
      %c0_11 = arith.constant 0 : index
      %14 = vector.load %arg8[%c0_10, %c0_11] : memref<32x32xf32, #tpu.memory_space<vmem>>, vector<32x32xf32>
      %c0_12 = arith.constant 0 : index
      %c0_13 = arith.constant 0 : index
      %15 = vector.load %arg5[%c0_12, %c0_13] : memref<1x32xf32, #tpu.memory_space<vmem>>, vector<1x32xf32>
      %16 = vector.broadcast %15 : vector<1x32xf32> to vector<32x32xf32>
      %17 = arith.addf %14, %16 : vector<32x32xf32>
      %c0_14 = arith.constant 0 : index
      %c0_15 = arith.constant 0 : index
      %18 = vector.load %arg6[%c0_14, %c0_15] : memref<32x32xf32, #tpu.memory_space<vmem>>, vector<32x32xf32>
      %19 = arith.addf %17, %18 : vector<32x32xf32>
      %c0_16 = arith.constant 0 : index
      %c0_17 = arith.constant 0 : index
      %20 = vector.load %arg7[%c0_16, %c0_17] : memref<32x32xf32, #tpu.memory_space<vmem>>, vector<32x32xf32>
      tpu.vector_store %arg7[%c0_16, %c0_17], %19 {strides = array<i32>} : memref<32x32xf32, #tpu.memory_space<vmem>>, vector<32x32xf32>,
    } else {
    }
    return
  }
  func.func @transform_0(%arg0: i32, %arg1: i32, %arg2: i32) -> (i32, i32) {
    %c0_i32 = arith.constant 0 : i32
    return %arg0, %arg2 : i32, i32
  }
  func.func @transform_1(%arg0: i32, %arg1: i32, %arg2: i32) -> (i32, i32) {
    %c0_i32 = arith.constant 0 : i32
    return %arg2, %arg1 : i32, i32
  }
  func.func @transform_2(%arg0: i32, %arg1: i32, %arg2: i32) -> (i32, i32) {
    %c0_i32 = arith.constant 0 : i32
    %c0_i32_0 = arith.constant 0 : i32
    return %c0_i32, %arg1 : i32, i32
  }
  func.func @transform_3(%arg0: i32, %arg1: i32, %arg2: i32) -> (i32, i32) {
    %c0_i32 = arith.constant 0 : i32
    return %arg0, %arg1 : i32, i32
  }
  func.func @transform_4(%arg0: i32, %arg1: i32, %arg2: i32) -> (i32, i32) {
    %c0_i32 = arith.constant 0 : i32
    return %arg0, %arg1 : i32, i32
  }
}

module attributes {stable_mosaic.version = 11 : i64} {
  func.func @_ln_geglu_kernel(%arg0: i32, %arg1: i32, %arg2: memref<32x32xf32, #tpu.memory_space<vmem>>, %arg3: memref<1x32xf32, #tpu.memory_space<vmem>>, %arg4: memref<1x32xf32, #tpu.memory_space<vmem>>, %arg5: memref<32x128xf32, #tpu.memory_space<vmem>>, %arg6: memref<1x128xf32, #tpu.memory_space<vmem>>, %arg7: memref<32x128xf32, #tpu.memory_space<vmem>>, %arg8: memref<1x128xf32, #tpu.memory_space<vmem>>, %arg9: memref<32x128xf32, #tpu.memory_space<vmem>>) attributes {dimension_semantics = [#tpu.dimension_semantics<parallel>, #tpu.dimension_semantics<parallel>], iteration_bounds = array<i64: 1, 1>, scalar_prefetch = 0 : i64, scratch_operands = 0 : i64, tpu.core_type = #tpu.core_type<tc>, window_params = [{transform_indices = @transform_0, window_bounds = array<i64: 32, 32>}, {pipeline_mode = #tpu.pipeline_mode<synchronous>, transform_indices = @transform_1, window_bounds = array<i64: 1, 32>}, {pipeline_mode = #tpu.pipeline_mode<synchronous>, transform_indices = @transform_2, window_bounds = array<i64: 1, 32>}, {transform_indices = @transform_3, window_bounds = array<i64: 32, 128>}, {transform_indices = @transform_4, window_bounds = array<i64: 1, 128>}, {transform_indices = @transform_5, window_bounds = array<i64: 32, 128>}, {transform_indices = @transform_6, window_bounds = array<i64: 1, 128>}, {transform_indices = @transform_7, window_bounds = array<i64: 32, 128>}]} {
    %c0 = arith.constant 0 : index
    %c0_0 = arith.constant 0 : index
    %0 = vector.load %arg2[%c0, %c0_0] : memref<32x32xf32, #tpu.memory_space<vmem>>, vector<32x32xf32>
    %cst = arith.constant dense<0.000000e+00> : vector<32xf32>
    %1 = vector.multi_reduction <add>, %0, %cst [1] : vector<32x32xf32> to vector<32xf32>
    %2 = vector.shape_cast %1 : vector<32xf32> to vector<32x1xf32>
    %cst_1 = arith.constant 3.200000e+01 : f32
    %3 = vector.broadcast %cst_1 : f32 to vector<32x1xf32>
    %4 = arith.divf %2, %3 : vector<32x1xf32>
    %5 = vector.broadcast %4 : vector<32x1xf32> to vector<32x32xf32>
    %6 = arith.subf %0, %5 : vector<32x32xf32>
    %7 = arith.mulf %6, %6 : vector<32x32xf32>
    %cst_2 = arith.constant dense<0.000000e+00> : vector<32xf32>
    %8 = vector.multi_reduction <add>, %7, %cst_2 [1] : vector<32x32xf32> to vector<32xf32>
    %9 = vector.shape_cast %8 : vector<32xf32> to vector<32x1xf32>
    %cst_3 = arith.constant 3.200000e+01 : f32
    %10 = vector.broadcast %cst_3 : f32 to vector<32x1xf32>
    %11 = arith.divf %9, %10 : vector<32x1xf32>
    %cst_4 = arith.constant 9.99999974E-6 : f32
    %12 = vector.broadcast %cst_4 : f32 to vector<32x1xf32>
    %13 = arith.addf %11, %12 : vector<32x1xf32>
    %14 = math.rsqrt %13 : vector<32x1xf32>
    %15 = vector.broadcast %14 : vector<32x1xf32> to vector<32x32xf32>
    %16 = arith.mulf %6, %15 : vector<32x32xf32>
    %c0_5 = arith.constant 0 : index
    %c0_6 = arith.constant 0 : index
    %17 = vector.load %arg3[%c0_5, %c0_6] : memref<1x32xf32, #tpu.memory_space<vmem>>, vector<1x32xf32>
    %18 = vector.broadcast %17 : vector<1x32xf32> to vector<32x32xf32>
    %19 = arith.mulf %16, %18 : vector<32x32xf32>
    %c0_7 = arith.constant 0 : index
    %c0_8 = arith.constant 0 : index
    %20 = vector.load %arg4[%c0_7, %c0_8] : memref<1x32xf32, #tpu.memory_space<vmem>>, vector<1x32xf32>
    %21 = vector.broadcast %20 : vector<1x32xf32> to vector<32x32xf32>
    %22 = arith.addf %19, %21 : vector<32x32xf32>
    %23 = arith.truncf %22 : vector<32x32xf32> to vector<32x32xbf16>
    %c0_9 = arith.constant 0 : index
    %c0_10 = arith.constant 0 : index
    %24 = vector.load %arg5[%c0_9, %c0_10] : memref<32x128xf32, #tpu.memory_space<vmem>>, vector<32x128xf32>
    %25 = arith.truncf %24 : vector<32x128xf32> to vector<32x128xbf16>
    %cst_11 = arith.constant dense<0.000000e+00> : vector<32x128xf32>
    %26 = tpu.matmul %23, %25, %cst_11 {dimension_numbers = #tpu.dot_dimension_numbers<[1], [0], [0], [1], [0, 0, 1, 1], [], []>} : vector<32x32xbf16>, vector<32x128xbf16>, vector<32x128xf32> -> vector<32x128xf32>
    %c0_12 = arith.constant 0 : index
    %c0_13 = arith.constant 0 : index
    %27 = vector.load %arg6[%c0_12, %c0_13] : memref<1x128xf32, #tpu.memory_space<vmem>>, vector<1x128xf32>
    %28 = vector.broadcast %27 : vector<1x128xf32> to vector<32x128xf32>
    %29 = arith.addf %26, %28 : vector<32x128xf32>
    %c0_14 = arith.constant 0 : index
    %c0_15 = arith.constant 0 : index
    %30 = vector.load %arg7[%c0_14, %c0_15] : memref<32x128xf32, #tpu.memory_space<vmem>>, vector<32x128xf32>
    %31 = arith.truncf %30 : vector<32x128xf32> to vector<32x128xbf16>
    %cst_16 = arith.constant dense<0.000000e+00> : vector<32x128xf32>
    %32 = tpu.matmul %23, %31, %cst_16 {dimension_numbers = #tpu.dot_dimension_numbers<[1], [0], [0], [1], [0, 0, 1, 1], [], []>} : vector<32x32xbf16>, vector<32x128xbf16>, vector<32x128xf32> -> vector<32x128xf32>
    %c0_17 = arith.constant 0 : index
    %c0_18 = arith.constant 0 : index
    %33 = vector.load %arg8[%c0_17, %c0_18] : memref<1x128xf32, #tpu.memory_space<vmem>>, vector<1x128xf32>
    %34 = vector.broadcast %33 : vector<1x128xf32> to vector<32x128xf32>
    %35 = arith.addf %32, %34 : vector<32x128xf32>
    %cst_19 = arith.constant 5.000000e-01 : f32
    %36 = vector.broadcast %cst_19 : f32 to vector<32x128xf32>
    %37 = arith.mulf %36, %35 : vector<32x128xf32>
    %cst_20 = arith.constant 0.707106769 : f32
    %38 = vector.broadcast %cst_20 : f32 to vector<32x128xf32>
    %39 = arith.mulf %35, %38 : vector<32x128xf32>
    %40 = math.erf %39 : vector<32x128xf32>
    %cst_21 = arith.constant 1.000000e+00 : f32
    %41 = vector.broadcast %cst_21 : f32 to vector<32x128xf32>
    %42 = arith.addf %41, %40 : vector<32x128xf32>
    %43 = arith.mulf %37, %42 : vector<32x128xf32>
    %44 = arith.mulf %29, %43 : vector<32x128xf32>
    %c0_22 = arith.constant 0 : index
    %c0_23 = arith.constant 0 : index
    %45 = vector.load %arg9[%c0_22, %c0_23] : memref<32x128xf32, #tpu.memory_space<vmem>>, vector<32x128xf32>
    tpu.vector_store %arg9[%c0_22, %c0_23], %44 {strides = array<i32>} : memref<32x128xf32, #tpu.memory_space<vmem>>, vector<32x128xf32>,
    return
  }
  func.func @transform_0(%arg0: i32, %arg1: i32) -> (i32, i32) {
    %c0_i32 = arith.constant 0 : i32
    %c0_i32_0 = arith.constant 0 : i32
    return %arg0, %c0_i32 : i32, i32
  }
  func.func @transform_1(%arg0: i32, %arg1: i32) -> (i32, i32) {
    %c0_i32 = arith.constant 0 : i32
    %c0_i32_0 = arith.constant 0 : i32
    %c0_i32_1 = arith.constant 0 : i32
    return %c0_i32, %c0_i32_0 : i32, i32
  }
  func.func @transform_2(%arg0: i32, %arg1: i32) -> (i32, i32) {
    %c0_i32 = arith.constant 0 : i32
    %c0_i32_0 = arith.constant 0 : i32
    %c0_i32_1 = arith.constant 0 : i32
    return %c0_i32, %c0_i32_0 : i32, i32
  }
  func.func @transform_3(%arg0: i32, %arg1: i32) -> (i32, i32) {
    %c0_i32 = arith.constant 0 : i32
    %c0_i32_0 = arith.constant 0 : i32
    return %c0_i32, %arg1 : i32, i32
  }
  func.func @transform_4(%arg0: i32, %arg1: i32) -> (i32, i32) {
    %c0_i32 = arith.constant 0 : i32
    %c0_i32_0 = arith.constant 0 : i32
    return %c0_i32, %arg1 : i32, i32
  }
  func.func @transform_5(%arg0: i32, %arg1: i32) -> (i32, i32) {
    %c0_i32 = arith.constant 0 : i32
    %c0_i32_0 = arith.constant 0 : i32
    return %c0_i32, %arg1 : i32, i32
  }
  func.func @transform_6(%arg0: i32, %arg1: i32) -> (i32, i32) {
    %c0_i32 = arith.constant 0 : i32
    %c0_i32_0 = arith.constant 0 : i32
    return %c0_i32, %arg1 : i32, i32
  }
  func.func @transform_7(%arg0: i32, %arg1: i32) -> (i32, i32) {
    %c0_i32 = arith.constant 0 : i32
    return %arg0, %arg1 : i32, i32
  }
}

</mosaic_0001>

<llo_original>
// kernel: basic_transformer_block.9
$region0: #{basic_transformer_block.9}
  #allocation0 [shape = 'u32[]', space=smem, size = 0x4, offset = 0x4, fixed_abs, tag = 'smem constant byte address 0x4 - core index']
  #allocation1 [shape = 'u32[144,128]{1,0:T(1,128)}', space=vmem, size = 0x12000, scoped, tag = 'internal scratch']
  %s0 = inlined_call_operand.vmem [shape: f32[32,32], index: 0, kind: input, shape index: {}]
  %s1 = inlined_call_operand.vmem [shape: f32[1,32], index: 1, kind: input, shape index: {}]
  %s2 = inlined_call_operand.vmem [shape: f32[1,32], index: 2, kind: input, shape index: {}]
  %s3 = inlined_call_operand.hbm [shape: f32[32,96], index: 3, kind: input, shape index: {}]
  %s4 = inlined_call_operand.vmem [shape: f32[32,96], index: 4, kind: output, shape index: {}]
  %s5 = sld [smem:[#allocation0]]
  $region30: #{basic_transformer_block.9} parent=0
    _
  %s7 = ssub.s32 1, %s5
  %s8 = scalar_select 0, %s7, %s5
  $region1: #{basic_transformer_block.9} parent=0
    #allocation2 [shape = 'u8[16384]{0}', space=vmem, size = 0x4000, scoped, tag = 'input window, operand 3, single buffered']
    #allocation3 [shape = 's32[1]{0}', space=sflag, size = 0x4, scoped, tag = 'scoped memory for basic_transformer_block.9']
    %9 = vsyncpa [#allocation3], 0
    // Predicated region
    $region2: #{basic_transformer_block.9} parent=1 // pred_check
      _
    $region3: #{basic_transformer_block.9} parent=1 // pred_check_branch
      %11 = sbr.rel (0) target = $region5
    $region4: #{basic_transformer_block.9} parent=1 // pred_region
      _
    $region5: #{basic_transformer_block.9} parent=1 // pred_fallthru
      _
    // Predicated region
    $region6: #{basic_transformer_block.9} parent=1 // pred_check
      _
    $region7: #{basic_transformer_block.9} parent=1 // pred_check_branch
      %13 = sbr.rel (0) target = $region9
    $region8: #{basic_transformer_block.9} parent=1 // pred_region
      _
    $region9: #{basic_transformer_block.9} parent=1 // pred_fallthru
      _
    // Predicated region
    $region10: #{basic_transformer_block.9} parent=1 // pred_check
      _
    $region11: #{basic_transformer_block.9} parent=1 // pred_check_branch
      %15 = sbr.rel (0) target = $region13
    $region12: #{basic_transformer_block.9} parent=1 // pred_region
      _
    $region13: #{basic_transformer_block.9} parent=1 // pred_fallthru
      _
    // Predicated region
    $region14: #{basic_transformer_block.9} parent=1 // pred_check
      _
    $region15: #{basic_transformer_block.9} parent=1 // pred_check_branch
      %17 = sbr.rel (0) target = $region17
    $region16: #{basic_transformer_block.9} parent=1 // pred_region
      %s19 = ssub.s32 512, 512
      %20 = vsyncadd [#allocation3], %s19
      %s21 = sshll.u32 [#allocation2], 4
      %s22 = int_to_ptr.vmem [resolvable:$true] %s21
      %27 = dma.hbm_to_vmem [thread:$0]  %s3, 512, %s22, [#allocation3], 128, 128, 8
    $region17: #{basic_transformer_block.9} parent=1 // pred_fallthru
      _
    // Predicated region
    $region18: #{basic_transformer_block.9} parent=1 // pred_check
      _
    $region19: #{basic_transformer_block.9} parent=1 // pred_check_branch
      %29 = sbr.rel (0) target = $region21
    $region20: #{basic_transformer_block.9} parent=1 // pred_region
      %30 = dma.done [#allocation3], 512
    $region21: #{basic_transformer_block.9} parent=1 // pred_fallthru
      _
    %v32 = vld [vmem:[%s0] sm:$0xff]
    %v33 = vld [vmem:[%s0 + $0x8] sm:$0xff]
    %v34 = vld [vmem:[%s0 + $0x10] sm:$0xff]
    %v35 = vld [vmem:[%s0 + $0x18] sm:$0xff]
    %vm36 = vcmask 261120
    %v37 = vsel %vm36, %v32, 0.0
    %38 = vadd.xlane.f32.xlu0 %v37
    %v39 = vpop.xlane.xlu0 %38
    %v40 = vsel %vm36, %v33, 0.0
    %41 = vadd.xlane.f32.xlu0 %v40
    %v42 = vpop.xlane.xlu0 %41
    %v43 = vsel %vm36, %v34, 0.0
    %44 = vadd.xlane.f32.xlu0 %v43
    %v45 = vpop.xlane.xlu0 %44
    %v46 = vsel %vm36, %v35, 0.0
    %47 = vadd.xlane.f32.xlu0 %v46
    %v48 = vpop.xlane.xlu0 %47
    %v49 = vrcp.pop 32.0
    %v50 = vmul.f32 %v39, %v49
    %v51 = vmul.f32 %v42, %v49
    %v52 = vmul.f32 %v45, %v49
    %v53 = vmul.f32 %v48, %v49
    %v54 = vsub.f32 %v32, %v50
    %v55 = vsub.f32 %v33, %v51
    %v56 = vsub.f32 %v34, %v52
    %v57 = vsub.f32 %v35, %v53
    %v58 = vmul.f32 %v54, %v54
    %v59 = vmul.f32 %v55, %v55
    %v60 = vmul.f32 %v56, %v56
    %v61 = vmul.f32 %v57, %v57
    %v62 = vsel %vm36, %v58, 0.0
    %63 = vadd.xlane.f32.xlu0 %v62
    %v64 = vpop.xlane.xlu0 %63
    %v65 = vsel %vm36, %v59, 0.0
    %66 = vadd.xlane.f32.xlu0 %v65
    %v67 = vpop.xlane.xlu0 %66
    %v68 = vsel %vm36, %v60, 0.0
    %69 = vadd.xlane.f32.xlu0 %v68
    %v70 = vpop.xlane.xlu0 %69
    %v71 = vsel %vm36, %v61, 0.0
    %72 = vadd.xlane.f32.xlu0 %v71
    %v73 = vpop.xlane.xlu0 %72
    %v74 = vmul.f32 %v64, %v49
    %v75 = vmul.f32 %v67, %v49
    %v76 = vmul.f32 %v70, %v49
    %v77 = vmul.f32 %v73, %v49
    %v78 = vadd.f32 %v74, 1e-05
    %v79 = vadd.f32 %v75, 1e-05
    %v80 = vadd.f32 %v76, 1e-05
    %v81 = vadd.f32 %v77, 1e-05
    %v82 = vrsqrt.pop %v78
    %v83 = vrsqrt.pop %v79
    %v84 = vrsqrt.pop %v80
    %v85 = vrsqrt.pop %v81
    %v86 = vmul.f32 %v54, %v82
    %v87 = vmul.f32 %v55, %v83
    %v88 = vmul.f32 %v56, %v84
    %v89 = vmul.f32 %v57, %v85
    %v90 = vld [vmem:[%s1] sm:$0x1]
    %v92 = vlaneseq
    %v93 = vshrl.u32 %v92, 7
    %v94 = vsub.s32 0, %v93
    %v95 = vrot.slane %v90, %v94
    %v97 = vmul.f32 %v86, %v95
    %v98 = vmul.f32 %v87, %v95
    %v99 = vmul.f32 %v88, %v95
    %v100 = vmul.f32 %v89, %v95
    %v101 = vld [vmem:[%s2] sm:$0x1]
    %v103 = vlaneseq
    %v104 = vshrl.u32 %v103, 7
    %v105 = vsub.s32 0, %v104
    %v106 = vrot.slane %v101, %v105
    %v108 = vadd.f32 %v97, %v106
    %v109 = vadd.f32 %v98, %v106
    %v110 = vadd.f32 %v99, %v106
    %v111 = vadd.f32 %v100, %v106
    %v112 = vpack.c.bf16 %v109, %v108
    %v113 = vpack.c.bf16 %v111, %v110
    %v114 = vld [vmem:[#allocation2] sm:$0xff]
    %v115 = vld [vmem:[#allocation2 + $0x8] sm:$0xff]
    %v116 = vld [vmem:[#allocation2 + $0x10] sm:$0xff]
    %v117 = vld [vmem:[#allocation2 + $0x18] sm:$0xff]
    %v118 = vpack.c.bf16 %v115, %v114
    %v119 = vpack.c.bf16 %v117, %v116
    %v121 = vsel %vm36, %v112, 0
    %v124 = vsel %vm36, %v113, 0
    %126 = vmatprep.subr.bf16.mxu0 0
    %127 = vmatpush1.bf16.msra.mxu0 0
    %128 = vmatprep.subr.bf16.mxu0 0
    %129 = vmatpush1.bf16.msra.mxu0 0
    %130 = vmatprep.subr.bf16.mxu0 0
    %131 = vmatpush1.bf16.msra.mxu0 0
    %132 = vmatprep.subr.bf16.mxu0 0
    %133 = vmatpush1.bf16.msra.mxu0 0
    %134 = vmatprep.subr.bf16.mxu0 0
    %135 = vmatpush1.bf16.msra.mxu0 0
    %136 = vmatprep.subr.bf16.mxu0 0
    %137 = vmatpush1.bf16.msra.mxu0 0
    %138 = vmatprep.subr.bf16.mxu0 0
    %139 = vmatpush1.bf16.msra.mxu0 %v119
    %140 = vmatprep.subr.bf16.mxu0 0
    %141 = vmatpush1.bf16.msra.mxu0 %v118
    %142 = vmatprep.subr.bf16.mxu0 0
    %143 = vmatpush2.bf16.msra.mxu0 0
    %144 = vmatprep.subr.bf16.mxu0 0
    %145 = vmatpush2.bf16.msra.mxu0 0
    %146 = vmatprep.subr.bf16.mxu0 0
    %147 = vmatpush2.bf16.msra.mxu0 0
    %148 = vmatprep.subr.bf16.mxu0 0
    %149 = vmatpush2.bf16.msra.mxu0 0
    %150 = vmatprep.subr.bf16.mxu0 0
    %151 = vmatpush2.bf16.msra.mxu0 0
    %152 = vmatprep.subr.bf16.mxu0 0
    %153 = vmatpush2.bf16.msra.mxu0 0
    %154 = vmatprep.subr.bf16.mxu0 0
    %155 = vmatpush2.bf16.msra.mxu0 0
    %156 = vmatprep.subr.bf16.mxu0 0
    %157 = vmatpush2.bf16.msra.mxu0 0
    %158 = vmatprep.mubr.bf16.mxu0 0
    %159 = vmatmul.mubr.bf16.gmra.mxu0 %v121
    %v160 = vpop.f32.mrf.mxu0
    %v161 = vadd.f32 0.0, %v160
    %v162 = vpop.f32.mrf.mxu0
    %v163 = vpop.f32.mrf.mxu0
    %v164 = vadd.f32 0.0, %v163
    %v165 = vpop.f32.mrf.mxu0
    %166 = vmatprep.mubr.bf16.mxu0 0
    %167 = vmatmul.mubr.bf16.gmra.mxu0 %v124
    %v168 = vpop.f32.mrf.mxu0
    %v169 = vadd.f32 0.0, %v168
    %v170 = vpop.f32.mrf.mxu0
    %v171 = vpop.f32.mrf.mxu0
    %v172 = vadd.f32 0.0, %v171
    %v173 = vpop.f32.mrf.mxu0
    %174 = vdwg.mxu0
    %vm175 = vcmask 785408
    %176 = vst.msk [vmem:[%s4] sm:$0xff] %vm175, %v161
    %177 = vst.msk [vmem:[%s4 + $0x8] sm:$0xff] %vm175, %v164
    %178 = vst.msk [vmem:[%s4 + $0x10] sm:$0xff] %vm175, %v169
    %179 = vst.msk [vmem:[%s4 + $0x18] sm:$0xff] %vm175, %v172
    // Predicated region
    $region22: #{basic_transformer_block.9} parent=1 // pred_check
      _
    $region23: #{basic_transformer_block.9} parent=1 // pred_check_branch
      %181 = sbr.rel (0) target = $region25
    $region24: #{basic_transformer_block.9} parent=1 // pred_region
      _
    $region25: #{basic_transformer_block.9} parent=1 // pred_fallthru
      _
    // Predicated region
    $region26: #{basic_transformer_block.9} parent=1 // pred_check
      _
    $region27: #{basic_transformer_block.9} parent=1 // pred_check_branch
      %183 = sbr.rel (0) target = $region29
    $region28: #{basic_transformer_block.9} parent=1 // pred_region
      _
    $region29: #{basic_transformer_block.9} parent=1 // pred_fallthru
      _
    %184 = vsyncpa [#allocation3], 1

// kernel: basic_transformer_block.11
$region0: #{basic_transformer_block.11}
  #allocation0 [shape = 'u32[]', space=smem, size = 0x4, offset = 0x4, fixed_abs, tag = 'smem constant byte address 0x4 - core index']
  #allocation1 [shape = 'u32[144,128]{1,0:T(1,128)}', space=vmem, size = 0x12000, scoped, tag = 'internal scratch']
  #allocation2 [shape = 'f32[16,32]{1,0:T(8,128)}', space=vmem, size = 0x2000, scoped, tag = 'scratch operand']
  %s0 = inlined_call_operand.vmem [shape: f32[2,4,16,8], index: 0, kind: input, shape index: {}]
  %s1 = inlined_call_operand.vmem [shape: f32[4,8,32], index: 1, kind: input, shape index: {}]
  %s2 = inlined_call_operand.vmem [shape: f32[1,32], index: 2, kind: input, shape index: {}]
  %s3 = inlined_call_operand.vmem [shape: f32[2,16,32], index: 3, kind: input, shape index: {}]
  %s4 = inlined_call_operand.vmem [shape: f32[2,16,32], index: 4, kind: output, shape index: {}]
  %s5 = sld [smem:[#allocation0]]
  $region57: #{basic_transformer_block.11} parent=0
    _
  %s7 = ssub.s32 1, %s5
  %s8 = scalar_select 0, %s7, %s5
  loop: start=0, step=1, limit=10
  $region2: #{basic_transformer_block.11} parent=0 // loop_pre_header
    _
  $region3: #{basic_transformer_block.11} parent=0 // loop_header
    %s10 = sphi 0, %s14
    %p11 = scmp.ge.s32.totalorder %s10, 10
    %s17 = sphi 0, %s43
    %s18 = sphi 0, %s39
    %s19 = sphi 0, %s35
    %s20 = sphi 0, %s31
    %s21 = sphi 0, %s17
    %s22 = sphi 0, %s18
    %s23 = sphi 0, %s19
    %s24 = sphi 0, %s20
    %s25 = sphi 0, %s21
    %s26 = sphi 0, %s22
    %s27 = sphi 0, %s23
    %s28 = sphi 0, %s24
    %s50 = sphi 0, %s52
    %s53 = sphi 0, %s50
    %s54 = sphi 0, %s53
    %s70 = sphi 0, %s54
    %s78 = sphi 0, %s80
    %s81 = sphi 0, %s78
    %s82 = sphi 0, %s81
    %s98 = sphi 0, %s82
    %s104 = sphi 0, %s106
    %s107 = sphi 0, %s104
    %s108 = sphi 0, %s107
    %s124 = sphi 0, %s108
    %s134 = sphi 0, %s136
    %s137 = sphi 0, %s134
    %s138 = sphi 0, %s137
    %s154 = sphi 0, %s138
    %s164 = sphi 0, %s166
    %s167 = sphi 0, %s164
    %s168 = sphi 0, %s167
    %s184 = sphi 0, %s168
  $region4: #{basic_transformer_block.11} parent=0 // loop_header_branch
    %13 = sbr.rel (%p11) target = $region8
  $region5: #{basic_transformer_block.11} parent=0 // loop_body
    %s15 = ssub.s32 %s10, 1
    %s16 = ssub.s32 %s10, 2
    %s29 = sadd.s32 1, %s20
    %p30 = scmp.ge.s32.totalorder %s29, 4
    %s31 = scalar_select %p30, 0, %s29
    %s32 = sadd.s32 1, %s19
    %s33 = scalar_select %p30, %s32, %s19
    %p34 = scmp.ge.s32.totalorder %s33, 1
    %s35 = scalar_select %p34, 0, %s33
    %s36 = sadd.s32 1, %s18
    %s37 = scalar_select %p34, %s36, %s18
    %p38 = scmp.ge.s32.totalorder %s37, 1
    %s39 = scalar_select %p38, 0, %s37
    %s40 = sadd.s32 1, %s17
    %s41 = scalar_select %p38, %s40, %s17
    %p42 = scmp.ge.s32.totalorder %s41, 2
    %s43 = scalar_select %p42, 0, %s41
    %s44 = ssub.s32 %s17, %s43
    %s45 = ssub.s32 %s20, %s31
    %s46 = sor.u32 %s44, %s45
    %s47 = ssub.s32 %s18, %s39
    %s48 = sor.u32 %s46, %s47
    %p49 = scmp.eq.s32.totalorder %s48, 0
    %s51 = sadd.s32 %s50, 1
    %s52 = scalar_select %p49, %s50, %s51
    %p55 = pneg %p49
    %p56 = scmp.eq.s32.totalorder %s10, 7
    %p57 = por %p55, %p56
    %p58 = scmp.ne.s32.totalorder %s50, %s53
    %p59 = scmp.eq.s32.totalorder %s10, 0
    %p60 = por %p58, %p59
    %p61 = scmp.ne.s32.totalorder %s50, %s53
    %p62 = scmp.eq.s32.totalorder %s15, 7
    %p63 = por %p61, %p62
    %p64 = scmp.ne.s32.totalorder %s53, %s54
    %p65 = scmp.eq.s32.totalorder %s15, 0
    %p66 = por %p64, %p65
    %p67 = scmp.ne.s32.totalorder %s53, %s54
    %p68 = scmp.eq.s32.totalorder %s16, 7
    %p69 = por %p67, %p68
    %p71 = scmp.ne.s32.totalorder %s54, %s70
    %p72 = scmp.eq.s32.totalorder %s16, 0
    %p73 = por %p71, %p72
    %s74 = ssub.s32 %s20, %s31
    %s75 = ssub.s32 %s19, %s35
    %s76 = sor.u32 %s74, %s75
    %p77 = scmp.eq.s32.totalorder %s76, 0
    %s79 = sadd.s32 %s78, 1
    %s80 = scalar_select %p77, %s78, %s79
    %p83 = pneg %p77
    %p84 = scmp.eq.s32.totalorder %s10, 7
    %p85 = por %p83, %p84
    %p86 = scmp.ne.s32.totalorder %s78, %s81
    %p87 = scmp.eq.s32.totalorder %s10, 0
    %p88 = por %p86, %p87
    %p89 = scmp.ne.s32.totalorder %s78, %s81
    %p90 = scmp.eq.s32.totalorder %s15, 7
    %p91 = por %p89, %p90
    %p92 = scmp.ne.s32.totalorder %s81, %s82
    %p93 = scmp.eq.s32.totalorder %s15, 0
    %p94 = por %p92, %p93
    %p95 = scmp.ne.s32.totalorder %s81, %s82
    %p96 = scmp.eq.s32.totalorder %s16, 7
    %p97 = por %p95, %p96
    %p99 = scmp.ne.s32.totalorder %s82, %s98
    %p100 = scmp.eq.s32.totalorder %s16, 0
    %p101 = por %p99, %p100
    %s102 = ssub.s32 %s19, %s35
    %p103 = scmp.eq.s32.totalorder %s102, 0
    %s105 = sadd.s32 %s104, 1
    %s106 = scalar_select %p103, %s104, %s105
    %p109 = pneg %p103
    %p110 = scmp.eq.s32.totalorder %s10, 7
    %p111 = por %p109, %p110
    %p112 = scmp.ne.s32.totalorder %s104, %s107
    %p113 = scmp.eq.s32.totalorder %s10, 0
    %p114 = por %p112, %p113
    %p115 = scmp.ne.s32.totalorder %s104, %s107
    %p116 = scmp.eq.s32.totalorder %s15, 7
    %p117 = por %p115, %p116
    %p118 = scmp.ne.s32.totalorder %s107, %s108
    %p119 = scmp.eq.s32.totalorder %s15, 0
    %p120 = por %p118, %p119
    %p121 = scmp.ne.s32.totalorder %s107, %s108
    %p122 = scmp.eq.s32.totalorder %s16, 7
    %p123 = por %p121, %p122
    %p125 = scmp.ne.s32.totalorder %s108, %s124
    %p126 = scmp.eq.s32.totalorder %s16, 0
    %p127 = por %p125, %p126
    %s128 = ssub.s32 %s17, %s43
    %s129 = ssub.s32 %s18, %s39
    %s130 = sor.u32 %s128, %s129
    %s131 = ssub.s32 %s19, %s35
    %s132 = sor.u32 %s130, %s131
    %p133 = scmp.eq.s32.totalorder %s132, 0
    %s135 = sadd.s32 %s134, 1
    %s136 = scalar_select %p133, %s134, %s135
    %p139 = pneg %p133
    %p140 = scmp.eq.s32.totalorder %s10, 7
    %p141 = por %p139, %p140
    %p142 = scmp.ne.s32.totalorder %s134, %s137
    %p143 = scmp.eq.s32.totalorder %s10, 0
    %p144 = por %p142, %p143
    %p145 = scmp.ne.s32.totalorder %s134, %s137
    %p146 = scmp.eq.s32.totalorder %s15, 7
    %p147 = por %p145, %p146
    %p148 = scmp.ne.s32.totalorder %s137, %s138
    %p149 = scmp.eq.s32.totalorder %s15, 0
    %p150 = por %p148, %p149
    %p151 = scmp.ne.s32.totalorder %s137, %s138
    %p152 = scmp.eq.s32.totalorder %s16, 7
    %p153 = por %p151, %p152
    %p155 = scmp.ne.s32.totalorder %s138, %s154
    %p156 = scmp.eq.s32.totalorder %s16, 0
    %p157 = por %p155, %p156
    %s158 = ssub.s32 %s17, %s43
    %s159 = ssub.s32 %s18, %s39
    %s160 = sor.u32 %s158, %s159
    %s161 = ssub.s32 %s19, %s35
    %s162 = sor.u32 %s160, %s161
    %p163 = scmp.eq.s32.totalorder %s162, 0
    %s165 = sadd.s32 %s164, 1
    %s166 = scalar_select %p163, %s164, %s165
    %p169 = pneg %p163
    %p170 = scmp.eq.s32.totalorder %s10, 7
    %p171 = por %p169, %p170
    %p172 = scmp.ne.s32.totalorder %s164, %s167
    %p173 = scmp.eq.s32.totalorder %s10, 0
    %p174 = por %p172, %p173
    %p175 = scmp.ne.s32.totalorder %s164, %s167
    %p176 = scmp.eq.s32.totalorder %s15, 7
    %p177 = por %p175, %p176
    %p178 = scmp.ne.s32.totalorder %s167, %s168
    %p179 = scmp.eq.s32.totalorder %s15, 0
    %p180 = por %p178, %p179
    %p181 = scmp.ne.s32.totalorder %s167, %s168
    %p182 = scmp.eq.s32.totalorder %s16, 7
    %p183 = por %p181, %p182
    %p185 = scmp.ne.s32.totalorder %s168, %s184
    %p186 = scmp.eq.s32.totalorder %s16, 0
    %p187 = por %p185, %p186
    %p188 = scmp.le.s32.totalorder 1, %s10
    %p189 = scmp.lt.s32.totalorder %s10, 9
    %p190 = pnand %p188, %p189
    %p191 = pneg %p190
    // Predicated region
    $region9: #{basic_transformer_block.11} parent=5 // pred_check
      _
    $region10: #{basic_transformer_block.11} parent=5 // pred_check_branch
      %193 = sbr.rel (%p190) target = $region12
    $region11: #{basic_transformer_block.11} parent=5 // pred_region
      %s194 = ssub.s32 %s10, 1
      // Predicated region
      $region13: #{basic_transformer_block.11} parent=11 // pred_check
        %p195 = pneg %p120
      $region14: #{basic_transformer_block.11} parent=11 // pred_check_branch
        %197 = sbr.rel (%p195) target = $region16
      $region15: #{basic_transformer_block.11} parent=11 // pred_region
        %p198 = scmp.lt.s32.totalorder %s23, 0
        %s199 = scalar_select %p198, %s23, 0
        %s200 = scalar_lea.vmem %s2, %s199
      $region16: #{basic_transformer_block.11} parent=11 // pred_fallthru
        _
    $region12: #{basic_transformer_block.11} parent=5 // pred_fallthru
      _
    %p201 = scmp.lt.s32.totalorder %s10, 8
    // Predicated region
    $region17: #{basic_transformer_block.11} parent=5 // pred_check
      %p202 = pneg %p201
    $region18: #{basic_transformer_block.11} parent=5 // pred_check_branch
      %204 = sbr.rel (%p202) target = $region20
    $region19: #{basic_transformer_block.11} parent=5 // pred_region
      // Predicated region
      $region21: #{basic_transformer_block.11} parent=19 // pred_check
        %p205 = pneg %p60
      $region22: #{basic_transformer_block.11} parent=19 // pred_check_branch
        %207 = sbr.rel (%p205) target = $region24
      $region23: #{basic_transformer_block.11} parent=19 // pred_region
        %s208 = smul.u32 2, %s18
        %p209 = scmp.lt.s32.totalorder %s17, 1
        %s210 = scalar_select %p209, %s17, 1
        %p211 = scmp.lt.s32.totalorder %s20, 3
        %s212 = scalar_select %p211, %s20, 3
        %p213 = scmp.lt.s32.totalorder %s208, 1
        %s214 = scalar_select %p213, %s208, 1
        %s215 = smul.addr %s212, 2
        %s216 = sadd.s32 %s214, %s215
        %s217 = smul.addr %s210, 8
        %s218 = sadd.s32 %s216, %s217
        %s219 = smul.addr %s218, 8
        %s220 = scalar_lea.vmem %s0, %s219
        %s221 = smul.u32 2, %s18
      $region24: #{basic_transformer_block.11} parent=19 // pred_fallthru
        _
      // Predicated region
      $region25: #{basic_transformer_block.11} parent=19 // pred_check
        %p222 = pneg %p88
      $region26: #{basic_transformer_block.11} parent=19 // pred_check_branch
        %224 = sbr.rel (%p222) target = $region28
      $region27: #{basic_transformer_block.11} parent=19 // pred_region
        %p225 = scmp.lt.s32.totalorder %s20, 3
        %s226 = scalar_select %p225, %s20, 3
        %p227 = scmp.lt.s32.totalorder %s19, 0
        %s228 = scalar_select %p227, %s19, 0
        %s229 = sadd.s32 %s228, %s226
        %s230 = smul.addr %s229, 8
        %s231 = scalar_lea.vmem %s1, %s230
      $region28: #{basic_transformer_block.11} parent=19 // pred_fallthru
        _
      // Predicated region
      $region29: #{basic_transformer_block.11} parent=19 // pred_check
        %p232 = pneg %p144
      $region30: #{basic_transformer_block.11} parent=19 // pred_check_branch
        %234 = sbr.rel (%p232) target = $region32
      $region31: #{basic_transformer_block.11} parent=19 // pred_region
        %s235 = smul.u32 2, %s18
        %p236 = scmp.lt.s32.totalorder %s17, 1
        %s237 = scalar_select %p236, %s17, 1
        %p238 = scmp.lt.s32.totalorder %s235, 1
        %s239 = scalar_select %p238, %s235, 1
        %p240 = scmp.lt.s32.totalorder %s19, 0
        %s241 = scalar_select %p240, %s19, 0
        %s242 = sadd.s32 %s241, %s239
        %s243 = smul.addr %s237, 2
        %s244 = sadd.s32 %s242, %s243
        %s245 = smul.addr %s244, 8
        %s246 = scalar_lea.vmem %s3, %s245
        %s247 = smul.u32 2, %s18
      $region32: #{basic_transformer_block.11} parent=19 // pred_fallthru
        _
    $region20: #{basic_transformer_block.11} parent=5 // pred_fallthru
      _
    %p248 = scmp.le.s32.totalorder 1, %s10
    %p249 = scmp.lt.s32.totalorder %s10, 9
    %p250 = pnand %p248, %p249
    %p251 = pneg %p250
    // Predicated region
    $region33: #{basic_transformer_block.11} parent=5 // pred_check
      _
    $region34: #{basic_transformer_block.11} parent=5 // pred_check_branch
      %253 = sbr.rel (%p250) target = $region36
    $region35: #{basic_transformer_block.11} parent=5 // pred_region
      %s254 = ssub.s32 %s10, 1
      %s255 = smul.u32 2, %s22
      %p256 = scmp.lt.s32.totalorder %s21, 1
      %s257 = scalar_select %p256, %s21, 1
      %p258 = scmp.lt.s32.totalorder %s24, 3
      %s259 = scalar_select %p258, %s24, 3
      %p260 = scmp.lt.s32.totalorder %s255, 1
      %s261 = scalar_select %p260, %s255, 1
      %s262 = smul.addr %s259, 2
      %s263 = sadd.s32 %s261, %s262
      %s264 = smul.addr %s257, 8
      %s265 = sadd.s32 %s263, %s264
      %s266 = smul.addr %s265, 8
      %s267 = scalar_lea.vmem %s0, %s266
      %p268 = pneg %p66
      %p269 = pneg %p63
      %p270 = scmp.lt.s32.totalorder %s24, 3
      %s271 = scalar_select %p270, %s24, 3
      %p272 = scmp.lt.s32.totalorder %s23, 0
      %s273 = scalar_select %p272, %s23, 0
      %s274 = sadd.s32 %s273, %s271
      %s275 = smul.addr %s274, 8
      %s276 = scalar_lea.vmem %s1, %s275
      %p277 = pneg %p94
      %p278 = pneg %p91
      %p279 = scmp.lt.s32.totalorder %s23, 0
      %s280 = scalar_select %p279, %s23, 0
      %s281 = scalar_lea.vmem %s2, %s280
      %p282 = pneg %p120
      %p283 = pneg %p117
      %s284 = smul.u32 2, %s22
      %p285 = scmp.lt.s32.totalorder %s21, 1
      %s286 = scalar_select %p285, %s21, 1
      %p287 = scmp.lt.s32.totalorder %s284, 1
      %s288 = scalar_select %p287, %s284, 1
      %p289 = scmp.lt.s32.totalorder %s23, 0
      %s290 = scalar_select %p289, %s23, 0
      %s291 = sadd.s32 %s290, %s288
      %s292 = smul.addr %s286, 2
      %s293 = sadd.s32 %s291, %s292
      %s294 = smul.addr %s293, 8
      %s295 = scalar_lea.vmem %s3, %s294
      %p296 = pneg %p150
      %p297 = pneg %p147
      %p298 = pneg %p180
      %p299 = pneg %p177
      %s300 = smul.u32 2, %s22
      %p301 = scmp.lt.s32.totalorder %s21, 1
      %s302 = scalar_select %p301, %s21, 1
      %p303 = scmp.lt.s32.totalorder %s300, 1
      %s304 = scalar_select %p303, %s300, 1
      %p305 = scmp.lt.s32.totalorder %s23, 0
      %s306 = scalar_select %p305, %s23, 0
      %s307 = sadd.s32 %s306, %s304
      %s308 = smul.addr %s302, 2
      %s309 = sadd.s32 %s307, %s308
      %s310 = smul.addr %s309, 8
      %s311 = scalar_lea.vmem %s4, %s310
      %s312 = smul.u32 2, %s22
      %p313 = scmp.lt.s32.totalorder %s21, 1
      %s314 = scalar_select %p313, %s21, 1
      %p315 = scmp.lt.s32.totalorder %s24, 3
      %s316 = scalar_select %p315, %s24, 3
      %p317 = scmp.lt.s32.totalorder %s312, 1
      %s318 = scalar_select %p317, %s312, 1
      %s319 = smul.addr %s316, 2
      %s320 = sadd.s32 %s318, %s319
      %s321 = smul.addr %s314, 8
      %s322 = sadd.s32 %s320, %s321
      %s323 = smul.addr %s322, 8
      %s324 = scalar_lea.vmem %s0, %s323
      %s325 = smul.u32 2, %s22
      %p326 = scmp.lt.s32.totalorder %s24, 3
      %s327 = scalar_select %p326, %s24, 3
      %p328 = scmp.lt.s32.totalorder %s23, 0
      %s329 = scalar_select %p328, %s23, 0
      %s330 = sadd.s32 %s329, %s327
      %s331 = smul.addr %s330, 8
      %s332 = scalar_lea.vmem %s1, %s331
      %p333 = scmp.lt.s32.totalorder %s23, 0
      %s334 = scalar_select %p333, %s23, 0
      %s335 = scalar_lea.vmem %s2, %s334
      %s336 = smul.u32 2, %s22
      %p337 = scmp.lt.s32.totalorder %s21, 1
      %s338 = scalar_select %p337, %s21, 1
      %p339 = scmp.lt.s32.totalorder %s336, 1
      %s340 = scalar_select %p339, %s336, 1
      %p341 = scmp.lt.s32.totalorder %s23, 0
      %s342 = scalar_select %p341, %s23, 0
      %s343 = sadd.s32 %s342, %s340
      %s344 = smul.addr %s338, 2
      %s345 = sadd.s32 %s343, %s344
      %s346 = smul.addr %s345, 8
      %s347 = scalar_lea.vmem %s3, %s346
      %s348 = smul.u32 2, %s22
      %s349 = smul.u32 2, %s22
      %p350 = scmp.lt.s32.totalorder %s21, 1
      %s351 = scalar_select %p350, %s21, 1
      %p352 = scmp.lt.s32.totalorder %s349, 1
      %s353 = scalar_select %p352, %s349, 1
      %p354 = scmp.lt.s32.totalorder %s23, 0
      %s355 = scalar_select %p354, %s23, 0
      %s356 = sadd.s32 %s355, %s353
      %s357 = smul.addr %s351, 2
      %s358 = sadd.s32 %s356, %s357
      %s359 = smul.addr %s358, 8
      %s360 = scalar_lea.vmem %s4, %s359
      %s361 = smul.u32 2, %s22
      %p363 = scmp.eq.s32.totalorder %s24, 0
      // Predicated region
      $region37: #{basic_transformer_block.11} parent=35 // pred_check
        %p364 = pneg %p363
      $region38: #{basic_transformer_block.11} parent=35 // pred_check_branch
        %366 = sbr.rel (%p364) target = $region40
      $region39: #{basic_transformer_block.11} parent=35 // pred_region
        %vm367 = vcmask 261120
        %368 = vst.msk [vmem:[#allocation2] sm:$0xff] %vm367, 0.0
        %369 = vst.msk [vmem:[#allocation2 + $0x8] sm:$0xff] %vm367, 0.0
      $region40: #{basic_transformer_block.11} parent=35 // pred_fallthru
        _
      %v370 = vld [vmem:[#allocation2] sm:$0xff]
      %v371 = vld [vmem:[#allocation2 + $0x8] sm:$0xff]
      %v372 = vld [vmem:[%s324] sm:$0xff]
      %v373 = vld [vmem:[%s324 + $0x8] sm:$0xff]
      %v374 = vpack.c.bf16 %v373, %v372
      %v375 = vld [vmem:[%s332] sm:$0xff]
      %v376 = vpack.c.bf16 %v375, %v375
      %vm377 = vcmask 64512
      %v379 = vsel %vm377, %v374, 0
      %vm381 = vcmask 1043456
      %v383 = vsel %vm381, %v376, 0
      %385 = vmatprep.subr.bf16.mxu0 0
      %386 = vmatpush1.bf16.msra.mxu0 0
      %387 = vmatprep.subr.bf16.mxu0 0
      %388 = vmatpush1.bf16.msra.mxu0 0
      %389 = vmatprep.subr.bf16.mxu0 0
      %390 = vmatpush1.bf16.msra.mxu0 0
      %391 = vmatprep.subr.bf16.mxu0 0
      %392 = vmatpush1.bf16.msra.mxu0 0
      %393 = vmatprep.subr.bf16.mxu0 0
      %394 = vmatpush1.bf16.msra.mxu0 0
      %395 = vmatprep.subr.bf16.mxu0 0
      %396 = vmatpush1.bf16.msra.mxu0 0
      %397 = vmatprep.subr.bf16.mxu0 0
      %398 = vmatpush1.bf16.msra.mxu0 0
      %399 = vmatprep.subr.bf16.mxu0 0
      %400 = vmatpush1.bf16.msra.mxu0 %v383
      %401 = vmatprep.subr.bf16.mxu0 0
      %402 = vmatpush2.bf16.msra.mxu0 0
      %403 = vmatprep.subr.bf16.mxu0 0
      %404 = vmatpush2.bf16.msra.mxu0 0
      %405 = vmatprep.subr.bf16.mxu0 0
      %406 = vmatpush2.bf16.msra.mxu0 0
      %407 = vmatprep.subr.bf16.mxu0 0
      %408 = vmatpush2.bf16.msra.mxu0 0
      %409 = vmatprep.subr.bf16.mxu0 0
      %410 = vmatpush2.bf16.msra.mxu0 0
      %411 = vmatprep.subr.bf16.mxu0 0
      %412 = vmatpush2.bf16.msra.mxu0 0
      %413 = vmatprep.subr.bf16.mxu0 0
      %414 = vmatpush2.bf16.msra.mxu0 0
      %415 = vmatprep.subr.bf16.mxu0 0
      %416 = vmatpush2.bf16.msra.mxu0 0
      %417 = vmatprep.mubr.bf16.mxu0 0
      %418 = vmatmul.mubr.bf16.gmra.mxu0 %v379
      %v419 = vpop.f32.mrf.mxu0
      %v420 = vadd.f32 0.0, %v419
      %v421 = vpop.f32.mrf.mxu0
      %v422 = vpop.f32.mrf.mxu0
      %v423 = vadd.f32 0.0, %v422
      %v424 = vpop.f32.mrf.mxu0
      %425 = vdwg.mxu0
      %v426 = vadd.f32 %v370, %v420
      %v427 = vadd.f32 %v371, %v423
      %vm428 = vcmask 261120
      %429 = vst.msk [vmem:[#allocation2] sm:$0xff] %vm428, %v426
      %430 = vst.msk [vmem:[#allocation2 + $0x8] sm:$0xff] %vm428, %v427
      %p431 = scmp.eq.s32.totalorder %s24, 3
      // Predicated region
      $region41: #{basic_transformer_block.11} parent=35 // pred_check
        %p432 = pneg %p431
      $region42: #{basic_transformer_block.11} parent=35 // pred_check_branch
        %434 = sbr.rel (%p432) target = $region44
      $region43: #{basic_transformer_block.11} parent=35 // pred_region
        %v435 = vld [vmem:[#allocation2] sm:$0xff]
        %v436 = vld [vmem:[#allocation2 + $0x8] sm:$0xff]
        %v437 = vld [vmem:[%s335] sm:$0x1]
        %v439 = vlaneseq
        %v440 = vshrl.u32 %v439, 7
        %v441 = vsub.s32 0, %v440
        %v442 = vrot.slane %v437, %v441
        %v444 = vadd.f32 %v435, %v442
        %v445 = vadd.f32 %v436, %v442
        %v446 = vld [vmem:[%s347] sm:$0xff]
        %v447 = vld [vmem:[%s347 + $0x8] sm:$0xff]
        %v448 = vadd.f32 %v444, %v446
        %v449 = vadd.f32 %v445, %v447
        %450 = vst.msk [vmem:[%s360] sm:$0xff] %vm428, %v448
        %451 = vst.msk [vmem:[%s360 + $0x8] sm:$0xff] %vm428, %v449
      $region44: #{basic_transformer_block.11} parent=35 // pred_fallthru
        _
      %s452 = smul.u32 2, %s22
      %p453 = scmp.lt.s32.totalorder %s21, 1
      %s454 = scalar_select %p453, %s21, 1
      %p455 = scmp.lt.s32.totalorder %s452, 1
      %s456 = scalar_select %p455, %s452, 1
      %p457 = scmp.lt.s32.totalorder %s23, 0
      %s458 = scalar_select %p457, %s23, 0
      %s459 = sadd.s32 %s458, %s456
      %s460 = smul.addr %s454, 2
      %s461 = sadd.s32 %s459, %s460
      %s462 = smul.addr %s461, 8
      %s463 = scalar_lea.vmem %s4, %s462
      // Predicated region
      $region45: #{basic_transformer_block.11} parent=35 // pred_check
        %p464 = pneg %p177
      $region46: #{basic_transformer_block.11} parent=35 // pred_check_branch
        %466 = sbr.rel (%p464) target = $region48
      $region47: #{basic_transformer_block.11} parent=35 // pred_region
        %s467 = smul.u32 2, %s22
      $region48: #{basic_transformer_block.11} parent=35 // pred_fallthru
        _
    $region36: #{basic_transformer_block.11} parent=5 // pred_fallthru
      _
    %p468 = scmp.le.s32.totalorder 2, %s10
    // Predicated region
    $region49: #{basic_transformer_block.11} parent=5 // pred_check
      %p469 = pneg %p468
    $region50: #{basic_transformer_block.11} parent=5 // pred_check_branch
      %471 = sbr.rel (%p469) target = $region52
    $region51: #{basic_transformer_block.11} parent=5 // pred_region
      %s472 = ssub.s32 %s10, 2
      // Predicated region
      $region53: #{basic_transformer_block.11} parent=51 // pred_check
        %p473 = pneg %p183
      $region54: #{basic_transformer_block.11} parent=51 // pred_check_branch
        %475 = sbr.rel (%p473) target = $region56
      $region55: #{basic_transformer_block.11} parent=51 // pred_region
        %s476 = smul.u32 2, %s26
        %p477 = scmp.lt.s32.totalorder %s25, 1
        %s478 = scalar_select %p477, %s25, 1
        %p479 = scmp.lt.s32.totalorder %s476, 1
        %s480 = scalar_select %p479, %s476, 1
        %p481 = scmp.lt.s32.totalorder %s27, 0
        %s482 = scalar_select %p481, %s27, 0
        %s483 = sadd.s32 %s482, %s480
        %s484 = smul.addr %s478, 2
        %s485 = sadd.s32 %s483, %s484
        %s486 = smul.addr %s485, 8
        %s487 = scalar_lea.vmem %s4, %s486
      $region56: #{basic_transformer_block.11} parent=51 // pred_fallthru
        _
    $region52: #{basic_transformer_block.11} parent=5 // pred_fallthru
      _
  $region6: #{basic_transformer_block.11} parent=0 // loop_footer
    %s14 = sadd.s32 1, %s10
  $region7: #{basic_transformer_block.11} parent=0 // loop_footer_branch
    %9 = sbr.rel target = $region3
  $region8: #{basic_transformer_block.11} parent=0 // loop_exit
    _

// kernel: basic_transformer_block.12
$region0: #{basic_transformer_block.12}
  #allocation0 [shape = 'u32[]', space=smem, size = 0x4, offset = 0x4, fixed_abs, tag = 'smem constant byte address 0x4 - core index']
  #allocation1 [shape = 'u32[144,128]{1,0:T(1,128)}', space=vmem, size = 0x12000, scoped, tag = 'internal scratch']
  %s0 = inlined_call_operand.vmem [shape: f32[32,32], index: 0, kind: input, shape index: {}]
  %s1 = inlined_call_operand.vmem [shape: f32[1,32], index: 1, kind: input, shape index: {}]
  %s2 = inlined_call_operand.vmem [shape: f32[1,32], index: 2, kind: input, shape index: {}]
  %s3 = inlined_call_operand.vmem [shape: f32[32,32], index: 3, kind: input, shape index: {}]
  %s4 = inlined_call_operand.vmem [shape: f32[32,32], index: 4, kind: output, shape index: {}]
  %s5 = sld [smem:[#allocation0]]
  $region26: #{basic_transformer_block.12} parent=0
    _
  %s7 = ssub.s32 1, %s5
  %s8 = scalar_select 0, %s7, %s5
  // Predicated region
  $region2: #{basic_transformer_block.12} parent=0 // pred_check
    _
  $region3: #{basic_transformer_block.12} parent=0 // pred_check_branch
    %10 = sbr.rel (0) target = $region5
  $region4: #{basic_transformer_block.12} parent=0 // pred_region
    _
  $region5: #{basic_transformer_block.12} parent=0 // pred_fallthru
    _
  // Predicated region
  $region6: #{basic_transformer_block.12} parent=0 // pred_check
    _
  $region7: #{basic_transformer_block.12} parent=0 // pred_check_branch
    %12 = sbr.rel (0) target = $region9
  $region8: #{basic_transformer_block.12} parent=0 // pred_region
    _
  $region9: #{basic_transformer_block.12} parent=0 // pred_fallthru
    _
  // Predicated region
  $region10: #{basic_transformer_block.12} parent=0 // pred_check
    _
  $region11: #{basic_transformer_block.12} parent=0 // pred_check_branch
    %14 = sbr.rel (0) target = $region13
  $region12: #{basic_transformer_block.12} parent=0 // pred_region
    _
  $region13: #{basic_transformer_block.12} parent=0 // pred_fallthru
    _
  // Predicated region
  $region14: #{basic_transformer_block.12} parent=0 // pred_check
    _
  $region15: #{basic_transformer_block.12} parent=0 // pred_check_branch
    %16 = sbr.rel (0) target = $region17
  $region16: #{basic_transformer_block.12} parent=0 // pred_region
    _
  $region17: #{basic_transformer_block.12} parent=0 // pred_fallthru
    _
  %v18 = vld [vmem:[%s0] sm:$0xff]
  %v19 = vld [vmem:[%s0 + $0x8] sm:$0xff]
  %v20 = vld [vmem:[%s0 + $0x10] sm:$0xff]
  %v21 = vld [vmem:[%s0 + $0x18] sm:$0xff]
  %vm22 = vcmask 261120
  %v23 = vsel %vm22, %v18, 0.0
  %24 = vadd.xlane.f32.xlu0 %v23
  %v25 = vpop.xlane.xlu0 %24
  %v26 = vsel %vm22, %v19, 0.0
  %27 = vadd.xlane.f32.xlu0 %v26
  %v28 = vpop.xlane.xlu0 %27
  %v29 = vsel %vm22, %v20, 0.0
  %30 = vadd.xlane.f32.xlu0 %v29
  %v31 = vpop.xlane.xlu0 %30
  %v32 = vsel %vm22, %v21, 0.0
  %33 = vadd.xlane.f32.xlu0 %v32
  %v34 = vpop.xlane.xlu0 %33
  %v35 = vrcp.pop 32.0
  %v36 = vmul.f32 %v25, %v35
  %v37 = vmul.f32 %v28, %v35
  %v38 = vmul.f32 %v31, %v35
  %v39 = vmul.f32 %v34, %v35
  %v40 = vsub.f32 %v18, %v36
  %v41 = vsub.f32 %v19, %v37
  %v42 = vsub.f32 %v20, %v38
  %v43 = vsub.f32 %v21, %v39
  %v44 = vmul.f32 %v40, %v40
  %v45 = vmul.f32 %v41, %v41
  %v46 = vmul.f32 %v42, %v42
  %v47 = vmul.f32 %v43, %v43
  %v48 = vsel %vm22, %v44, 0.0
  %49 = vadd.xlane.f32.xlu0 %v48
  %v50 = vpop.xlane.xlu0 %49
  %v51 = vsel %vm22, %v45, 0.0
  %52 = vadd.xlane.f32.xlu0 %v51
  %v53 = vpop.xlane.xlu0 %52
  %v54 = vsel %vm22, %v46, 0.0
  %55 = vadd.xlane.f32.xlu0 %v54
  %v56 = vpop.xlane.xlu0 %55
  %v57 = vsel %vm22, %v47, 0.0
  %58 = vadd.xlane.f32.xlu0 %v57
  %v59 = vpop.xlane.xlu0 %58
  %v60 = vmul.f32 %v50, %v35
  %v61 = vmul.f32 %v53, %v35
  %v62 = vmul.f32 %v56, %v35
  %v63 = vmul.f32 %v59, %v35
  %v64 = vadd.f32 %v60, 1e-05
  %v65 = vadd.f32 %v61, 1e-05
  %v66 = vadd.f32 %v62, 1e-05
  %v67 = vadd.f32 %v63, 1e-05
  %v68 = vrsqrt.pop %v64
  %v69 = vrsqrt.pop %v65
  %v70 = vrsqrt.pop %v66
  %v71 = vrsqrt.pop %v67
  %v72 = vmul.f32 %v40, %v68
  %v73 = vmul.f32 %v41, %v69
  %v74 = vmul.f32 %v42, %v70
  %v75 = vmul.f32 %v43, %v71
  %v76 = vld [vmem:[%s1] sm:$0x1]
  %v78 = vlaneseq
  %v79 = vshrl.u32 %v78, 7
  %v80 = vsub.s32 0, %v79
  %v81 = vrot.slane %v76, %v80
  %v83 = vmul.f32 %v72, %v81
  %v84 = vmul.f32 %v73, %v81
  %v85 = vmul.f32 %v74, %v81
  %v86 = vmul.f32 %v75, %v81
  %v87 = vld [vmem:[%s2] sm:$0x1]
  %v89 = vlaneseq
  %v90 = vshrl.u32 %v89, 7
  %v91 = vsub.s32 0, %v90
  %v92 = vrot.slane %v87, %v91
  %v94 = vadd.f32 %v83, %v92
  %v95 = vadd.f32 %v84, %v92
  %v96 = vadd.f32 %v85, %v92
  %v97 = vadd.f32 %v86, %v92
  %v98 = vpack.c.bf16 %v95, %v94
  %v99 = vpack.c.bf16 %v97, %v96
  %v100 = vld [vmem:[%s3] sm:$0xff]
  %v101 = vld [vmem:[%s3 + $0x8] sm:$0xff]
  %v102 = vld [vmem:[%s3 + $0x10] sm:$0xff]
  %v103 = vld [vmem:[%s3 + $0x18] sm:$0xff]
  %v104 = vpack.c.bf16 %v101, %v100
  %v105 = vpack.c.bf16 %v103, %v102
  %v107 = vsel %vm22, %v98, 0
  %v110 = vsel %vm22, %v99, 0
  %112 = vmatprep.subr.bf16.mxu0 0
  %113 = vmatpush1.bf16.msra.mxu0 0
  %114 = vmatprep.subr.bf16.mxu0 0
  %115 = vmatpush1.bf16.msra.mxu0 0
  %116 = vmatprep.subr.bf16.mxu0 0
  %117 = vmatpush1.bf16.msra.mxu0 0
  %118 = vmatprep.subr.bf16.mxu0 0
  %119 = vmatpush1.bf16.msra.mxu0 0
  %120 = vmatprep.subr.bf16.mxu0 0
  %121 = vmatpush1.bf16.msra.mxu0 0
  %122 = vmatprep.subr.bf16.mxu0 0
  %123 = vmatpush1.bf16.msra.mxu0 0
  %124 = vmatprep.subr.bf16.mxu0 0
  %125 = vmatpush1.bf16.msra.mxu0 %v105
  %126 = vmatprep.subr.bf16.mxu0 0
  %127 = vmatpush1.bf16.msra.mxu0 %v104
  %128 = vmatprep.subr.bf16.mxu0 0
  %129 = vmatpush2.bf16.msra.mxu0 0
  %130 = vmatprep.subr.bf16.mxu0 0
  %131 = vmatpush2.bf16.msra.mxu0 0
  %132 = vmatprep.subr.bf16.mxu0 0
  %133 = vmatpush2.bf16.msra.mxu0 0
  %134 = vmatprep.subr.bf16.mxu0 0
  %135 = vmatpush2.bf16.msra.mxu0 0
  %136 = vmatprep.subr.bf16.mxu0 0
  %137 = vmatpush2.bf16.msra.mxu0 0
  %138 = vmatprep.subr.bf16.mxu0 0
  %139 = vmatpush2.bf16.msra.mxu0 0
  %140 = vmatprep.subr.bf16.mxu0 0
  %141 = vmatpush2.bf16.msra.mxu0 0
  %142 = vmatprep.subr.bf16.mxu0 0
  %143 = vmatpush2.bf16.msra.mxu0 0
  %144 = vmatprep.mubr.bf16.mxu0 0
  %145 = vmatmul.mubr.bf16.gmra.mxu0 %v107
  %v146 = vpop.f32.mrf.mxu0
  %v147 = vadd.f32 0.0, %v146
  %v148 = vpop.f32.mrf.mxu0
  %v149 = vpop.f32.mrf.mxu0
  %v150 = vadd.f32 0.0, %v149
  %v151 = vpop.f32.mrf.mxu0
  %152 = vmatprep.mubr.bf16.mxu0 0
  %153 = vmatmul.mubr.bf16.gmra.mxu0 %v110
  %v154 = vpop.f32.mrf.mxu0
  %v155 = vadd.f32 0.0, %v154
  %v156 = vpop.f32.mrf.mxu0
  %v157 = vpop.f32.mrf.mxu0
  %v158 = vadd.f32 0.0, %v157
  %v159 = vpop.f32.mrf.mxu0
  %160 = vdwg.mxu0
  %161 = vst.msk [vmem:[%s4] sm:$0xff] %vm22, %v147
  %162 = vst.msk [vmem:[%s4 + $0x8] sm:$0xff] %vm22, %v150
  %163 = vst.msk [vmem:[%s4 + $0x10] sm:$0xff] %vm22, %v155
  %164 = vst.msk [vmem:[%s4 + $0x18] sm:$0xff] %vm22, %v158
  // Predicated region
  $region18: #{basic_transformer_block.12} parent=0 // pred_check
    _
  $region19: #{basic_transformer_block.12} parent=0 // pred_check_branch
    %166 = sbr.rel (0) target = $region21
  $region20: #{basic_transformer_block.12} parent=0 // pred_region
    _
  $region21: #{basic_transformer_block.12} parent=0 // pred_fallthru
    _
  // Predicated region
  $region22: #{basic_transformer_block.12} parent=0 // pred_check
    _
  $region23: #{basic_transformer_block.12} parent=0 // pred_check_branch
    %168 = sbr.rel (0) target = $region25
  $region24: #{basic_transformer_block.12} parent=0 // pred_region
    _
  $region25: #{basic_transformer_block.12} parent=0 // pred_fallthru
    _

// kernel: basic_transformer_block.10
$region0: #{basic_transformer_block.10}
  #allocation0 [shape = 'u32[]', space=smem, size = 0x4, offset = 0x4, fixed_abs, tag = 'smem constant byte address 0x4 - core index']
  #allocation1 [shape = 'u32[144,128]{1,0:T(1,128)}', space=vmem, size = 0x12000, scoped, tag = 'internal scratch']
  #allocation2 [shape = 'f32[16,1]{1,0:T(8,128)}', space=vmem, size = 0x2000, scoped, tag = 'scratch operand']
  #allocation3 [shape = 'f32[16,1]{1,0:T(8,128)}', space=vmem, size = 0x2000, scoped, tag = 'scratch operand']
  #allocation4 [shape = 'f32[16,8]{1,0:T(8,128)}', space=vmem, size = 0x2000, scoped, tag = 'scratch operand']
  %s0 = inlined_call_operand.vmem [shape: f32[8,16,8], index: 0, kind: input, shape index: {}]
  %s1 = inlined_call_operand.vmem [shape: f32[8,16,8], index: 1, kind: input, shape index: {}]
  %s2 = inlined_call_operand.vmem [shape: f32[8,16,8], index: 2, kind: input, shape index: {}]
  %s3 = inlined_call_operand.vmem [shape: f32[8,16,8], index: 3, kind: output, shape index: {}]
  %s4 = sld [smem:[#allocation0]]
  $region53: #{basic_transformer_block.10} parent=0
    _
  %s6 = ssub.s32 1, %s4
  %s7 = scalar_select 0, %s6, %s4
  loop: start=0, step=1, limit=10
  $region2: #{basic_transformer_block.10} parent=0 // loop_pre_header
    _
  $region3: #{basic_transformer_block.10} parent=0 // loop_header
    %s9 = sphi 0, %s13
    %p10 = scmp.ge.s32.totalorder %s9, 10
    %s16 = sphi 0, %s35
    %s17 = sphi 0, %s31
    %s18 = sphi 0, %s27
    %s19 = sphi 0, %s16
    %s20 = sphi 0, %s17
    %s21 = sphi 0, %s18
    %s22 = sphi 0, %s19
    %s23 = sphi 0, %s20
    %s24 = sphi 0, %s21
    %s40 = sphi 0, %s42
    %s43 = sphi 0, %s40
    %s44 = sphi 0, %s43
    %s60 = sphi 0, %s44
    %s68 = sphi 0, %s70
    %s71 = sphi 0, %s68
    %s72 = sphi 0, %s71
    %s88 = sphi 0, %s72
    %s96 = sphi 0, %s98
    %s99 = sphi 0, %s96
    %s100 = sphi 0, %s99
    %s116 = sphi 0, %s100
    %s124 = sphi 0, %s126
    %s127 = sphi 0, %s124
    %s128 = sphi 0, %s127
    %s144 = sphi 0, %s128
  $region4: #{basic_transformer_block.10} parent=0 // loop_header_branch
    %12 = sbr.rel (%p10) target = $region8
  $region5: #{basic_transformer_block.10} parent=0 // loop_body
    %s14 = ssub.s32 %s9, 1
    %s15 = ssub.s32 %s9, 2
    %s25 = sadd.s32 1, %s18
    %p26 = scmp.ge.s32.totalorder %s25, 1
    %s27 = scalar_select %p26, 0, %s25
    %s28 = sadd.s32 1, %s17
    %s29 = scalar_select %p26, %s28, %s17
    %p30 = scmp.ge.s32.totalorder %s29, 1
    %s31 = scalar_select %p30, 0, %s29
    %s32 = sadd.s32 1, %s16
    %s33 = scalar_select %p30, %s32, %s16
    %p34 = scmp.ge.s32.totalorder %s33, 8
    %s35 = scalar_select %p34, 0, %s33
    %s36 = ssub.s32 %s16, %s35
    %s37 = ssub.s32 %s17, %s31
    %s38 = sor.u32 %s36, %s37
    %p39 = scmp.eq.s32.totalorder %s38, 0
    %s41 = sadd.s32 %s40, 1
    %s42 = scalar_select %p39, %s40, %s41
    %p45 = pneg %p39
    %p46 = scmp.eq.s32.totalorder %s9, 7
    %p47 = por %p45, %p46
    %p48 = scmp.ne.s32.totalorder %s40, %s43
    %p49 = scmp.eq.s32.totalorder %s9, 0
    %p50 = por %p48, %p49
    %p51 = scmp.ne.s32.totalorder %s40, %s43
    %p52 = scmp.eq.s32.totalorder %s14, 7
    %p53 = por %p51, %p52
    %p54 = scmp.ne.s32.totalorder %s43, %s44
    %p55 = scmp.eq.s32.totalorder %s14, 0
    %p56 = por %p54, %p55
    %p57 = scmp.ne.s32.totalorder %s43, %s44
    %p58 = scmp.eq.s32.totalorder %s15, 7
    %p59 = por %p57, %p58
    %p61 = scmp.ne.s32.totalorder %s44, %s60
    %p62 = scmp.eq.s32.totalorder %s15, 0
    %p63 = por %p61, %p62
    %s64 = ssub.s32 %s16, %s35
    %s65 = ssub.s32 %s18, %s27
    %s66 = sor.u32 %s64, %s65
    %p67 = scmp.eq.s32.totalorder %s66, 0
    %s69 = sadd.s32 %s68, 1
    %s70 = scalar_select %p67, %s68, %s69
    %p73 = pneg %p67
    %p74 = scmp.eq.s32.totalorder %s9, 7
    %p75 = por %p73, %p74
    %p76 = scmp.ne.s32.totalorder %s68, %s71
    %p77 = scmp.eq.s32.totalorder %s9, 0
    %p78 = por %p76, %p77
    %p79 = scmp.ne.s32.totalorder %s68, %s71
    %p80 = scmp.eq.s32.totalorder %s14, 7
    %p81 = por %p79, %p80
    %p82 = scmp.ne.s32.totalorder %s71, %s72
    %p83 = scmp.eq.s32.totalorder %s14, 0
    %p84 = por %p82, %p83
    %p85 = scmp.ne.s32.totalorder %s71, %s72
    %p86 = scmp.eq.s32.totalorder %s15, 7
    %p87 = por %p85, %p86
    %p89 = scmp.ne.s32.totalorder %s72, %s88
    %p90 = scmp.eq.s32.totalorder %s15, 0
    %p91 = por %p89, %p90
    %s92 = ssub.s32 %s16, %s35
    %s93 = ssub.s32 %s18, %s27
    %s94 = sor.u32 %s92, %s93
    %p95 = scmp.eq.s32.totalorder %s94, 0
    %s97 = sadd.s32 %s96, 1
    %s98 = scalar_select %p95, %s96, %s97
    %p101 = pneg %p95
    %p102 = scmp.eq.s32.totalorder %s9, 7
    %p103 = por %p101, %p102
    %p104 = scmp.ne.s32.totalorder %s96, %s99
    %p105 = scmp.eq.s32.totalorder %s9, 0
    %p106 = por %p104, %p105
    %p107 = scmp.ne.s32.totalorder %s96, %s99
    %p108 = scmp.eq.s32.totalorder %s14, 7
    %p109 = por %p107, %p108
    %p110 = scmp.ne.s32.totalorder %s99, %s100
    %p111 = scmp.eq.s32.totalorder %s14, 0
    %p112 = por %p110, %p111
    %p113 = scmp.ne.s32.totalorder %s99, %s100
    %p114 = scmp.eq.s32.totalorder %s15, 7
    %p115 = por %p113, %p114
    %p117 = scmp.ne.s32.totalorder %s100, %s116
    %p118 = scmp.eq.s32.totalorder %s15, 0
    %p119 = por %p117, %p118
    %s120 = ssub.s32 %s16, %s35
    %s121 = ssub.s32 %s17, %s31
    %s122 = sor.u32 %s120, %s121
    %p123 = scmp.eq.s32.totalorder %s122, 0
    %s125 = sadd.s32 %s124, 1
    %s126 = scalar_select %p123, %s124, %s125
    %p129 = pneg %p123
    %p130 = scmp.eq.s32.totalorder %s9, 7
    %p131 = por %p129, %p130
    %p132 = scmp.ne.s32.totalorder %s124, %s127
    %p133 = scmp.eq.s32.totalorder %s9, 0
    %p134 = por %p132, %p133
    %p135 = scmp.ne.s32.totalorder %s124, %s127
    %p136 = scmp.eq.s32.totalorder %s14, 7
    %p137 = por %p135, %p136
    %p138 = scmp.ne.s32.totalorder %s127, %s128
    %p139 = scmp.eq.s32.totalorder %s14, 0
    %p140 = por %p138, %p139
    %p141 = scmp.ne.s32.totalorder %s127, %s128
    %p142 = scmp.eq.s32.totalorder %s15, 7
    %p143 = por %p141, %p142
    %p145 = scmp.ne.s32.totalorder %s128, %s144
    %p146 = scmp.eq.s32.totalorder %s15, 0
    %p147 = por %p145, %p146
    %p148 = scmp.le.s32.totalorder 1, %s9
    %p149 = scmp.lt.s32.totalorder %s9, 9
    %p150 = pnand %p148, %p149
    %p151 = pneg %p150
    // Predicated region
    $region9: #{basic_transformer_block.10} parent=5 // pred_check
      _
    $region10: #{basic_transformer_block.10} parent=5 // pred_check_branch
      %153 = sbr.rel (%p150) target = $region12
    $region11: #{basic_transformer_block.10} parent=5 // pred_region
      %s154 = ssub.s32 %s9, 1
    $region12: #{basic_transformer_block.10} parent=5 // pred_fallthru
      _
    %p155 = scmp.lt.s32.totalorder %s9, 8
    // Predicated region
    $region13: #{basic_transformer_block.10} parent=5 // pred_check
      %p156 = pneg %p155
    $region14: #{basic_transformer_block.10} parent=5 // pred_check_branch
      %158 = sbr.rel (%p156) target = $region16
    $region15: #{basic_transformer_block.10} parent=5 // pred_region
      // Predicated region
      $region17: #{basic_transformer_block.10} parent=15 // pred_check
        %p159 = pneg %p50
      $region18: #{basic_transformer_block.10} parent=15 // pred_check_branch
        %161 = sbr.rel (%p159) target = $region20
      $region19: #{basic_transformer_block.10} parent=15 // pred_region
        %s162 = smul.u32 2, %s17
        %p163 = scmp.lt.s32.totalorder %s16, 7
        %s164 = scalar_select %p163, %s16, 7
        %p165 = scmp.lt.s32.totalorder %s162, 1
        %s166 = scalar_select %p165, %s162, 1
        %s167 = smul.addr %s164, 2
        %s168 = sadd.s32 %s166, %s167
        %s169 = smul.addr %s168, 8
        %s170 = scalar_lea.vmem %s0, %s169
        %s171 = smul.u32 2, %s17
      $region20: #{basic_transformer_block.10} parent=15 // pred_fallthru
        _
      // Predicated region
      $region21: #{basic_transformer_block.10} parent=15 // pred_check
        %p172 = pneg %p78
      $region22: #{basic_transformer_block.10} parent=15 // pred_check_branch
        %174 = sbr.rel (%p172) target = $region24
      $region23: #{basic_transformer_block.10} parent=15 // pred_region
        %s175 = smul.u32 2, %s18
        %p176 = scmp.lt.s32.totalorder %s16, 7
        %s177 = scalar_select %p176, %s16, 7
        %p178 = scmp.lt.s32.totalorder %s175, 1
        %s179 = scalar_select %p178, %s175, 1
        %s180 = smul.addr %s177, 2
        %s181 = sadd.s32 %s179, %s180
        %s182 = smul.addr %s181, 8
        %s183 = scalar_lea.vmem %s1, %s182
        %s184 = smul.u32 2, %s18
      $region24: #{basic_transformer_block.10} parent=15 // pred_fallthru
        _
      // Predicated region
      $region25: #{basic_transformer_block.10} parent=15 // pred_check
        %p185 = pneg %p106
      $region26: #{basic_transformer_block.10} parent=15 // pred_check_branch
        %187 = sbr.rel (%p185) target = $region28
      $region27: #{basic_transformer_block.10} parent=15 // pred_region
        %s188 = smul.u32 2, %s18
        %p189 = scmp.lt.s32.totalorder %s16, 7
        %s190 = scalar_select %p189, %s16, 7
        %p191 = scmp.lt.s32.totalorder %s188, 1
        %s192 = scalar_select %p191, %s188, 1
        %s193 = smul.addr %s190, 2
        %s194 = sadd.s32 %s192, %s193
        %s195 = smul.addr %s194, 8
        %s196 = scalar_lea.vmem %s2, %s195
        %s197 = smul.u32 2, %s18
      $region28: #{basic_transformer_block.10} parent=15 // pred_fallthru
        _
    $region16: #{basic_transformer_block.10} parent=5 // pred_fallthru
      _
    %p198 = scmp.le.s32.totalorder 1, %s9
    %p199 = scmp.lt.s32.totalorder %s9, 9
    %p200 = pnand %p198, %p199
    %p201 = pneg %p200
    // Predicated region
    $region29: #{basic_transformer_block.10} parent=5 // pred_check
      _
    $region30: #{basic_transformer_block.10} parent=5 // pred_check_branch
      %203 = sbr.rel (%p200) target = $region32
    $region31: #{basic_transformer_block.10} parent=5 // pred_region
      %s204 = ssub.s32 %s9, 1
      %s205 = smul.u32 2, %s20
      %p206 = scmp.lt.s32.totalorder %s19, 7
      %s207 = scalar_select %p206, %s19, 7
      %p208 = scmp.lt.s32.totalorder %s205, 1
      %s209 = scalar_select %p208, %s205, 1
      %s210 = smul.addr %s207, 2
      %s211 = sadd.s32 %s209, %s210
      %s212 = smul.addr %s211, 8
      %s213 = scalar_lea.vmem %s0, %s212
      %p214 = pneg %p56
      %p215 = pneg %p53
      %s216 = smul.u32 2, %s21
      %p217 = scmp.lt.s32.totalorder %s19, 7
      %s218 = scalar_select %p217, %s19, 7
      %p219 = scmp.lt.s32.totalorder %s216, 1
      %s220 = scalar_select %p219, %s216, 1
      %s221 = smul.addr %s218, 2
      %s222 = sadd.s32 %s220, %s221
      %s223 = smul.addr %s222, 8
      %s224 = scalar_lea.vmem %s1, %s223
      %p225 = pneg %p84
      %p226 = pneg %p81
      %s227 = smul.u32 2, %s21
      %p228 = scmp.lt.s32.totalorder %s19, 7
      %s229 = scalar_select %p228, %s19, 7
      %p230 = scmp.lt.s32.totalorder %s227, 1
      %s231 = scalar_select %p230, %s227, 1
      %s232 = smul.addr %s229, 2
      %s233 = sadd.s32 %s231, %s232
      %s234 = smul.addr %s233, 8
      %s235 = scalar_lea.vmem %s2, %s234
      %p236 = pneg %p112
      %p237 = pneg %p109
      %p238 = pneg %p140
      %p239 = pneg %p137
      %s240 = smul.u32 2, %s20
      %p241 = scmp.lt.s32.totalorder %s19, 7
      %s242 = scalar_select %p241, %s19, 7
      %p243 = scmp.lt.s32.totalorder %s240, 1
      %s244 = scalar_select %p243, %s240, 1
      %s245 = smul.addr %s242, 2
      %s246 = sadd.s32 %s244, %s245
      %s247 = smul.addr %s246, 8
      %s248 = scalar_lea.vmem %s3, %s247
      %s249 = smul.u32 2, %s20
      %p250 = scmp.lt.s32.totalorder %s19, 7
      %s251 = scalar_select %p250, %s19, 7
      %p252 = scmp.lt.s32.totalorder %s249, 1
      %s253 = scalar_select %p252, %s249, 1
      %s254 = smul.addr %s251, 2
      %s255 = sadd.s32 %s253, %s254
      %s256 = smul.addr %s255, 8
      %s257 = scalar_lea.vmem %s0, %s256
      %s258 = smul.u32 2, %s20
      %s259 = smul.u32 2, %s21
      %p260 = scmp.lt.s32.totalorder %s19, 7
      %s261 = scalar_select %p260, %s19, 7
      %p262 = scmp.lt.s32.totalorder %s259, 1
      %s263 = scalar_select %p262, %s259, 1
      %s264 = smul.addr %s261, 2
      %s265 = sadd.s32 %s263, %s264
      %s266 = smul.addr %s265, 8
      %s267 = scalar_lea.vmem %s1, %s266
      %s268 = smul.u32 2, %s21
      %s269 = smul.u32 2, %s21
      %p270 = scmp.lt.s32.totalorder %s19, 7
      %s271 = scalar_select %p270, %s19, 7
      %p272 = scmp.lt.s32.totalorder %s269, 1
      %s273 = scalar_select %p272, %s269, 1
      %s274 = smul.addr %s271, 2
      %s275 = sadd.s32 %s273, %s274
      %s276 = smul.addr %s275, 8
      %s277 = scalar_lea.vmem %s2, %s276
      %s278 = smul.u32 2, %s21
      %s279 = smul.u32 2, %s20
      %p280 = scmp.lt.s32.totalorder %s19, 7
      %s281 = scalar_select %p280, %s19, 7
      %p282 = scmp.lt.s32.totalorder %s279, 1
      %s283 = scalar_select %p282, %s279, 1
      %s284 = smul.addr %s281, 2
      %s285 = sadd.s32 %s283, %s284
      %s286 = smul.addr %s285, 8
      %s287 = scalar_lea.vmem %s3, %s286
      %s288 = smul.u32 2, %s20
      %p290 = scmp.eq.s32.totalorder %s21, 0
      // Predicated region
      $region33: #{basic_transformer_block.10} parent=31 // pred_check
        %p291 = pneg %p290
      $region34: #{basic_transformer_block.10} parent=31 // pred_check_branch
        %293 = sbr.rel (%p291) target = $region36
      $region35: #{basic_transformer_block.10} parent=31 // pred_region
        %vm294 = vcmask 7168
        %295 = vst.msk [vmem:[#allocation2] sm:$0xff] %vm294, -inf
        %296 = vst.msk [vmem:[#allocation2 + $0x8] sm:$0xff] %vm294, -inf
        %297 = vst.msk [vmem:[#allocation3] sm:$0xff] %vm294, 0.0
        %298 = vst.msk [vmem:[#allocation3 + $0x8] sm:$0xff] %vm294, 0.0
        %vm299 = vcmask 64512
        %300 = vst.msk [vmem:[#allocation4] sm:$0xff] %vm299, 0.0
        %301 = vst.msk [vmem:[#allocation4 + $0x8] sm:$0xff] %vm299, 0.0
      $region36: #{basic_transformer_block.10} parent=31 // pred_fallthru
        _
      %v302 = vld [vmem:[%s257] sm:$0xff]
      %v303 = vld [vmem:[%s257 + $0x8] sm:$0xff]
      %v304 = vmul.f32 %v302, 0.35355338
      %v305 = vmul.f32 %v303, 0.35355338
      %v306 = vpack.c.bf16 %v305, %v304
      %v307 = vld [vmem:[%s267] sm:$0xff]
      %v308 = vld [vmem:[%s267 + $0x8] sm:$0xff]
      %v309 = vpack.c.bf16 %v308, %v307
      %v310 = vld [vmem:[%s277] sm:$0xff]
      %v311 = vld [vmem:[%s277 + $0x8] sm:$0xff]
      %v312 = vpack.c.bf16 %v311, %v310
      %vm313 = vcmask 64512
      %v315 = vsel %vm313, %v306, 0
      %v318 = vsel %vm313, %v309, 0
      %320 = vmatprep.subr.bf16.mxu0 0
      %321 = vmatpush1.bf16.xpose.msra.mxu0 0
      %322 = vmatprep.subr.bf16.mxu0 0
      %323 = vmatpush1.bf16.xpose.msra.mxu0 0
      %324 = vmatprep.subr.bf16.mxu0 0
      %325 = vmatpush1.bf16.xpose.msra.mxu0 0
      %326 = vmatprep.subr.bf16.mxu0 0
      %327 = vmatpush1.bf16.xpose.msra.mxu0 0
      %328 = vmatprep.subr.bf16.mxu0 0
      %329 = vmatpush1.bf16.xpose.msra.mxu0 0
      %330 = vmatprep.subr.bf16.mxu0 0
      %331 = vmatpush1.bf16.xpose.msra.mxu0 0
      %332 = vmatprep.subr.bf16.mxu0 0
      %333 = vmatpush1.bf16.xpose.msra.mxu0 0
      %334 = vmatprep.subr.bf16.mxu0 0
      %335 = vmatpush1.bf16.xpose.msra.mxu0 %v318
      %336 = vmatprep.subr.bf16.mxu0 0
      %337 = vmatpush2.bf16.xpose.msra.mxu0 0
      %338 = vmatprep.subr.bf16.mxu0 0
      %339 = vmatpush2.bf16.xpose.msra.mxu0 0
      %340 = vmatprep.subr.bf16.mxu0 0
      %341 = vmatpush2.bf16.xpose.msra.mxu0 0
      %342 = vmatprep.subr.bf16.mxu0 0
      %343 = vmatpush2.bf16.xpose.msra.mxu0 0
      %344 = vmatprep.subr.bf16.mxu0 0
      %345 = vmatpush2.bf16.xpose.msra.mxu0 0
      %346 = vmatprep.subr.bf16.mxu0 0
      %347 = vmatpush2.bf16.xpose.msra.mxu0 0
      %348 = vmatprep.subr.bf16.mxu0 0
      %349 = vmatpush2.bf16.xpose.msra.mxu0 0
      %350 = vmatprep.subr.bf16.mxu0 0
      %351 = vmatpush2.bf16.xpose.msra.mxu0 0
      %352 = vmatprep.mubr.bf16.mxu0 0
      %353 = vmatmul.mubr.bf16.gmra.mxu0 %v315
      %v354 = vpop.f32.mrf.mxu0
      %v355 = vadd.f32 0.0, %v354
      %v356 = vpop.f32.mrf.mxu0
      %v357 = vpop.f32.mrf.mxu0
      %v358 = vadd.f32 0.0, %v357
      %v359 = vpop.f32.mrf.mxu0
      %360 = vdwg.mxu0
      %v361 = vld [vmem:[#allocation2] sm:$0xff]
      %v362 = vld [vmem:[#allocation2 + $0x8] sm:$0xff]
      %vm363 = vcmask 130048
      %v364 = vsel %vm363, %v355, -inf
      %365 = vmax.xlane.f32.xlu0 %v364
      %v366 = vpop.xlane.xlu0 %365
      %v367 = vsel %vm363, %v358, -inf
      %368 = vmax.xlane.f32.xlu0 %v367
      %v369 = vpop.xlane.xlu0 %368
      %v370 = vmax.f32 %v361, %v366
      %v371 = vmax.f32 %v362, %v369
      %v372 = vsub.f32 %v361, %v370
      %v373 = vsub.f32 %v362, %v371
      %v374 = vmul.f32 %v372, 1.442695
      %v375 = vpow.pop %v374
      %v376 = vmul.f32 %v373, 1.442695
      %v377 = vpow.pop %v376
      %379 = vset.pattern.permute.xlu0 0
      %380 = vperm.xlu0 %379, %v370
      %v381 = vpop.permute.xlu0 %380
      %384 = vset.pattern.permute.xlu0 0
      %385 = vperm.xlu0 %384, %v371
      %v386 = vpop.permute.xlu0 %385
      %v388 = vsub.f32 %v355, %v381
      %v389 = vsub.f32 %v358, %v386
      %v390 = vmul.f32 %v388, 1.442695
      %v391 = vpow.pop %v390
      %v392 = vmul.f32 %v389, 1.442695
      %v393 = vpow.pop %v392
      %v394 = vld [vmem:[#allocation3] sm:$0xff]
      %v395 = vld [vmem:[#allocation3 + $0x8] sm:$0xff]
      %v396 = vmul.f32 %v375, %v394
      %v397 = vmul.f32 %v377, %v395
      %v398 = vsel %vm363, %v391, 0.0
      %399 = vadd.xlane.f32.xlu0 %v398
      %v400 = vpop.xlane.xlu0 %399
      %v401 = vsel %vm363, %v393, 0.0
      %402 = vadd.xlane.f32.xlu0 %v401
      %v403 = vpop.xlane.xlu0 %402
      %v404 = vadd.f32 %v396, %v400
      %v405 = vadd.f32 %v397, %v403
      %vm406 = vcmask 7168
      %407 = vst.msk [vmem:[#allocation3] sm:$0xff] %vm406, %v404
      %408 = vst.msk [vmem:[#allocation3 + $0x8] sm:$0xff] %vm406, %v405
      %v409 = vld [vmem:[#allocation4] sm:$0xff]
      %v410 = vld [vmem:[#allocation4 + $0x8] sm:$0xff]
      %412 = vset.pattern.permute.xlu0 0
      %413 = vperm.xlu0 %412, %v375
      %v414 = vpop.permute.xlu0 %413
      %417 = vset.pattern.permute.xlu0 0
      %418 = vperm.xlu0 %417, %v377
      %v419 = vpop.permute.xlu0 %418
      %v421 = vmul.f32 %v414, %v409
      %v422 = vmul.f32 %v419, %v410
      %v423 = vpack.c.bf16 %v393, %v391
      %v425 = vsel %vm363, %v423, 0
      %427 = vmatprep.subr.bf16.mxu0 0
      %428 = vmatpush1.bf16.msra.mxu0 0
      %429 = vmatprep.subr.bf16.mxu0 0
      %430 = vmatpush1.bf16.msra.mxu0 0
      %431 = vmatprep.subr.bf16.mxu0 0
      %432 = vmatpush1.bf16.msra.mxu0 0
      %433 = vmatprep.subr.bf16.mxu0 0
      %434 = vmatpush1.bf16.msra.mxu0 0
      %435 = vmatprep.subr.bf16.mxu0 0
      %436 = vmatpush1.bf16.msra.mxu0 0
      %437 = vmatprep.subr.bf16.mxu0 0
      %438 = vmatpush1.bf16.msra.mxu0 0
      %439 = vmatprep.subr.bf16.mxu0 0
      %440 = vmatpush1.bf16.msra.mxu0 0
      %441 = vmatprep.subr.bf16.mxu0 0
      %442 = vmatpush1.bf16.msra.mxu0 %v312
      %443 = vmatprep.subr.bf16.mxu0 0
      %444 = vmatpush2.bf16.msra.mxu0 0
      %445 = vmatprep.subr.bf16.mxu0 0
      %446 = vmatpush2.bf16.msra.mxu0 0
      %447 = vmatprep.subr.bf16.mxu0 0
      %448 = vmatpush2.bf16.msra.mxu0 0
      %449 = vmatprep.subr.bf16.mxu0 0
      %450 = vmatpush2.bf16.msra.mxu0 0
      %451 = vmatprep.subr.bf16.mxu0 0
      %452 = vmatpush2.bf16.msra.mxu0 0
      %453 = vmatprep.subr.bf16.mxu0 0
      %454 = vmatpush2.bf16.msra.mxu0 0
      %455 = vmatprep.subr.bf16.mxu0 0
      %456 = vmatpush2.bf16.msra.mxu0 0
      %457 = vmatprep.subr.bf16.mxu0 0
      %458 = vmatpush2.bf16.msra.mxu0 0
      %459 = vmatprep.mubr.bf16.mxu0 0
      %460 = vmatmul.mubr.bf16.gmra.mxu0 %v425
      %v461 = vpop.f32.mrf.mxu0
      %v462 = vadd.f32 0.0, %v461
      %v463 = vpop.f32.mrf.mxu0
      %v464 = vpop.f32.mrf.mxu0
      %v465 = vadd.f32 0.0, %v464
      %v466 = vpop.f32.mrf.mxu0
      %467 = vdwg.mxu0
      %v468 = vadd.f32 %v421, %v462
      %v469 = vadd.f32 %v422, %v465
      %470 = vst.msk [vmem:[#allocation4] sm:$0xff] %vm313, %v468
      %471 = vst.msk [vmem:[#allocation4 + $0x8] sm:$0xff] %vm313, %v469
      %472 = vst.msk [vmem:[#allocation2] sm:$0xff] %vm406, %v370
      %473 = vst.msk [vmem:[#allocation2 + $0x8] sm:$0xff] %vm406, %v371
      // Predicated region
      $region37: #{basic_transformer_block.10} parent=31 // pred_check
        %p474 = pneg %p290
      $region38: #{basic_transformer_block.10} parent=31 // pred_check_branch
        %476 = sbr.rel (%p474) target = $region40
      $region39: #{basic_transformer_block.10} parent=31 // pred_region
        %v477 = vld [vmem:[#allocation3] sm:$0xff]
        %v478 = vld [vmem:[#allocation3 + $0x8] sm:$0xff]
        %v479 = vrcp.pop %v477
        %v480 = vrcp.pop %v478
        %v481 = vld [vmem:[#allocation4] sm:$0xff]
        %v482 = vld [vmem:[#allocation4 + $0x8] sm:$0xff]
        %484 = vset.pattern.permute.xlu0 0
        %485 = vperm.xlu0 %484, %v479
        %v486 = vpop.permute.xlu0 %485
        %489 = vset.pattern.permute.xlu0 0
        %490 = vperm.xlu0 %489, %v480
        %v491 = vpop.permute.xlu0 %490
        %v493 = vmul.f32 %v481, %v486
        %v494 = vmul.f32 %v482, %v491
        %495 = vst.msk [vmem:[%s287] sm:$0xff] %vm313, %v493
        %496 = vst.msk [vmem:[%s287 + $0x8] sm:$0xff] %vm313, %v494
      $region40: #{basic_transformer_block.10} parent=31 // pred_fallthru
        _
      %s497 = smul.u32 2, %s20
      %p498 = scmp.lt.s32.totalorder %s19, 7
      %s499 = scalar_select %p498, %s19, 7
      %p500 = scmp.lt.s32.totalorder %s497, 1
      %s501 = scalar_select %p500, %s497, 1
      %s502 = smul.addr %s499, 2
      %s503 = sadd.s32 %s501, %s502
      %s504 = smul.addr %s503, 8
      %s505 = scalar_lea.vmem %s3, %s504
      // Predicated region
      $region41: #{basic_transformer_block.10} parent=31 // pred_check
        %p506 = pneg %p137
      $region42: #{basic_transformer_block.10} parent=31 // pred_check_branch
        %508 = sbr.rel (%p506) target = $region44
      $region43: #{basic_transformer_block.10} parent=31 // pred_region
        %s509 = smul.u32 2, %s20
      $region44: #{basic_transformer_block.10} parent=31 // pred_fallthru
        _
    $region32: #{basic_transformer_block.10} parent=5 // pred_fallthru
      _
    %p510 = scmp.le.s32.totalorder 2, %s9
    // Predicated region
    $region45: #{basic_transformer_block.10} parent=5 // pred_check
      %p511 = pneg %p510
    $region46: #{basic_transformer_block.10} parent=5 // pred_check_branch
      %513 = sbr.rel (%p511) target = $region48
    $region47: #{basic_transformer_block.10} parent=5 // pred_region
      %s514 = ssub.s32 %s9, 2
      // Predicated region
      $region49: #{basic_transformer_block.10} parent=47 // pred_check
        %p515 = pneg %p143
      $region50: #{basic_transformer_block.10} parent=47 // pred_check_branch
        %517 = sbr.rel (%p515) target = $region52
      $region51: #{basic_transformer_block.10} parent=47 // pred_region
        %s518 = smul.u32 2, %s23
        %p519 = scmp.lt.s32.totalorder %s22, 7
        %s520 = scalar_select %p519, %s22, 7
        %p521 = scmp.lt.s32.totalorder %s518, 1
        %s522 = scalar_select %p521, %s518, 1
        %s523 = smul.addr %s520, 2
        %s524 = sadd.s32 %s522, %s523
        %s525 = smul.addr %s524, 8
        %s526 = scalar_lea.vmem %s3, %s525
      $region52: #{basic_transformer_block.10} parent=47 // pred_fallthru
        _
    $region48: #{basic_transformer_block.10} parent=5 // pred_fallthru
      _
  $region6: #{basic_transformer_block.10} parent=0 // loop_footer
    %s13 = sadd.s32 1, %s9
  $region7: #{basic_transformer_block.10} parent=0 // loop_footer_branch
    %8 = sbr.rel target = $region3
  $region8: #{basic_transformer_block.10} parent=0 // loop_exit
    _

// kernel: basic_transformer_block.13
$region0: #{basic_transformer_block.13}
  #allocation0 [shape = 'u32[]', space=smem, size = 0x4, offset = 0x4, fixed_abs, tag = 'smem constant byte address 0x4 - core index']
  #allocation1 [shape = 'u32[144,128]{1,0:T(1,128)}', space=vmem, size = 0x12000, scoped, tag = 'internal scratch']
  #allocation2 [shape = 'f32[16,64]{1,0:T(8,128)}', space=vmem, size = 0x2000, scoped, tag = 'scratch operand']
  %s0 = inlined_call_operand.vmem [shape: f32[16,24], index: 0, kind: input, shape index: {}]
  %s1 = inlined_call_operand.vmem [shape: f32[24,64], index: 1, kind: input, shape index: {}]
  %s2 = inlined_call_operand.vmem [shape: f32[16,64], index: 2, kind: output, shape index: {}]
  %s3 = sld [smem:[#allocation0]]
  $region26: #{basic_transformer_block.13} parent=0
    _
  %s5 = ssub.s32 1, %s3
  %s6 = scalar_select 0, %s5, %s3
  // Predicated region
  $region2: #{basic_transformer_block.13} parent=0 // pred_check
    _
  $region3: #{basic_transformer_block.13} parent=0 // pred_check_branch
    %8 = sbr.rel (0) target = $region5
  $region4: #{basic_transformer_block.13} parent=0 // pred_region
    _
  $region5: #{basic_transformer_block.13} parent=0 // pred_fallthru
    _
  // Predicated region
  $region6: #{basic_transformer_block.13} parent=0 // pred_check
    _
  $region7: #{basic_transformer_block.13} parent=0 // pred_check_branch
    %10 = sbr.rel (0) target = $region9
  $region8: #{basic_transformer_block.13} parent=0 // pred_region
    _
  $region9: #{basic_transformer_block.13} parent=0 // pred_fallthru
    _
  %p12 = scmp.eq.s32.totalorder 0, 0
  // Predicated region
  $region10: #{basic_transformer_block.13} parent=0 // pred_check
    %p13 = pneg %p12
  $region11: #{basic_transformer_block.13} parent=0 // pred_check_branch
    %15 = sbr.rel (%p13) target = $region13
  $region12: #{basic_transformer_block.13} parent=0 // pred_region
    %vm16 = vcmask 523264
    %17 = vst.msk [vmem:[#allocation2] sm:$0xff] %vm16, 0.0
    %18 = vst.msk [vmem:[#allocation2 + $0x8] sm:$0xff] %vm16, 0.0
  $region13: #{basic_transformer_block.13} parent=0 // pred_fallthru
    _
  %v19 = vld [vmem:[#allocation2] sm:$0xff]
  %v20 = vld [vmem:[#allocation2 + $0x8] sm:$0xff]
  %v21 = vld [vmem:[%s0] sm:$0xff]
  %v22 = vld [vmem:[%s0 + $0x8] sm:$0xff]
  %v23 = vpack.c.bf16 %v22, %v21
  %v24 = vld [vmem:[%s1] sm:$0xff]
  %v25 = vld [vmem:[%s1 + $0x8] sm:$0xff]
  %v26 = vld [vmem:[%s1 + $0x10] sm:$0xff]
  %v27 = vpack.c.bf16 %v25, %v24
  %v28 = vpack.c.bf16 %v26, %v26
  %vm29 = vcmask 195584
  %v31 = vsel %vm29, %v23, 0
  %vm33 = vcmask 1043456
  %v35 = vsel %vm33, %v28, 0
  %37 = vmatprep.subr.bf16.mxu0 0
  %38 = vmatpush1.bf16.msra.mxu0 0
  %39 = vmatprep.subr.bf16.mxu0 0
  %40 = vmatpush1.bf16.msra.mxu0 0
  %41 = vmatprep.subr.bf16.mxu0 0
  %42 = vmatpush1.bf16.msra.mxu0 0
  %43 = vmatprep.subr.bf16.mxu0 0
  %44 = vmatpush1.bf16.msra.mxu0 0
  %45 = vmatprep.subr.bf16.mxu0 0
  %46 = vmatpush1.bf16.msra.mxu0 0
  %47 = vmatprep.subr.bf16.mxu0 0
  %48 = vmatpush1.bf16.msra.mxu0 0
  %49 = vmatprep.subr.bf16.mxu0 0
  %50 = vmatpush1.bf16.msra.mxu0 %v35
  %51 = vmatprep.subr.bf16.mxu0 0
  %52 = vmatpush1.bf16.msra.mxu0 %v27
  %53 = vmatprep.subr.bf16.mxu0 0
  %54 = vmatpush2.bf16.msra.mxu0 0
  %55 = vmatprep.subr.bf16.mxu0 0
  %56 = vmatpush2.bf16.msra.mxu0 0
  %57 = vmatprep.subr.bf16.mxu0 0
  %58 = vmatpush2.bf16.msra.mxu0 0
  %59 = vmatprep.subr.bf16.mxu0 0
  %60 = vmatpush2.bf16.msra.mxu0 0
  %61 = vmatprep.subr.bf16.mxu0 0
  %62 = vmatpush2.bf16.msra.mxu0 0
  %63 = vmatprep.subr.bf16.mxu0 0
  %64 = vmatpush2.bf16.msra.mxu0 0
  %65 = vmatprep.subr.bf16.mxu0 0
  %66 = vmatpush2.bf16.msra.mxu0 0
  %67 = vmatprep.subr.bf16.mxu0 0
  %68 = vmatpush2.bf16.msra.mxu0 0
  %69 = vmatprep.mubr.bf16.mxu0 0
  %70 = vmatmul.mubr.bf16.gmra.mxu0 %v31
  %v71 = vpop.f32.mrf.mxu0
  %v72 = vadd.f32 0.0, %v71
  %v73 = vpop.f32.mrf.mxu0
  %v74 = vpop.f32.mrf.mxu0
  %v75 = vadd.f32 0.0, %v74
  %v76 = vpop.f32.mrf.mxu0
  %77 = vdwg.mxu0
  %v78 = vadd.f32 %v19, %v72
  %v79 = vadd.f32 %v20, %v75
  %vm80 = vcmask 523264
  %81 = vst.msk [vmem:[#allocation2] sm:$0xff] %vm80, %v78
  %82 = vst.msk [vmem:[#allocation2 + $0x8] sm:$0xff] %vm80, %v79
  // Predicated region
  $region14: #{basic_transformer_block.13} parent=0 // pred_check
    %p83 = pneg %p12
  $region15: #{basic_transformer_block.13} parent=0 // pred_check_branch
    %85 = sbr.rel (%p83) target = $region17
  $region16: #{basic_transformer_block.13} parent=0 // pred_region
    %v86 = vld [vmem:[#allocation2] sm:$0xff]
    %v87 = vld [vmem:[#allocation2 + $0x8] sm:$0xff]
    %88 = vst.msk [vmem:[%s2] sm:$0xff] %vm80, %v86
    %89 = vst.msk [vmem:[%s2 + $0x8] sm:$0xff] %vm80, %v87
  $region17: #{basic_transformer_block.13} parent=0 // pred_fallthru
    _
  // Predicated region
  $region18: #{basic_transformer_block.13} parent=0 // pred_check
    _
  $region19: #{basic_transformer_block.13} parent=0 // pred_check_branch
    %91 = sbr.rel (0) target = $region21
  $region20: #{basic_transformer_block.13} parent=0 // pred_region
    _
  $region21: #{basic_transformer_block.13} parent=0 // pred_fallthru
    _
  // Predicated region
  $region22: #{basic_transformer_block.13} parent=0 // pred_check
    _
  $region23: #{basic_transformer_block.13} parent=0 // pred_check_branch
    %93 = sbr.rel (0) target = $region25
  $region24: #{basic_transformer_block.13} parent=0 // pred_region
    _
  $region25: #{basic_transformer_block.13} parent=0 // pred_fallthru
    _

// kernel: basic_transformer_block.17
$region0: #{basic_transformer_block.17}
  #allocation0 [shape = 'u32[]', space=smem, size = 0x4, offset = 0x4, fixed_abs, tag = 'smem constant byte address 0x4 - core index']
  #allocation1 [shape = 'u32[144,128]{1,0:T(1,128)}', space=vmem, size = 0x12000, scoped, tag = 'internal scratch']
  #allocation2 [shape = 'f32[32,32]{1,0:T(8,128)}', space=vmem, size = 0x4000, scoped, tag = 'scratch operand']
  %s0 = inlined_call_operand.vmem [shape: f32[32,128], index: 0, kind: input, shape index: {}]
  %s1 = inlined_call_operand.vmem [shape: f32[128,32], index: 1, kind: input, shape index: {}]
  %s2 = inlined_call_operand.vmem [shape: f32[1,32], index: 2, kind: input, shape index: {}]
  %s3 = inlined_call_operand.vmem [shape: f32[32,32], index: 3, kind: input, shape index: {}]
  %s4 = inlined_call_operand.hbm [shape: f32[32,32], index: 4, kind: output, shape index: {}]
  %s5 = sld [smem:[#allocation0]]
  $region34: #{basic_transformer_block.17} parent=0
    _
  %s7 = ssub.s32 1, %s5
  %s8 = scalar_select 0, %s7, %s5
  $region1: #{basic_transformer_block.17} parent=0
    #allocation3 [shape = 'u8[16384]{0}', space=vmem, size = 0x4000, scoped, tag = 'output window, operand 0, single buffered']
    #allocation4 [shape = 's32[1]{0}', space=sflag, size = 0x4, scoped, tag = 'scoped memory for basic_transformer_block.17']
    %9 = vsyncpa [#allocation4], 0
    // Predicated region
    $region2: #{basic_transformer_block.17} parent=1 // pred_check
      _
    $region3: #{basic_transformer_block.17} parent=1 // pred_check_branch
      %11 = sbr.rel (0) target = $region5
    $region4: #{basic_transformer_block.17} parent=1 // pred_region
      _
    $region5: #{basic_transformer_block.17} parent=1 // pred_fallthru
      _
    // Predicated region
    $region6: #{basic_transformer_block.17} parent=1 // pred_check
      _
    $region7: #{basic_transformer_block.17} parent=1 // pred_check_branch
      %13 = sbr.rel (0) target = $region9
    $region8: #{basic_transformer_block.17} parent=1 // pred_region
      _
    $region9: #{basic_transformer_block.17} parent=1 // pred_fallthru
      _
    // Predicated region
    $region10: #{basic_transformer_block.17} parent=1 // pred_check
      _
    $region11: #{basic_transformer_block.17} parent=1 // pred_check_branch
      %15 = sbr.rel (0) target = $region13
    $region12: #{basic_transformer_block.17} parent=1 // pred_region
      _
    $region13: #{basic_transformer_block.17} parent=1 // pred_fallthru
      _
    // Predicated region
    $region14: #{basic_transformer_block.17} parent=1 // pred_check
      _
    $region15: #{basic_transformer_block.17} parent=1 // pred_check_branch
      %17 = sbr.rel (0) target = $region17
    $region16: #{basic_transformer_block.17} parent=1 // pred_region
      _
    $region17: #{basic_transformer_block.17} parent=1 // pred_fallthru
      _
    %p19 = scmp.eq.s32.totalorder 0, 0
    // Predicated region
    $region18: #{basic_transformer_block.17} parent=1 // pred_check
      %p20 = pneg %p19
    $region19: #{basic_transformer_block.17} parent=1 // pred_check_branch
      %22 = sbr.rel (%p20) target = $region21
    $region20: #{basic_transformer_block.17} parent=1 // pred_region
      %vm23 = vcmask 261120
      %24 = vst.msk [vmem:[#allocation2] sm:$0xff] %vm23, 0.0
      %25 = vst.msk [vmem:[#allocation2 + $0x8] sm:$0xff] %vm23, 0.0
      %26 = vst.msk [vmem:[#allocation2 + $0x10] sm:$0xff] %vm23, 0.0
      %27 = vst.msk [vmem:[#allocation2 + $0x18] sm:$0xff] %vm23, 0.0
    $region21: #{basic_transformer_block.17} parent=1 // pred_fallthru
      _
    %v28 = vld [vmem:[#allocation2] sm:$0xff]
    %v29 = vld [vmem:[#allocation2 + $0x8] sm:$0xff]
    %v30 = vld [vmem:[#allocation2 + $0x10] sm:$0xff]
    %v31 = vld [vmem:[#allocation2 + $0x18] sm:$0xff]
    %v32 = vld [vmem:[%s0] sm:$0xff]
    %v33 = vld [vmem:[%s0 + $0x8] sm:$0xff]
    %v34 = vld [vmem:[%s0 + $0x10] sm:$0xff]
    %v35 = vld [vmem:[%s0 + $0x18] sm:$0xff]
    %v36 = vpack.c.bf16 %v33, %v32
    %v37 = vpack.c.bf16 %v35, %v34
    %v38 = vld [vmem:[%s1] sm:$0xff]
    %v39 = vld [vmem:[%s1 + $0x8] sm:$0xff]
    %v40 = vld [vmem:[%s1 + $0x10] sm:$0xff]
    %v41 = vld [vmem:[%s1 + $0x18] sm:$0xff]
    %v42 = vld [vmem:[%s1 + $0x20] sm:$0xff]
    %v43 = vld [vmem:[%s1 + $0x28] sm:$0xff]
    %v44 = vld [vmem:[%s1 + $0x30] sm:$0xff]
    %v45 = vld [vmem:[%s1 + $0x38] sm:$0xff]
    %v46 = vld [vmem:[%s1 + $0x40] sm:$0xff]
    %v47 = vld [vmem:[%s1 + $0x48] sm:$0xff]
    %v48 = vld [vmem:[%s1 + $0x50] sm:$0xff]
    %v49 = vld [vmem:[%s1 + $0x58] sm:$0xff]
    %v50 = vld [vmem:[%s1 + $0x60] sm:$0xff]
    %v51 = vld [vmem:[%s1 + $0x68] sm:$0xff]
    %v52 = vld [vmem:[%s1 + $0x70] sm:$0xff]
    %v53 = vld [vmem:[%s1 + $0x78] sm:$0xff]
    %v54 = vpack.c.bf16 %v39, %v38
    %v55 = vpack.c.bf16 %v41, %v40
    %v56 = vpack.c.bf16 %v43, %v42
    %v57 = vpack.c.bf16 %v45, %v44
    %v58 = vpack.c.bf16 %v47, %v46
    %v59 = vpack.c.bf16 %v49, %v48
    %v60 = vpack.c.bf16 %v51, %v50
    %v61 = vpack.c.bf16 %v53, %v52
    %62 = vmatprep.subr.bf16.mxu0 0
    %63 = vmatpush1.bf16.msra.mxu0 %v61
    %64 = vmatprep.subr.bf16.mxu0 0
    %65 = vmatpush1.bf16.msra.mxu0 %v60
    %66 = vmatprep.subr.bf16.mxu0 0
    %67 = vmatpush1.bf16.msra.mxu0 %v59
    %68 = vmatprep.subr.bf16.mxu0 0
    %69 = vmatpush1.bf16.msra.mxu0 %v58
    %70 = vmatprep.subr.bf16.mxu0 0
    %71 = vmatpush1.bf16.msra.mxu0 %v57
    %72 = vmatprep.subr.bf16.mxu0 0
    %73 = vmatpush1.bf16.msra.mxu0 %v56
    %74 = vmatprep.subr.bf16.mxu0 0
    %75 = vmatpush1.bf16.msra.mxu0 %v55
    %76 = vmatprep.subr.bf16.mxu0 0
    %77 = vmatpush1.bf16.msra.mxu0 %v54
    %78 = vmatprep.subr.bf16.mxu0 0
    %79 = vmatpush2.bf16.msra.mxu0 0
    %80 = vmatprep.subr.bf16.mxu0 0
    %81 = vmatpush2.bf16.msra.mxu0 0
    %82 = vmatprep.subr.bf16.mxu0 0
    %83 = vmatpush2.bf16.msra.mxu0 0
    %84 = vmatprep.subr.bf16.mxu0 0
    %85 = vmatpush2.bf16.msra.mxu0 0
    %86 = vmatprep.subr.bf16.mxu0 0
    %87 = vmatpush2.bf16.msra.mxu0 0
    %88 = vmatprep.subr.bf16.mxu0 0
    %89 = vmatpush2.bf16.msra.mxu0 0
    %90 = vmatprep.subr.bf16.mxu0 0
    %91 = vmatpush2.bf16.msra.mxu0 0
    %92 = vmatprep.subr.bf16.mxu0 0
    %93 = vmatpush2.bf16.msra.mxu0 0
    %94 = vmatprep.mubr.bf16.mxu0 0
    %95 = vmatmul.mubr.bf16.gmra.mxu0 %v36
    %v96 = vpop.f32.mrf.mxu0
    %v97 = vadd.f32 0.0, %v96
    %v98 = vpop.f32.mrf.mxu0
    %v99 = vpop.f32.mrf.mxu0
    %v100 = vadd.f32 0.0, %v99
    %v101 = vpop.f32.mrf.mxu0
    %102 = vmatprep.mubr.bf16.mxu0 0
    %103 = vmatmul.mubr.bf16.gmra.mxu0 %v37
    %v104 = vpop.f32.mrf.mxu0
    %v105 = vadd.f32 0.0, %v104
    %v106 = vpop.f32.mrf.mxu0
    %v107 = vpop.f32.mrf.mxu0
    %v108 = vadd.f32 0.0, %v107
    %v109 = vpop.f32.mrf.mxu0
    %110 = vdwg.mxu0
    %v111 = vadd.f32 %v28, %v97
    %v112 = vadd.f32 %v29, %v100
    %v113 = vadd.f32 %v30, %v105
    %v114 = vadd.f32 %v31, %v108
    %vm115 = vcmask 261120
    %116 = vst.msk [vmem:[#allocation2] sm:$0xff] %vm115, %v111
    %117 = vst.msk [vmem:[#allocation2 + $0x8] sm:$0xff] %vm115, %v112
    %118 = vst.msk [vmem:[#allocation2 + $0x10] sm:$0xff] %vm115, %v113
    %119 = vst.msk [vmem:[#allocation2 + $0x18] sm:$0xff] %vm115, %v114
    // Predicated region
    $region22: #{basic_transformer_block.17} parent=1 // pred_check
      %p120 = pneg %p19
    $region23: #{basic_transformer_block.17} parent=1 // pred_check_branch
      %122 = sbr.rel (%p120) target = $region25
    $region24: #{basic_transformer_block.17} parent=1 // pred_region
      %v123 = vld [vmem:[#allocation2] sm:$0xff]
      %v124 = vld [vmem:[#allocation2 + $0x8] sm:$0xff]
      %v125 = vld [vmem:[#allocation2 + $0x10] sm:$0xff]
      %v126 = vld [vmem:[#allocation2 + $0x18] sm:$0xff]
      %v127 = vld [vmem:[%s2] sm:$0x1]
      %v129 = vlaneseq
      %v130 = vshrl.u32 %v129, 7
      %v131 = vsub.s32 0, %v130
      %v132 = vrot.slane %v127, %v131
      %v134 = vadd.f32 %v123, %v132
      %v135 = vadd.f32 %v124, %v132
      %v136 = vadd.f32 %v125, %v132
      %v137 = vadd.f32 %v126, %v132
      %v138 = vld [vmem:[%s3] sm:$0xff]
      %v139 = vld [vmem:[%s3 + $0x8] sm:$0xff]
      %v140 = vld [vmem:[%s3 + $0x10] sm:$0xff]
      %v141 = vld [vmem:[%s3 + $0x18] sm:$0xff]
      %v142 = vadd.f32 %v134, %v138
      %v143 = vadd.f32 %v135, %v139
      %v144 = vadd.f32 %v136, %v140
      %v145 = vadd.f32 %v137, %v141
      %146 = vst.msk [vmem:[#allocation3] sm:$0xff] %vm115, %v142
      %147 = vst.msk [vmem:[#allocation3 + $0x8] sm:$0xff] %vm115, %v143
      %148 = vst.msk [vmem:[#allocation3 + $0x10] sm:$0xff] %vm115, %v144
      %149 = vst.msk [vmem:[#allocation3 + $0x18] sm:$0xff] %vm115, %v145
    $region25: #{basic_transformer_block.17} parent=1 // pred_fallthru
      _
    // Predicated region
    $region26: #{basic_transformer_block.17} parent=1 // pred_check
      _
    $region27: #{basic_transformer_block.17} parent=1 // pred_check_branch
      %151 = sbr.rel (0) target = $region29
    $region28: #{basic_transformer_block.17} parent=1 // pred_region
      %s153 = ssub.s32 512, 512
      %154 = vsyncadd [#allocation4], %s153
      %s155 = sshll.u32 [#allocation3], 4
      %s156 = int_to_ptr.vmem [resolvable:$true] %s155
      %161 = dma.vmem_to_hbm [thread:$0]  %s156, 512, %s4, [#allocation4], 128, 128, 8
    $region29: #{basic_transformer_block.17} parent=1 // pred_fallthru
      _
    // Predicated region
    $region30: #{basic_transformer_block.17} parent=1 // pred_check
      _
    $region31: #{basic_transformer_block.17} parent=1 // pred_check_branch
      %163 = sbr.rel (0) target = $region33
    $region32: #{basic_transformer_block.17} parent=1 // pred_region
      %164 = dma.done [#allocation4], 512
    $region33: #{basic_transformer_block.17} parent=1 // pred_fallthru
      _
    %165 = vsyncpa [#allocation4], 1

// kernel: basic_transformer_block.14
$region0: #{basic_transformer_block.14}
  #allocation0 [shape = 'u32[]', space=smem, size = 0x4, offset = 0x4, fixed_abs, tag = 'smem constant byte address 0x4 - core index']
  #allocation1 [shape = 'u32[144,128]{1,0:T(1,128)}', space=vmem, size = 0x12000, scoped, tag = 'internal scratch']
  #allocation2 [shape = 'f32[16,1]{1,0:T(8,128)}', space=vmem, size = 0x2000, scoped, tag = 'scratch operand']
  #allocation3 [shape = 'f32[16,1]{1,0:T(8,128)}', space=vmem, size = 0x2000, scoped, tag = 'scratch operand']
  #allocation4 [shape = 'f32[16,8]{1,0:T(8,128)}', space=vmem, size = 0x2000, scoped, tag = 'scratch operand']
  %s0 = inlined_call_operand.vmem [shape: f32[8,16,8], index: 0, kind: input, shape index: {}]
  %s1 = inlined_call_operand.vmem [shape: f32[8,8,8], index: 1, kind: input, shape index: {}]
  %s2 = inlined_call_operand.vmem [shape: f32[8,8,8], index: 2, kind: input, shape index: {}]
  %s3 = inlined_call_operand.vmem [shape: f32[8,16,8], index: 3, kind: output, shape index: {}]
  %s4 = sld [smem:[#allocation0]]
  $region53: #{basic_transformer_block.14} parent=0
    _
  %s6 = ssub.s32 1, %s4
  %s7 = scalar_select 0, %s6, %s4
  loop: start=0, step=1, limit=10
  $region2: #{basic_transformer_block.14} parent=0 // loop_pre_header
    _
  $region3: #{basic_transformer_block.14} parent=0 // loop_header
    %s9 = sphi 0, %s13
    %p10 = scmp.ge.s32.totalorder %s9, 10
    %s16 = sphi 0, %s35
    %s17 = sphi 0, %s31
    %s18 = sphi 0, %s27
    %s19 = sphi 0, %s16
    %s20 = sphi 0, %s17
    %s21 = sphi 0, %s18
    %s22 = sphi 0, %s19
    %s23 = sphi 0, %s20
    %s24 = sphi 0, %s21
    %s40 = sphi 0, %s42
    %s43 = sphi 0, %s40
    %s44 = sphi 0, %s43
    %s60 = sphi 0, %s44
    %s68 = sphi 0, %s70
    %s71 = sphi 0, %s68
    %s72 = sphi 0, %s71
    %s88 = sphi 0, %s72
    %s96 = sphi 0, %s98
    %s99 = sphi 0, %s96
    %s100 = sphi 0, %s99
    %s116 = sphi 0, %s100
    %s124 = sphi 0, %s126
    %s127 = sphi 0, %s124
    %s128 = sphi 0, %s127
    %s144 = sphi 0, %s128
  $region4: #{basic_transformer_block.14} parent=0 // loop_header_branch
    %12 = sbr.rel (%p10) target = $region8
  $region5: #{basic_transformer_block.14} parent=0 // loop_body
    %s14 = ssub.s32 %s9, 1
    %s15 = ssub.s32 %s9, 2
    %s25 = sadd.s32 1, %s18
    %p26 = scmp.ge.s32.totalorder %s25, 1
    %s27 = scalar_select %p26, 0, %s25
    %s28 = sadd.s32 1, %s17
    %s29 = scalar_select %p26, %s28, %s17
    %p30 = scmp.ge.s32.totalorder %s29, 1
    %s31 = scalar_select %p30, 0, %s29
    %s32 = sadd.s32 1, %s16
    %s33 = scalar_select %p30, %s32, %s16
    %p34 = scmp.ge.s32.totalorder %s33, 8
    %s35 = scalar_select %p34, 0, %s33
    %s36 = ssub.s32 %s16, %s35
    %s37 = ssub.s32 %s17, %s31
    %s38 = sor.u32 %s36, %s37
    %p39 = scmp.eq.s32.totalorder %s38, 0
    %s41 = sadd.s32 %s40, 1
    %s42 = scalar_select %p39, %s40, %s41
    %p45 = pneg %p39
    %p46 = scmp.eq.s32.totalorder %s9, 7
    %p47 = por %p45, %p46
    %p48 = scmp.ne.s32.totalorder %s40, %s43
    %p49 = scmp.eq.s32.totalorder %s9, 0
    %p50 = por %p48, %p49
    %p51 = scmp.ne.s32.totalorder %s40, %s43
    %p52 = scmp.eq.s32.totalorder %s14, 7
    %p53 = por %p51, %p52
    %p54 = scmp.ne.s32.totalorder %s43, %s44
    %p55 = scmp.eq.s32.totalorder %s14, 0
    %p56 = por %p54, %p55
    %p57 = scmp.ne.s32.totalorder %s43, %s44
    %p58 = scmp.eq.s32.totalorder %s15, 7
    %p59 = por %p57, %p58
    %p61 = scmp.ne.s32.totalorder %s44, %s60
    %p62 = scmp.eq.s32.totalorder %s15, 0
    %p63 = por %p61, %p62
    %s64 = ssub.s32 %s16, %s35
    %s65 = ssub.s32 %s18, %s27
    %s66 = sor.u32 %s64, %s65
    %p67 = scmp.eq.s32.totalorder %s66, 0
    %s69 = sadd.s32 %s68, 1
    %s70 = scalar_select %p67, %s68, %s69
    %p73 = pneg %p67
    %p74 = scmp.eq.s32.totalorder %s9, 7
    %p75 = por %p73, %p74
    %p76 = scmp.ne.s32.totalorder %s68, %s71
    %p77 = scmp.eq.s32.totalorder %s9, 0
    %p78 = por %p76, %p77
    %p79 = scmp.ne.s32.totalorder %s68, %s71
    %p80 = scmp.eq.s32.totalorder %s14, 7
    %p81 = por %p79, %p80
    %p82 = scmp.ne.s32.totalorder %s71, %s72
    %p83 = scmp.eq.s32.totalorder %s14, 0
    %p84 = por %p82, %p83
    %p85 = scmp.ne.s32.totalorder %s71, %s72
    %p86 = scmp.eq.s32.totalorder %s15, 7
    %p87 = por %p85, %p86
    %p89 = scmp.ne.s32.totalorder %s72, %s88
    %p90 = scmp.eq.s32.totalorder %s15, 0
    %p91 = por %p89, %p90
    %s92 = ssub.s32 %s16, %s35
    %s93 = ssub.s32 %s18, %s27
    %s94 = sor.u32 %s92, %s93
    %p95 = scmp.eq.s32.totalorder %s94, 0
    %s97 = sadd.s32 %s96, 1
    %s98 = scalar_select %p95, %s96, %s97
    %p101 = pneg %p95
    %p102 = scmp.eq.s32.totalorder %s9, 7
    %p103 = por %p101, %p102
    %p104 = scmp.ne.s32.totalorder %s96, %s99
    %p105 = scmp.eq.s32.totalorder %s9, 0
    %p106 = por %p104, %p105
    %p107 = scmp.ne.s32.totalorder %s96, %s99
    %p108 = scmp.eq.s32.totalorder %s14, 7
    %p109 = por %p107, %p108
    %p110 = scmp.ne.s32.totalorder %s99, %s100
    %p111 = scmp.eq.s32.totalorder %s14, 0
    %p112 = por %p110, %p111
    %p113 = scmp.ne.s32.totalorder %s99, %s100
    %p114 = scmp.eq.s32.totalorder %s15, 7
    %p115 = por %p113, %p114
    %p117 = scmp.ne.s32.totalorder %s100, %s116
    %p118 = scmp.eq.s32.totalorder %s15, 0
    %p119 = por %p117, %p118
    %s120 = ssub.s32 %s16, %s35
    %s121 = ssub.s32 %s17, %s31
    %s122 = sor.u32 %s120, %s121
    %p123 = scmp.eq.s32.totalorder %s122, 0
    %s125 = sadd.s32 %s124, 1
    %s126 = scalar_select %p123, %s124, %s125
    %p129 = pneg %p123
    %p130 = scmp.eq.s32.totalorder %s9, 7
    %p131 = por %p129, %p130
    %p132 = scmp.ne.s32.totalorder %s124, %s127
    %p133 = scmp.eq.s32.totalorder %s9, 0
    %p134 = por %p132, %p133
    %p135 = scmp.ne.s32.totalorder %s124, %s127
    %p136 = scmp.eq.s32.totalorder %s14, 7
    %p137 = por %p135, %p136
    %p138 = scmp.ne.s32.totalorder %s127, %s128
    %p139 = scmp.eq.s32.totalorder %s14, 0
    %p140 = por %p138, %p139
    %p141 = scmp.ne.s32.totalorder %s127, %s128
    %p142 = scmp.eq.s32.totalorder %s15, 7
    %p143 = por %p141, %p142
    %p145 = scmp.ne.s32.totalorder %s128, %s144
    %p146 = scmp.eq.s32.totalorder %s15, 0
    %p147 = por %p145, %p146
    %p148 = scmp.le.s32.totalorder 1, %s9
    %p149 = scmp.lt.s32.totalorder %s9, 9
    %p150 = pnand %p148, %p149
    %p151 = pneg %p150
    // Predicated region
    $region9: #{basic_transformer_block.14} parent=5 // pred_check
      _
    $region10: #{basic_transformer_block.14} parent=5 // pred_check_branch
      %153 = sbr.rel (%p150) target = $region12
    $region11: #{basic_transformer_block.14} parent=5 // pred_region
      %s154 = ssub.s32 %s9, 1
    $region12: #{basic_transformer_block.14} parent=5 // pred_fallthru
      _
    %p155 = scmp.lt.s32.totalorder %s9, 8
    // Predicated region
    $region13: #{basic_transformer_block.14} parent=5 // pred_check
      %p156 = pneg %p155
    $region14: #{basic_transformer_block.14} parent=5 // pred_check_branch
      %158 = sbr.rel (%p156) target = $region16
    $region15: #{basic_transformer_block.14} parent=5 // pred_region
      // Predicated region
      $region17: #{basic_transformer_block.14} parent=15 // pred_check
        %p159 = pneg %p50
      $region18: #{basic_transformer_block.14} parent=15 // pred_check_branch
        %161 = sbr.rel (%p159) target = $region20
      $region19: #{basic_transformer_block.14} parent=15 // pred_region
        %s162 = smul.u32 2, %s17
        %p163 = scmp.lt.s32.totalorder %s16, 7
        %s164 = scalar_select %p163, %s16, 7
        %p165 = scmp.lt.s32.totalorder %s162, 1
        %s166 = scalar_select %p165, %s162, 1
        %s167 = smul.addr %s164, 2
        %s168 = sadd.s32 %s166, %s167
        %s169 = smul.addr %s168, 8
        %s170 = scalar_lea.vmem %s0, %s169
        %s171 = smul.u32 2, %s17
      $region20: #{basic_transformer_block.14} parent=15 // pred_fallthru
        _
      // Predicated region
      $region21: #{basic_transformer_block.14} parent=15 // pred_check
        %p172 = pneg %p78
      $region22: #{basic_transformer_block.14} parent=15 // pred_check_branch
        %174 = sbr.rel (%p172) target = $region24
      $region23: #{basic_transformer_block.14} parent=15 // pred_region
        %p175 = scmp.lt.s32.totalorder %s16, 7
        %s176 = scalar_select %p175, %s16, 7
        %p177 = scmp.lt.s32.totalorder %s18, 0
        %s178 = scalar_select %p177, %s18, 0
        %s179 = sadd.s32 %s178, %s176
        %s180 = smul.addr %s179, 8
        %s181 = scalar_lea.vmem %s1, %s180
      $region24: #{basic_transformer_block.14} parent=15 // pred_fallthru
        _
      // Predicated region
      $region25: #{basic_transformer_block.14} parent=15 // pred_check
        %p182 = pneg %p106
      $region26: #{basic_transformer_block.14} parent=15 // pred_check_branch
        %184 = sbr.rel (%p182) target = $region28
      $region27: #{basic_transformer_block.14} parent=15 // pred_region
        %p185 = scmp.lt.s32.totalorder %s16, 7
        %s186 = scalar_select %p185, %s16, 7
        %p187 = scmp.lt.s32.totalorder %s18, 0
        %s188 = scalar_select %p187, %s18, 0
        %s189 = sadd.s32 %s188, %s186
        %s190 = smul.addr %s189, 8
        %s191 = scalar_lea.vmem %s2, %s190
      $region28: #{basic_transformer_block.14} parent=15 // pred_fallthru
        _
    $region16: #{basic_transformer_block.14} parent=5 // pred_fallthru
      _
    %p192 = scmp.le.s32.totalorder 1, %s9
    %p193 = scmp.lt.s32.totalorder %s9, 9
    %p194 = pnand %p192, %p193
    %p195 = pneg %p194
    // Predicated region
    $region29: #{basic_transformer_block.14} parent=5 // pred_check
      _
    $region30: #{basic_transformer_block.14} parent=5 // pred_check_branch
      %197 = sbr.rel (%p194) target = $region32
    $region31: #{basic_transformer_block.14} parent=5 // pred_region
      %s198 = ssub.s32 %s9, 1
      %s199 = smul.u32 2, %s20
      %p200 = scmp.lt.s32.totalorder %s19, 7
      %s201 = scalar_select %p200, %s19, 7
      %p202 = scmp.lt.s32.totalorder %s199, 1
      %s203 = scalar_select %p202, %s199, 1
      %s204 = smul.addr %s201, 2
      %s205 = sadd.s32 %s203, %s204
      %s206 = smul.addr %s205, 8
      %s207 = scalar_lea.vmem %s0, %s206
      %p208 = pneg %p56
      %p209 = pneg %p53
      %p210 = scmp.lt.s32.totalorder %s19, 7
      %s211 = scalar_select %p210, %s19, 7
      %p212 = scmp.lt.s32.totalorder %s21, 0
      %s213 = scalar_select %p212, %s21, 0
      %s214 = sadd.s32 %s213, %s211
      %s215 = smul.addr %s214, 8
      %s216 = scalar_lea.vmem %s1, %s215
      %p217 = pneg %p84
      %p218 = pneg %p81
      %p219 = scmp.lt.s32.totalorder %s19, 7
      %s220 = scalar_select %p219, %s19, 7
      %p221 = scmp.lt.s32.totalorder %s21, 0
      %s222 = scalar_select %p221, %s21, 0
      %s223 = sadd.s32 %s222, %s220
      %s224 = smul.addr %s223, 8
      %s225 = scalar_lea.vmem %s2, %s224
      %p226 = pneg %p112
      %p227 = pneg %p109
      %p228 = pneg %p140
      %p229 = pneg %p137
      %s230 = smul.u32 2, %s20
      %p231 = scmp.lt.s32.totalorder %s19, 7
      %s232 = scalar_select %p231, %s19, 7
      %p233 = scmp.lt.s32.totalorder %s230, 1
      %s234 = scalar_select %p233, %s230, 1
      %s235 = smul.addr %s232, 2
      %s236 = sadd.s32 %s234, %s235
      %s237 = smul.addr %s236, 8
      %s238 = scalar_lea.vmem %s3, %s237
      %s239 = smul.u32 2, %s20
      %p240 = scmp.lt.s32.totalorder %s19, 7
      %s241 = scalar_select %p240, %s19, 7
      %p242 = scmp.lt.s32.totalorder %s239, 1
      %s243 = scalar_select %p242, %s239, 1
      %s244 = smul.addr %s241, 2
      %s245 = sadd.s32 %s243, %s244
      %s246 = smul.addr %s245, 8
      %s247 = scalar_lea.vmem %s0, %s246
      %s248 = smul.u32 2, %s20
      %p249 = scmp.lt.s32.totalorder %s19, 7
      %s250 = scalar_select %p249, %s19, 7
      %p251 = scmp.lt.s32.totalorder %s21, 0
      %s252 = scalar_select %p251, %s21, 0
      %s253 = sadd.s32 %s252, %s250
      %s254 = smul.addr %s253, 8
      %s255 = scalar_lea.vmem %s1, %s254
      %p256 = scmp.lt.s32.totalorder %s19, 7
      %s257 = scalar_select %p256, %s19, 7
      %p258 = scmp.lt.s32.totalorder %s21, 0
      %s259 = scalar_select %p258, %s21, 0
      %s260 = sadd.s32 %s259, %s257
      %s261 = smul.addr %s260, 8
      %s262 = scalar_lea.vmem %s2, %s261
      %s263 = smul.u32 2, %s20
      %p264 = scmp.lt.s32.totalorder %s19, 7
      %s265 = scalar_select %p264, %s19, 7
      %p266 = scmp.lt.s32.totalorder %s263, 1
      %s267 = scalar_select %p266, %s263, 1
      %s268 = smul.addr %s265, 2
      %s269 = sadd.s32 %s267, %s268
      %s270 = smul.addr %s269, 8
      %s271 = scalar_lea.vmem %s3, %s270
      %s272 = smul.u32 2, %s20
      %p274 = scmp.eq.s32.totalorder %s21, 0
      // Predicated region
      $region33: #{basic_transformer_block.14} parent=31 // pred_check
        %p275 = pneg %p274
      $region34: #{basic_transformer_block.14} parent=31 // pred_check_branch
        %277 = sbr.rel (%p275) target = $region36
      $region35: #{basic_transformer_block.14} parent=31 // pred_region
        %vm278 = vcmask 7168
        %279 = vst.msk [vmem:[#allocation2] sm:$0xff] %vm278, -inf
        %280 = vst.msk [vmem:[#allocation2 + $0x8] sm:$0xff] %vm278, -inf
        %281 = vst.msk [vmem:[#allocation3] sm:$0xff] %vm278, 0.0
        %282 = vst.msk [vmem:[#allocation3 + $0x8] sm:$0xff] %vm278, 0.0
        %vm283 = vcmask 64512
        %284 = vst.msk [vmem:[#allocation4] sm:$0xff] %vm283, 0.0
        %285 = vst.msk [vmem:[#allocation4 + $0x8] sm:$0xff] %vm283, 0.0
      $region36: #{basic_transformer_block.14} parent=31 // pred_fallthru
        _
      %v286 = vld [vmem:[%s247] sm:$0xff]
      %v287 = vld [vmem:[%s247 + $0x8] sm:$0xff]
      %v288 = vmul.f32 %v286, 0.35355338
      %v289 = vmul.f32 %v287, 0.35355338
      %v290 = vpack.c.bf16 %v289, %v288
      %v291 = vld [vmem:[%s255] sm:$0xff]
      %v292 = vpack.c.bf16 %v291, %v291
      %v293 = vld [vmem:[%s262] sm:$0xff]
      %v294 = vpack.c.bf16 %v293, %v293
      %vm295 = vcmask 64512
      %v297 = vsel %vm295, %v290, 0
      %v300 = vsel %vm295, %v292, 0
      %302 = vmatprep.subr.bf16.mxu0 0
      %303 = vmatpush1.bf16.xpose.msra.mxu0 0
      %304 = vmatprep.subr.bf16.mxu0 0
      %305 = vmatpush1.bf16.xpose.msra.mxu0 0
      %306 = vmatprep.subr.bf16.mxu0 0
      %307 = vmatpush1.bf16.xpose.msra.mxu0 0
      %308 = vmatprep.subr.bf16.mxu0 0
      %309 = vmatpush1.bf16.xpose.msra.mxu0 0
      %310 = vmatprep.subr.bf16.mxu0 0
      %311 = vmatpush1.bf16.xpose.msra.mxu0 0
      %312 = vmatprep.subr.bf16.mxu0 0
      %313 = vmatpush1.bf16.xpose.msra.mxu0 0
      %314 = vmatprep.subr.bf16.mxu0 0
      %315 = vmatpush1.bf16.xpose.msra.mxu0 0
      %316 = vmatprep.subr.bf16.mxu0 0
      %317 = vmatpush1.bf16.xpose.msra.mxu0 %v300
      %318 = vmatprep.subr.bf16.mxu0 0
      %319 = vmatpush2.bf16.xpose.msra.mxu0 0
      %320 = vmatprep.subr.bf16.mxu0 0
      %321 = vmatpush2.bf16.xpose.msra.mxu0 0
      %322 = vmatprep.subr.bf16.mxu0 0
      %323 = vmatpush2.bf16.xpose.msra.mxu0 0
      %324 = vmatprep.subr.bf16.mxu0 0
      %325 = vmatpush2.bf16.xpose.msra.mxu0 0
      %326 = vmatprep.subr.bf16.mxu0 0
      %327 = vmatpush2.bf16.xpose.msra.mxu0 0
      %328 = vmatprep.subr.bf16.mxu0 0
      %329 = vmatpush2.bf16.xpose.msra.mxu0 0
      %330 = vmatprep.subr.bf16.mxu0 0
      %331 = vmatpush2.bf16.xpose.msra.mxu0 0
      %332 = vmatprep.subr.bf16.mxu0 0
      %333 = vmatpush2.bf16.xpose.msra.mxu0 0
      %334 = vmatprep.mubr.bf16.mxu0 0
      %335 = vmatmul.mubr.bf16.gmra.mxu0 %v297
      %v336 = vpop.f32.mrf.mxu0
      %v337 = vadd.f32 0.0, %v336
      %v338 = vpop.f32.mrf.mxu0
      %v339 = vpop.f32.mrf.mxu0
      %v340 = vadd.f32 0.0, %v339
      %v341 = vpop.f32.mrf.mxu0
      %342 = vdwg.mxu0
      %v343 = vld [vmem:[#allocation2] sm:$0xff]
      %v344 = vld [vmem:[#allocation2 + $0x8] sm:$0xff]
      %v345 = vsel %vm295, %v337, -inf
      %346 = vmax.xlane.f32.xlu0 %v345
      %v347 = vpop.xlane.xlu0 %346
      %v348 = vsel %vm295, %v340, -inf
      %349 = vmax.xlane.f32.xlu0 %v348
      %v350 = vpop.xlane.xlu0 %349
      %v351 = vmax.f32 %v343, %v347
      %v352 = vmax.f32 %v344, %v350
      %v353 = vsub.f32 %v343, %v351
      %v354 = vsub.f32 %v344, %v352
      %v355 = vmul.f32 %v353, 1.442695
      %v356 = vpow.pop %v355
      %v357 = vmul.f32 %v354, 1.442695
      %v358 = vpow.pop %v357
      %360 = vset.pattern.permute.xlu0 0
      %361 = vperm.xlu0 %360, %v351
      %v362 = vpop.permute.xlu0 %361
      %365 = vset.pattern.permute.xlu0 0
      %366 = vperm.xlu0 %365, %v352
      %v367 = vpop.permute.xlu0 %366
      %v369 = vsub.f32 %v337, %v362
      %v370 = vsub.f32 %v340, %v367
      %v371 = vmul.f32 %v369, 1.442695
      %v372 = vpow.pop %v371
      %v373 = vmul.f32 %v370, 1.442695
      %v374 = vpow.pop %v373
      %v375 = vld [vmem:[#allocation3] sm:$0xff]
      %v376 = vld [vmem:[#allocation3 + $0x8] sm:$0xff]
      %v377 = vmul.f32 %v356, %v375
      %v378 = vmul.f32 %v358, %v376
      %v379 = vsel %vm295, %v372, 0.0
      %380 = vadd.xlane.f32.xlu0 %v379
      %v381 = vpop.xlane.xlu0 %380
      %v382 = vsel %vm295, %v374, 0.0
      %383 = vadd.xlane.f32.xlu0 %v382
      %v384 = vpop.xlane.xlu0 %383
      %v385 = vadd.f32 %v377, %v381
      %v386 = vadd.f32 %v378, %v384
      %vm387 = vcmask 7168
      %388 = vst.msk [vmem:[#allocation3] sm:$0xff] %vm387, %v385
      %389 = vst.msk [vmem:[#allocation3 + $0x8] sm:$0xff] %vm387, %v386
      %v390 = vld [vmem:[#allocation4] sm:$0xff]
      %v391 = vld [vmem:[#allocation4 + $0x8] sm:$0xff]
      %393 = vset.pattern.permute.xlu0 0
      %394 = vperm.xlu0 %393, %v356
      %v395 = vpop.permute.xlu0 %394
      %398 = vset.pattern.permute.xlu0 0
      %399 = vperm.xlu0 %398, %v358
      %v400 = vpop.permute.xlu0 %399
      %v402 = vmul.f32 %v395, %v390
      %v403 = vmul.f32 %v400, %v391
      %v404 = vpack.c.bf16 %v374, %v372
      %v406 = vsel %vm295, %v404, 0
      %vm408 = vcmask 1043456
      %v410 = vsel %vm408, %v294, 0
      %412 = vmatprep.subr.bf16.mxu0 0
      %413 = vmatpush1.bf16.msra.mxu0 0
      %414 = vmatprep.subr.bf16.mxu0 0
      %415 = vmatpush1.bf16.msra.mxu0 0
      %416 = vmatprep.subr.bf16.mxu0 0
      %417 = vmatpush1.bf16.msra.mxu0 0
      %418 = vmatprep.subr.bf16.mxu0 0
      %419 = vmatpush1.bf16.msra.mxu0 0
      %420 = vmatprep.subr.bf16.mxu0 0
      %421 = vmatpush1.bf16.msra.mxu0 0
      %422 = vmatprep.subr.bf16.mxu0 0
      %423 = vmatpush1.bf16.msra.mxu0 0
      %424 = vmatprep.subr.bf16.mxu0 0
      %425 = vmatpush1.bf16.msra.mxu0 0
      %426 = vmatprep.subr.bf16.mxu0 0
      %427 = vmatpush1.bf16.msra.mxu0 %v410
      %428 = vmatprep.subr.bf16.mxu0 0
      %429 = vmatpush2.bf16.msra.mxu0 0
      %430 = vmatprep.subr.bf16.mxu0 0
      %431 = vmatpush2.bf16.msra.mxu0 0
      %432 = vmatprep.subr.bf16.mxu0 0
      %433 = vmatpush2.bf16.msra.mxu0 0
      %434 = vmatprep.subr.bf16.mxu0 0
      %435 = vmatpush2.bf16.msra.mxu0 0
      %436 = vmatprep.subr.bf16.mxu0 0
      %437 = vmatpush2.bf16.msra.mxu0 0
      %438 = vmatprep.subr.bf16.mxu0 0
      %439 = vmatpush2.bf16.msra.mxu0 0
      %440 = vmatprep.subr.bf16.mxu0 0
      %441 = vmatpush2.bf16.msra.mxu0 0
      %442 = vmatprep.subr.bf16.mxu0 0
      %443 = vmatpush2.bf16.msra.mxu0 0
      %444 = vmatprep.mubr.bf16.mxu0 0
      %445 = vmatmul.mubr.bf16.gmra.mxu0 %v406
      %v446 = vpop.f32.mrf.mxu0
      %v447 = vadd.f32 0.0, %v446
      %v448 = vpop.f32.mrf.mxu0
      %v449 = vpop.f32.mrf.mxu0
      %v450 = vadd.f32 0.0, %v449
      %v451 = vpop.f32.mrf.mxu0
      %452 = vdwg.mxu0
      %v453 = vadd.f32 %v402, %v447
      %v454 = vadd.f32 %v403, %v450
      %455 = vst.msk [vmem:[#allocation4] sm:$0xff] %vm295, %v453
      %456 = vst.msk [vmem:[#allocation4 + $0x8] sm:$0xff] %vm295, %v454
      %457 = vst.msk [vmem:[#allocation2] sm:$0xff] %vm387, %v351
      %458 = vst.msk [vmem:[#allocation2 + $0x8] sm:$0xff] %vm387, %v352
      // Predicated region
      $region37: #{basic_transformer_block.14} parent=31 // pred_check
        %p459 = pneg %p274
      $region38: #{basic_transformer_block.14} parent=31 // pred_check_branch
        %461 = sbr.rel (%p459) target = $region40
      $region39: #{basic_transformer_block.14} parent=31 // pred_region
        %v462 = vld [vmem:[#allocation3] sm:$0xff]
        %v463 = vld [vmem:[#allocation3 + $0x8] sm:$0xff]
        %v464 = vrcp.pop %v462
        %v465 = vrcp.pop %v463
        %v466 = vld [vmem:[#allocation4] sm:$0xff]
        %v467 = vld [vmem:[#allocation4 + $0x8] sm:$0xff]
        %469 = vset.pattern.permute.xlu0 0
        %470 = vperm.xlu0 %469, %v464
        %v471 = vpop.permute.xlu0 %470
        %474 = vset.pattern.permute.xlu0 0
        %475 = vperm.xlu0 %474, %v465
        %v476 = vpop.permute.xlu0 %475
        %v478 = vmul.f32 %v466, %v471
        %v479 = vmul.f32 %v467, %v476
        %480 = vst.msk [vmem:[%s271] sm:$0xff] %vm295, %v478
        %481 = vst.msk [vmem:[%s271 + $0x8] sm:$0xff] %vm295, %v479
      $region40: #{basic_transformer_block.14} parent=31 // pred_fallthru
        _
      %s482 = smul.u32 2, %s20
      %p483 = scmp.lt.s32.totalorder %s19, 7
      %s484 = scalar_select %p483, %s19, 7
      %p485 = scmp.lt.s32.totalorder %s482, 1
      %s486 = scalar_select %p485, %s482, 1
      %s487 = smul.addr %s484, 2
      %s488 = sadd.s32 %s486, %s487
      %s489 = smul.addr %s488, 8
      %s490 = scalar_lea.vmem %s3, %s489
      // Predicated region
      $region41: #{basic_transformer_block.14} parent=31 // pred_check
        %p491 = pneg %p137
      $region42: #{basic_transformer_block.14} parent=31 // pred_check_branch
        %493 = sbr.rel (%p491) target = $region44
      $region43: #{basic_transformer_block.14} parent=31 // pred_region
        %s494 = smul.u32 2, %s20
      $region44: #{basic_transformer_block.14} parent=31 // pred_fallthru
        _
    $region32: #{basic_transformer_block.14} parent=5 // pred_fallthru
      _
    %p495 = scmp.le.s32.totalorder 2, %s9
    // Predicated region
    $region45: #{basic_transformer_block.14} parent=5 // pred_check
      %p496 = pneg %p495
    $region46: #{basic_transformer_block.14} parent=5 // pred_check_branch
      %498 = sbr.rel (%p496) target = $region48
    $region47: #{basic_transformer_block.14} parent=5 // pred_region
      %s499 = ssub.s32 %s9, 2
      // Predicated region
      $region49: #{basic_transformer_block.14} parent=47 // pred_check
        %p500 = pneg %p143
      $region50: #{basic_transformer_block.14} parent=47 // pred_check_branch
        %502 = sbr.rel (%p500) target = $region52
      $region51: #{basic_transformer_block.14} parent=47 // pred_region
        %s503 = smul.u32 2, %s23
        %p504 = scmp.lt.s32.totalorder %s22, 7
        %s505 = scalar_select %p504, %s22, 7
        %p506 = scmp.lt.s32.totalorder %s503, 1
        %s507 = scalar_select %p506, %s503, 1
        %s508 = smul.addr %s505, 2
        %s509 = sadd.s32 %s507, %s508
        %s510 = smul.addr %s509, 8
        %s511 = scalar_lea.vmem %s3, %s510
      $region52: #{basic_transformer_block.14} parent=47 // pred_fallthru
        _
    $region48: #{basic_transformer_block.14} parent=5 // pred_fallthru
      _
  $region6: #{basic_transformer_block.14} parent=0 // loop_footer
    %s13 = sadd.s32 1, %s9
  $region7: #{basic_transformer_block.14} parent=0 // loop_footer_branch
    %8 = sbr.rel target = $region3
  $region8: #{basic_transformer_block.14} parent=0 // loop_exit
    _

// kernel: basic_transformer_block.16
$region0: #{basic_transformer_block.16}
  #allocation0 [shape = 'u32[]', space=smem, size = 0x4, offset = 0x4, fixed_abs, tag = 'smem constant byte address 0x4 - core index']
  #allocation1 [shape = 'u32[144,128]{1,0:T(1,128)}', space=vmem, size = 0x12000, scoped, tag = 'internal scratch']
  %s0 = inlined_call_operand.vmem [shape: f32[32,32], index: 0, kind: input, shape index: {}]
  %s1 = inlined_call_operand.vmem [shape: f32[1,32], index: 1, kind: input, shape index: {}]
  %s2 = inlined_call_operand.vmem [shape: f32[1,32], index: 2, kind: input, shape index: {}]
  %s3 = inlined_call_operand.vmem [shape: f32[32,128], index: 3, kind: input, shape index: {}]
  %s4 = inlined_call_operand.vmem [shape: f32[1,128], index: 4, kind: input, shape index: {}]
  %s5 = inlined_call_operand.vmem [shape: f32[32,128], index: 5, kind: input, shape index: {}]
  %s6 = inlined_call_operand.vmem [shape: f32[1,128], index: 6, kind: input, shape index: {}]
  %s7 = inlined_call_operand.vmem [shape: f32[32,128], index: 7, kind: output, shape index: {}]
  %s8 = sld [smem:[#allocation0]]
  $region38: #{basic_transformer_block.16} parent=0
    _
  %s10 = ssub.s32 1, %s8
  %s11 = scalar_select 0, %s10, %s8
  // Predicated region
  $region2: #{basic_transformer_block.16} parent=0 // pred_check
    _
  $region3: #{basic_transformer_block.16} parent=0 // pred_check_branch
    %13 = sbr.rel (0) target = $region5
  $region4: #{basic_transformer_block.16} parent=0 // pred_region
    _
  $region5: #{basic_transformer_block.16} parent=0 // pred_fallthru
    _
  // Predicated region
  $region6: #{basic_transformer_block.16} parent=0 // pred_check
    _
  $region7: #{basic_transformer_block.16} parent=0 // pred_check_branch
    %15 = sbr.rel (0) target = $region9
  $region8: #{basic_transformer_block.16} parent=0 // pred_region
    _
  $region9: #{basic_transformer_block.16} parent=0 // pred_fallthru
    _
  // Predicated region
  $region10: #{basic_transformer_block.16} parent=0 // pred_check
    _
  $region11: #{basic_transformer_block.16} parent=0 // pred_check_branch
    %17 = sbr.rel (0) target = $region13
  $region12: #{basic_transformer_block.16} parent=0 // pred_region
    _
  $region13: #{basic_transformer_block.16} parent=0 // pred_fallthru
    _
  // Predicated region
  $region14: #{basic_transformer_block.16} parent=0 // pred_check
    _
  $region15: #{basic_transformer_block.16} parent=0 // pred_check_branch
    %19 = sbr.rel (0) target = $region17
  $region16: #{basic_transformer_block.16} parent=0 // pred_region
    _
  $region17: #{basic_transformer_block.16} parent=0 // pred_fallthru
    _
  // Predicated region
  $region18: #{basic_transformer_block.16} parent=0 // pred_check
    _
  $region19: #{basic_transformer_block.16} parent=0 // pred_check_branch
    %21 = sbr.rel (0) target = $region21
  $region20: #{basic_transformer_block.16} parent=0 // pred_region
    _
  $region21: #{basic_transformer_block.16} parent=0 // pred_fallthru
    _
  // Predicated region
  $region22: #{basic_transformer_block.16} parent=0 // pred_check
    _
  $region23: #{basic_transformer_block.16} parent=0 // pred_check_branch
    %23 = sbr.rel (0) target = $region25
  $region24: #{basic_transformer_block.16} parent=0 // pred_region
    _
  $region25: #{basic_transformer_block.16} parent=0 // pred_fallthru
    _
  // Predicated region
  $region26: #{basic_transformer_block.16} parent=0 // pred_check
    _
  $region27: #{basic_transformer_block.16} parent=0 // pred_check_branch
    %25 = sbr.rel (0) target = $region29
  $region28: #{basic_transformer_block.16} parent=0 // pred_region
    _
  $region29: #{basic_transformer_block.16} parent=0 // pred_fallthru
    _
  %v27 = vld [vmem:[%s0] sm:$0xff]
  %v28 = vld [vmem:[%s0 + $0x8] sm:$0xff]
  %v29 = vld [vmem:[%s0 + $0x10] sm:$0xff]
  %v30 = vld [vmem:[%s0 + $0x18] sm:$0xff]
  %vm31 = vcmask 261120
  %v32 = vsel %vm31, %v27, 0.0
  %33 = vadd.xlane.f32.xlu0 %v32
  %v34 = vpop.xlane.xlu0 %33
  %v35 = vsel %vm31, %v28, 0.0
  %36 = vadd.xlane.f32.xlu0 %v35
  %v37 = vpop.xlane.xlu0 %36
  %v38 = vsel %vm31, %v29, 0.0
  %39 = vadd.xlane.f32.xlu0 %v38
  %v40 = vpop.xlane.xlu0 %39
  %v41 = vsel %vm31, %v30, 0.0
  %42 = vadd.xlane.f32.xlu0 %v41
  %v43 = vpop.xlane.xlu0 %42
  %v44 = vrcp.pop 32.0
  %v45 = vmul.f32 %v34, %v44
  %v46 = vmul.f32 %v37, %v44
  %v47 = vmul.f32 %v40, %v44
  %v48 = vmul.f32 %v43, %v44
  %v49 = vsub.f32 %v27, %v45
  %v50 = vsub.f32 %v28, %v46
  %v51 = vsub.f32 %v29, %v47
  %v52 = vsub.f32 %v30, %v48
  %v53 = vmul.f32 %v49, %v49
  %v54 = vmul.f32 %v50, %v50
  %v55 = vmul.f32 %v51, %v51
  %v56 = vmul.f32 %v52, %v52
  %v57 = vsel %vm31, %v53, 0.0
  %58 = vadd.xlane.f32.xlu0 %v57
  %v59 = vpop.xlane.xlu0 %58
  %v60 = vsel %vm31, %v54, 0.0
  %61 = vadd.xlane.f32.xlu0 %v60
  %v62 = vpop.xlane.xlu0 %61
  %v63 = vsel %vm31, %v55, 0.0
  %64 = vadd.xlane.f32.xlu0 %v63
  %v65 = vpop.xlane.xlu0 %64
  %v66 = vsel %vm31, %v56, 0.0
  %67 = vadd.xlane.f32.xlu0 %v66
  %v68 = vpop.xlane.xlu0 %67
  %v69 = vmul.f32 %v59, %v44
  %v70 = vmul.f32 %v62, %v44
  %v71 = vmul.f32 %v65, %v44
  %v72 = vmul.f32 %v68, %v44
  %v73 = vadd.f32 %v69, 1e-05
  %v74 = vadd.f32 %v70, 1e-05
  %v75 = vadd.f32 %v71, 1e-05
  %v76 = vadd.f32 %v72, 1e-05
  %v77 = vrsqrt.pop %v73
  %v78 = vrsqrt.pop %v74
  %v79 = vrsqrt.pop %v75
  %v80 = vrsqrt.pop %v76
  %v81 = vmul.f32 %v49, %v77
  %v82 = vmul.f32 %v50, %v78
  %v83 = vmul.f32 %v51, %v79
  %v84 = vmul.f32 %v52, %v80
  %v85 = vld [vmem:[%s1] sm:$0x1]
  %v87 = vlaneseq
  %v88 = vshrl.u32 %v87, 7
  %v89 = vsub.s32 0, %v88
  %v90 = vrot.slane %v85, %v89
  %v92 = vmul.f32 %v81, %v90
  %v93 = vmul.f32 %v82, %v90
  %v94 = vmul.f32 %v83, %v90
  %v95 = vmul.f32 %v84, %v90
  %v96 = vld [vmem:[%s2] sm:$0x1]
  %v98 = vlaneseq
  %v99 = vshrl.u32 %v98, 7
  %v100 = vsub.s32 0, %v99
  %v101 = vrot.slane %v96, %v100
  %v103 = vadd.f32 %v92, %v101
  %v104 = vadd.f32 %v93, %v101
  %v105 = vadd.f32 %v94, %v101
  %v106 = vadd.f32 %v95, %v101
  %v107 = vpack.c.bf16 %v104, %v103
  %v108 = vpack.c.bf16 %v106, %v105
  %v109 = vld [vmem:[%s3] sm:$0xff]
  %v110 = vld [vmem:[%s3 + $0x8] sm:$0xff]
  %v111 = vld [vmem:[%s3 + $0x10] sm:$0xff]
  %v112 = vld [vmem:[%s3 + $0x18] sm:$0xff]
  %v113 = vpack.c.bf16 %v110, %v109
  %v114 = vpack.c.bf16 %v112, %v111
  %v115 = vld [vmem:[%s4] sm:$0x1]
  %v117 = vlaneseq
  %v118 = vshrl.u32 %v117, 7
  %v119 = vsub.s32 0, %v118
  %v120 = vrot.slane %v115, %v119
  %v123 = vsel %vm31, %v107, 0
  %v126 = vsel %vm31, %v108, 0
  %128 = vmatprep.subr.bf16.mxu0 0
  %129 = vmatpush1.bf16.msra.mxu0 0
  %130 = vmatprep.subr.bf16.mxu0 0
  %131 = vmatpush1.bf16.msra.mxu0 0
  %132 = vmatprep.subr.bf16.mxu0 0
  %133 = vmatpush1.bf16.msra.mxu0 0
  %134 = vmatprep.subr.bf16.mxu0 0
  %135 = vmatpush1.bf16.msra.mxu0 0
  %136 = vmatprep.subr.bf16.mxu0 0
  %137 = vmatpush1.bf16.msra.mxu0 0
  %138 = vmatprep.subr.bf16.mxu0 0
  %139 = vmatpush1.bf16.msra.mxu0 0
  %140 = vmatprep.subr.bf16.mxu0 0
  %141 = vmatpush1.bf16.msra.mxu0 %v114
  %142 = vmatprep.subr.bf16.mxu0 0
  %143 = vmatpush1.bf16.msra.mxu0 %v113
  %144 = vmatprep.subr.bf16.mxu0 0
  %145 = vmatpush2.bf16.msra.mxu0 0
  %146 = vmatprep.subr.bf16.mxu0 0
  %147 = vmatpush2.bf16.msra.mxu0 0
  %148 = vmatprep.subr.bf16.mxu0 0
  %149 = vmatpush2.bf16.msra.mxu0 0
  %150 = vmatprep.subr.bf16.mxu0 0
  %151 = vmatpush2.bf16.msra.mxu0 0
  %152 = vmatprep.subr.bf16.mxu0 0
  %153 = vmatpush2.bf16.msra.mxu0 0
  %154 = vmatprep.subr.bf16.mxu0 0
  %155 = vmatpush2.bf16.msra.mxu0 0
  %156 = vmatprep.subr.bf16.mxu0 0
  %157 = vmatpush2.bf16.msra.mxu0 0
  %158 = vmatprep.subr.bf16.mxu0 0
  %159 = vmatpush2.bf16.msra.mxu0 0
  %160 = vmatprep.mubr.bf16.mxu0 0
  %161 = vmatmul.mubr.bf16.gmra.mxu0 %v123
  %v162 = vpop.f32.mrf.mxu0
  %v163 = vadd.f32 %v120, %v162
  %v164 = vpop.f32.mrf.mxu0
  %v165 = vpop.f32.mrf.mxu0
  %v166 = vadd.f32 %v120, %v165
  %v167 = vpop.f32.mrf.mxu0
  %168 = vmatprep.mubr.bf16.mxu0 0
  %169 = vmatmul.mubr.bf16.gmra.mxu0 %v126
  %v170 = vpop.f32.mrf.mxu0
  %v171 = vadd.f32 %v120, %v170
  %v172 = vpop.f32.mrf.mxu0
  %v173 = vpop.f32.mrf.mxu0
  %v174 = vadd.f32 %v120, %v173
  %v175 = vpop.f32.mrf.mxu0
  %176 = vdwg.mxu0
  %v177 = vld [vmem:[%s5] sm:$0xff]
  %v178 = vld [vmem:[%s5 + $0x8] sm:$0xff]
  %v179 = vld [vmem:[%s5 + $0x10] sm:$0xff]
  %v180 = vld [vmem:[%s5 + $0x18] sm:$0xff]
  %v181 = vpack.c.bf16 %v178, %v177
  %v182 = vpack.c.bf16 %v180, %v179
  %v183 = vld [vmem:[%s6] sm:$0x1]
  %v185 = vlaneseq
  %v186 = vshrl.u32 %v185, 7
  %v187 = vsub.s32 0, %v186
  %v188 = vrot.slane %v183, %v187
  %190 = vmatprep.subr.bf16.mxu0 0
  %191 = vmatpush1.bf16.msra.mxu0 0
  %192 = vmatprep.subr.bf16.mxu0 0
  %193 = vmatpush1.bf16.msra.mxu0 0
  %194 = vmatprep.subr.bf16.mxu0 0
  %195 = vmatpush1.bf16.msra.mxu0 0
  %196 = vmatprep.subr.bf16.mxu0 0
  %197 = vmatpush1.bf16.msra.mxu0 0
  %198 = vmatprep.subr.bf16.mxu0 0
  %199 = vmatpush1.bf16.msra.mxu0 0
  %200 = vmatprep.subr.bf16.mxu0 0
  %201 = vmatpush1.bf16.msra.mxu0 0
  %202 = vmatprep.subr.bf16.mxu0 0
  %203 = vmatpush1.bf16.msra.mxu0 %v182
  %204 = vmatprep.subr.bf16.mxu0 0
  %205 = vmatpush1.bf16.msra.mxu0 %v181
  %206 = vmatprep.subr.bf16.mxu0 0
  %207 = vmatpush2.bf16.msra.mxu0 0
  %208 = vmatprep.subr.bf16.mxu0 0
  %209 = vmatpush2.bf16.msra.mxu0 0
  %210 = vmatprep.subr.bf16.mxu0 0
  %211 = vmatpush2.bf16.msra.mxu0 0
  %212 = vmatprep.subr.bf16.mxu0 0
  %213 = vmatpush2.bf16.msra.mxu0 0
  %214 = vmatprep.subr.bf16.mxu0 0
  %215 = vmatpush2.bf16.msra.mxu0 0
  %216 = vmatprep.subr.bf16.mxu0 0
  %217 = vmatpush2.bf16.msra.mxu0 0
  %218 = vmatprep.subr.bf16.mxu0 0
  %219 = vmatpush2.bf16.msra.mxu0 0
  %220 = vmatprep.subr.bf16.mxu0 0
  %221 = vmatpush2.bf16.msra.mxu0 0
  %222 = vmatprep.mubr.bf16.mxu0 0
  %223 = vmatmul.mubr.bf16.gmra.mxu0 %v123
  %v224 = vpop.f32.mrf.mxu0
  %v225 = vadd.f32 %v188, %v224
  %v226 = vpop.f32.mrf.mxu0
  %v227 = vpop.f32.mrf.mxu0
  %v228 = vadd.f32 %v188, %v227
  %v229 = vpop.f32.mrf.mxu0
  %230 = vmatprep.mubr.bf16.mxu0 0
  %231 = vmatmul.mubr.bf16.gmra.mxu0 %v126
  %v232 = vpop.f32.mrf.mxu0
  %v233 = vadd.f32 %v188, %v232
  %v234 = vpop.f32.mrf.mxu0
  %v235 = vpop.f32.mrf.mxu0
  %v236 = vadd.f32 %v188, %v235
  %v237 = vpop.f32.mrf.mxu0
  %238 = vdwg.mxu0
  %v239 = vmul.f32 %v225, 0.5
  %v240 = vmul.f32 %v228, 0.5
  %v241 = vmul.f32 %v233, 0.5
  %v242 = vmul.f32 %v236, 0.5
  %v243 = vmul.f32 %v225, 0.70710677
  %v244 = vmul.f32 %v228, 0.70710677
  %v245 = vmul.f32 %v233, 0.70710677
  %v246 = vmul.f32 %v236, 0.70710677
  %v247 = verf.f32.pop %v243
  %v248 = verf.f32.pop %v244
  %v249 = verf.f32.pop %v245
  %v250 = verf.f32.pop %v246
  %v251 = vadd.f32 %v247, 1.0
  %v252 = vadd.f32 %v248, 1.0
  %v253 = vadd.f32 %v249, 1.0
  %v254 = vadd.f32 %v250, 1.0
  %v255 = vmul.f32 %v239, %v251
  %v256 = vmul.f32 %v240, %v252
  %v257 = vmul.f32 %v241, %v253
  %v258 = vmul.f32 %v242, %v254
  %v259 = vmul.f32 %v163, %v255
  %v260 = vmul.f32 %v166, %v256
  %v261 = vmul.f32 %v171, %v257
  %v262 = vmul.f32 %v174, %v258
  %263 = vst [vmem:[%s7] sm:$0xff] %v259
  %264 = vst [vmem:[%s7 + $0x8] sm:$0xff] %v260
  %265 = vst [vmem:[%s7 + $0x10] sm:$0xff] %v261
  %266 = vst [vmem:[%s7 + $0x18] sm:$0xff] %v262
  // Predicated region
  $region30: #{basic_transformer_block.16} parent=0 // pred_check
    _
  $region31: #{basic_transformer_block.16} parent=0 // pred_check_branch
    %268 = sbr.rel (0) target = $region33
  $region32: #{basic_transformer_block.16} parent=0 // pred_region
    _
  $region33: #{basic_transformer_block.16} parent=0 // pred_fallthru
    _
  // Predicated region
  $region34: #{basic_transformer_block.16} parent=0 // pred_check
    _
  $region35: #{basic_transformer_block.16} parent=0 // pred_check_branch
    %270 = sbr.rel (0) target = $region37
  $region36: #{basic_transformer_block.16} parent=0 // pred_region
    _
  $region37: #{basic_transformer_block.16} parent=0 // pred_fallthru
    _

</llo_original>
